<compile_context>
chip_gen: v7x
topology: tpu7x:2x2x1
jax: 0.10.0
libtpu: 0.0.40
codegen_flags: <defaults>
</compile_context>

<pallas_src>
import functools

import numpy as np
import jax
import jax.numpy as jnp
from jax.experimental import pallas as pl
from jax.experimental.pallas import tpu as pltpu


def _shift_flat(a, off):
    """out[:, p] = a[:, (p + off) mod S].

    Brings the value at flat offset +off to position p.  Implemented as a lane
    rotation (slice + concat along the lane axis; Mosaic lowers this to XLU
    lane rotates).  Wrapped values only ever land on border / alignment-tail
    positions whose conv outputs are masked or discarded.
    """
    n = a.shape[-1]
    k = off % n
    if k == 0:
        return a
    return jnp.concatenate([a[:, k:], a[:, :k]], axis=1)


def _resnet_block_kernel(coords_ref, x_ref, w1_ref, w2_ref, out_ref, *,
                         D, H, W, Hp, Wp, eps, neg_slope, matmul_dtype):
    """Fused ResnetBlock for one batch element (channel-major, flat padded
    spatial layout):
      x_ref   : (1, C, S)  replication-padded input, S = lane-aligned Dp*Hp*Wp
      coords  : (3, S)     (d, h, w) of every flat position (-1 on the tail)
      w*_ref  : (C, 27*C)  conv weights, K ordered as (kd, kh, kw, cin),
                           already cast to matmul_dtype
      out_ref : (1, C, S)  x + conv_block(x) on the padded grid (borders/tail
                           hold don't-care values; the wrapper extracts the
                           interior voxels).
    """
    x = x_ref[0].astype(jnp.float32)                       # (C, S)
    coords = coords_ref[...]
    dd = coords[0:1, :]
    hh = coords[1:2, :]
    ww = coords[2:3, :]

    # Interior-voxel mask for the InstanceNorm statistics (excludes the
    # replication border and the lane-alignment tail).
    interior = ((dd >= 1) & (dd <= D) & (hh >= 1) & (hh <= H)
                & (ww >= 1) & (ww <= W))
    imask = jnp.where(interior, 1.0, 0.0)                  # (1, S) f32
    inv_count = 1.0 / float(D * H * W)

    # Flat offsets of the 27 taps of a 3x3x3 stencil around a voxel.
    tap_offsets = [(kd - 1) * (Hp * Wp) + (kh - 1) * Wp + (kw - 1)
                   for kd in range(3) for kh in range(3) for kw in range(3)]

    def conv3x3x3(a, w2d):
        # im2col buffer built once from 27 lane shifts, then ONE MXU matmul
        # with contraction depth K = 27*C and f32 accumulation.
        a = a.astype(matmul_dtype)
        cols = jnp.concatenate([_shift_flat(a, off) for off in tap_offsets],
                               axis=0)                     # (27*C, S)
        return jnp.dot(w2d, cols,
                       preferred_element_type=jnp.float32)  # (C, S) f32

    def instance_norm(a):
        # Per-channel biased mean/var over interior voxels (masked lane
        # reductions), eps inside the rsqrt -- matches nn.InstanceNorm3d.
        mean = jnp.sum(a * imask, axis=1, keepdims=True) * inv_count
        cen = a - mean
        var = jnp.sum(cen * cen * imask, axis=1, keepdims=True) * inv_count
        return cen * jax.lax.rsqrt(var + eps)

    def replication_repad(a):
        # Rewrite the border positions with replicated interior values
        # (per-axis edge clamp: W, then H, then D) so the second conv sees a
        # correctly ReplicationPad3d(1)-padded volume.  Corner positions are
        # handled by the sequential clamp order, exactly like edge replication.
        a = jnp.where(ww == 0,      _shift_flat(a, 1), a)
        a = jnp.where(ww == W + 1,  _shift_flat(a, -1), a)
        a = jnp.where(hh == 0,      _shift_flat(a, Wp), a)
        a = jnp.where(hh == H + 1,  _shift_flat(a, -Wp), a)
        a = jnp.where(dd == 0,      _shift_flat(a, Hp * Wp), a)
        a = jnp.where(dd == D + 1,  _shift_flat(a, -(Hp * Wp)), a)
        return a

    # conv1 -> InstanceNorm -> LeakyReLU(0.2)
    # (conv biases omitted: cancelled exactly by the non-affine InstanceNorm)
    y = instance_norm(conv3x3x3(x, w1_ref[...]))
    y = jnp.where(y > 0, y, neg_slope * y)

    # ReplicationPad3d(1) -> conv2 -> InstanceNorm
    y = instance_norm(conv3x3x3(replication_repad(y), w2_ref[...]))

    # Residual add on the padded grid (borders/tail are don't-care).
    out_ref[0] = (y + x).astype(out_ref.dtype)


def resnet_block_forward(x, w1, b1, w2, b2, *, matmul_dtype=jnp.float32):
    """x: (N, C, D, H, W) f32; w*: (C, C, 3, 3, 3) (PyTorch Conv3d layout);
    b*: (C,) conv biases (unused: cancelled by the non-affine InstanceNorm)."""
    del b1, b2
    N, C, D, H, W = x.shape
    Dp, Hp, Wp = D + 2, H + 2, W + 2
    s_real = Dp * Hp * Wp
    s_al = ((s_real + 127) // 128) * 128        # lane-align the flat spatial axis

    # Replication-pad the *input* once and flatten the padded spatial dims into
    # the lane axis (row-major reshape, cheap in HBM).  The intermediate
    # activation is re-padded inside the kernel and never leaves VMEM.
    xp = jnp.pad(x, ((0, 0), (0, 0), (1, 1), (1, 1), (1, 1)), mode="edge")
    xp = xp.reshape(N, C, s_real)
    xp = jnp.pad(xp, ((0, 0), (0, 0), (0, s_al - s_real)))

    # (d, h, w) coordinates of every flat position; -1 on the alignment tail.
    dg, hg, wg = np.meshgrid(np.arange(Dp), np.arange(Hp), np.arange(Wp),
                             indexing="ij")
    coords = np.stack([dg.reshape(-1), hg.reshape(-1), wg.reshape(-1)], axis=0)
    coords = np.concatenate(
        [coords, -np.ones((3, s_al - s_real), coords.dtype)], axis=1)
    coords = jnp.asarray(coords.astype(np.int32))

    # Conv weights as (Cout, K) with K ordered (kd, kh, kw, cin), matching the
    # im2col row order used inside the kernel.  Pre-cast to the MXU input dtype
    # so the weight DMA moves the minimal number of bytes.
    w1_2d = jnp.transpose(w1, (0, 2, 3, 4, 1)).reshape(C, 27 * C).astype(matmul_dtype)
    w2_2d = jnp.transpose(w2, (0, 2, 3, 4, 1)).reshape(C, 27 * C).astype(matmul_dtype)

    kernel = functools.partial(
        _resnet_block_kernel, D=D, H=H, W=W, Hp=Hp, Wp=Wp,
        eps=1e-5, neg_slope=0.2, matmul_dtype=matmul_dtype)

    out_flat = pl.pallas_call(
        kernel,
        out_shape=jax.ShapeDtypeStruct((N, C, s_al), jnp.float32),
        grid=(N,),
        in_specs=[
            pl.BlockSpec((3, s_al), lambda n: (0, 0)),        # coords
            pl.BlockSpec((1, C, s_al), lambda n: (n, 0, 0)),  # padded input
            pl.BlockSpec((C, 27 * C), lambda n: (0, 0)),      # conv1 weights
            pl.BlockSpec((C, 27 * C), lambda n: (0, 0)),      # conv2 weights
        ],
        out_specs=pl.BlockSpec((1, C, s_al), lambda n: (n, 0, 0)),
        compiler_params=pltpu.CompilerParams(
            dimension_semantics=("parallel",),
            # Explicit so larger volumes/channel counts don't silently hit the
            # 16 MiB v5e default; this block uses only a few MiB.
            vmem_limit_bytes=32 * 1024 * 1024),
    )(coords, xp, w1_2d, w2_2d)

    # Drop the alignment tail and the replication border (tiny XLA slice; the
    # kernel's own stores stay lane-dense).
    out = out_flat[:, :, :s_real].reshape(N, C, Dp, Hp, Wp)
    return out[:, :, 1:-1, 1:-1, 1:-1]


def _reference_forward(x, w1, b1, w2, b2):
    """Pure-JAX (XLA) reference mirroring the PyTorch module, incl. conv bias."""
    dn = jax.lax.conv_dimension_numbers(x.shape, w1.shape,
                                        ("NCDHW", "OIDHW", "NCDHW"))

    def block(inp, w, b, leaky):
        p = jnp.pad(inp, ((0, 0), (0, 0), (1, 1), (1, 1), (1, 1)), mode="edge")
        y = jax.lax.conv_general_dilated(
            p, w, window_strides=(1, 1, 1), padding="VALID",
            dimension_numbers=dn, precision=jax.lax.Precision.HIGHEST)
        y = y + b[None, :, None, None, None]
        mean = y.mean(axis=(2, 3, 4), keepdims=True)
        var = ((y - mean) ** 2).mean(axis=(2, 3, 4), keepdims=True)
        y = (y - mean) * jax.lax.rsqrt(var + 1e-5)
        if leaky:
            y = jnp.where(y > 0, y, 0.2 * y)
        return y

    return x + block(block(x, w1, b1, True), w2, b2, False)


if __name__ == "__main__":
    dim = 4
    N, D, H, W = 2, 8, 8, 8

    key = jax.random.PRNGKey(0)
    k_x, k_w1, k_b1, k_w2, k_b2 = jax.random.split(key, 5)
    x = jax.random.normal(k_x, (N, dim, D, H, W), dtype=jnp.float32)
    w1 = jax.random.normal(k_w1, (dim, dim, 3, 3, 3), dtype=jnp.float32) * 0.1
    b1 = jax.random.normal(k_b1, (dim,), dtype=jnp.float32) * 0.1
    w2 = jax.random.normal(k_w2, (dim, dim, 3, 3, 3), dtype=jnp.float32) * 0.1
    b2 = jax.random.normal(k_b2, (dim,), dtype=jnp.float32) * 0.1

    fwd = jax.jit(resnet_block_forward, static_argnames=("matmul_dtype",))

    out = jax.block_until_ready(fwd(x, w1, b1, w2, b2))
    ref = jax.block_until_ready(_reference_forward(x, w1, b1, w2, b2))
    assert out.shape == x.shape
    max_err = float(jnp.max(jnp.abs(out - ref)))
    # Tolerance covers the MXU's emulated-f32 matmul path.
    assert jnp.allclose(out, ref, atol=2e-2, rtol=2e-2), (
        f"f32 mismatch vs reference (max abs err {max_err})")

    # bf16 MXU-input path (v6e/v7x peak rate; f32 accumulation + f32 stats).
    out_bf16 = jax.block_until_ready(
        fwd(x, w1, b1, w2, b2, matmul_dtype=jnp.bfloat16))
    assert jnp.allclose(out_bf16, ref, atol=2e-1, rtol=2e-1), "bf16 mismatch"

    print("KERNEL_OK")
</pallas_src>

<mosaic_0001>
module attributes {stable_mosaic.version = 11 : i64} {
  func.func @_resnet_block_kernel(%arg0: i32, %arg1: memref<3x1024xi32, #tpu.memory_space<vmem>>, %arg2: memref<1x4x1024xf32, #tpu.memory_space<vmem>>, %arg3: memref<4x108xf32, #tpu.memory_space<vmem>>, %arg4: memref<4x108xf32, #tpu.memory_space<vmem>>, %arg5: memref<1x4x1024xf32, #tpu.memory_space<vmem>>) attributes {dimension_semantics = [#tpu.dimension_semantics<parallel>], iteration_bounds = array<i64: 2>, scalar_prefetch = 0 : i64, scratch_operands = 0 : i64, tpu.core_type = #tpu.core_type<tc>, window_params = [{pipeline_mode = #tpu.pipeline_mode<synchronous>, transform_indices = @transform_0, window_bounds = array<i64: 3, 1024>}, {transform_indices = @transform_1, window_bounds = array<i64: 1, 4, 1024>}, {pipeline_mode = #tpu.pipeline_mode<synchronous>, transform_indices = @transform_2, window_bounds = array<i64: 4, 108>}, {pipeline_mode = #tpu.pipeline_mode<synchronous>, transform_indices = @transform_3, window_bounds = array<i64: 4, 108>}, {transform_indices = @transform_4, window_bounds = array<i64: 1, 4, 1024>}]} {
    %c0 = arith.constant 0 : index
    %c0_0 = arith.constant 0 : index
    %c0_1 = arith.constant 0 : index
    %0 = vector.load %arg2[%c0, %c0_0, %c0_1] : memref<1x4x1024xf32, #tpu.memory_space<vmem>>, vector<1x4x1024xf32>
    %1 = vector.shape_cast %0 : vector<1x4x1024xf32> to vector<4x1024xf32>
    %c0_2 = arith.constant 0 : index
    %c0_3 = arith.constant 0 : index
    %2 = vector.load %arg1[%c0_2, %c0_3] : memref<3x1024xi32, #tpu.memory_space<vmem>>, vector<3x1024xi32>
    %3 = vector.extract_strided_slice %2 {offsets = [0, 0], sizes = [1, 1024], strides = [1, 1]} : vector<3x1024xi32> to vector<1x1024xi32>
    %4 = vector.extract_strided_slice %2 {offsets = [1, 0], sizes = [1, 1024], strides = [1, 1]} : vector<3x1024xi32> to vector<1x1024xi32>
    %5 = vector.extract_strided_slice %2 {offsets = [2, 0], sizes = [1, 1024], strides = [1, 1]} : vector<3x1024xi32> to vector<1x1024xi32>
    %c1_i32 = arith.constant 1 : i32
    %6 = vector.broadcast %c1_i32 : i32 to vector<1x1024xi32>
    %7 = arith.cmpi sge, %3, %6 : vector<1x1024xi32>
    %c8_i32 = arith.constant 8 : i32
    %8 = vector.broadcast %c8_i32 : i32 to vector<1x1024xi32>
    %9 = arith.cmpi sle, %3, %8 : vector<1x1024xi32>
    %10 = arith.andi %7, %9 : vector<1x1024xi1>
    %c1_i32_4 = arith.constant 1 : i32
    %11 = vector.broadcast %c1_i32_4 : i32 to vector<1x1024xi32>
    %12 = arith.cmpi sge, %4, %11 : vector<1x1024xi32>
    %13 = arith.andi %10, %12 : vector<1x1024xi1>
    %c8_i32_5 = arith.constant 8 : i32
    %14 = vector.broadcast %c8_i32_5 : i32 to vector<1x1024xi32>
    %15 = arith.cmpi sle, %4, %14 : vector<1x1024xi32>
    %16 = arith.andi %13, %15 : vector<1x1024xi1>
    %c1_i32_6 = arith.constant 1 : i32
    %17 = vector.broadcast %c1_i32_6 : i32 to vector<1x1024xi32>
    %18 = arith.cmpi sge, %5, %17 : vector<1x1024xi32>
    %19 = arith.andi %16, %18 : vector<1x1024xi1>
    %c8_i32_7 = arith.constant 8 : i32
    %20 = vector.broadcast %c8_i32_7 : i32 to vector<1x1024xi32>
    %21 = arith.cmpi sle, %5, %20 : vector<1x1024xi32>
    %22 = arith.andi %19, %21 : vector<1x1024xi1>
    %cst = arith.constant 1.000000e+00 : f32
    %cst_8 = arith.constant 0.000000e+00 : f32
    %23 = vector.broadcast %cst : f32 to vector<1x1024xf32>
    %24 = vector.broadcast %cst_8 : f32 to vector<1x1024xf32>
    %25 = arith.select %22, %23, %24 : vector<1x1024xi1>, vector<1x1024xf32>
    %c0_9 = arith.constant 0 : index
    %c0_10 = arith.constant 0 : index
    %26 = vector.load %arg3[%c0_9, %c0_10] : memref<4x108xf32, #tpu.memory_space<vmem>>, vector<4x108xf32>
    %27 = vector.extract_strided_slice %1 {offsets = [0, 913], sizes = [4, 111], strides = [1, 1]} : vector<4x1024xf32> to vector<4x111xf32>
    %28 = vector.extract_strided_slice %1 {offsets = [0, 0], sizes = [4, 913], strides = [1, 1]} : vector<4x1024xf32> to vector<4x913xf32>
    %29 = tpu.concatenate %27, %28 in 1 : vector<4x111xf32>, vector<4x913xf32> -> vector<4x1024xf32>
    %30 = vector.extract_strided_slice %1 {offsets = [0, 914], sizes = [4, 110], strides = [1, 1]} : vector<4x1024xf32> to vector<4x110xf32>
    %31 = vector.extract_strided_slice %1 {offsets = [0, 0], sizes = [4, 914], strides = [1, 1]} : vector<4x1024xf32> to vector<4x914xf32>
    %32 = tpu.concatenate %30, %31 in 1 : vector<4x110xf32>, vector<4x914xf32> -> vector<4x1024xf32>
    %33 = vector.extract_strided_slice %1 {offsets = [0, 915], sizes = [4, 109], strides = [1, 1]} : vector<4x1024xf32> to vector<4x109xf32>
    %34 = vector.extract_strided_slice %1 {offsets = [0, 0], sizes = [4, 915], strides = [1, 1]} : vector<4x1024xf32> to vector<4x915xf32>
    %35 = tpu.concatenate %33, %34 in 1 : vector<4x109xf32>, vector<4x915xf32> -> vector<4x1024xf32>
    %36 = vector.extract_strided_slice %1 {offsets = [0, 923], sizes = [4, 101], strides = [1, 1]} : vector<4x1024xf32> to vector<4x101xf32>
    %37 = vector.extract_strided_slice %1 {offsets = [0, 0], sizes = [4, 923], strides = [1, 1]} : vector<4x1024xf32> to vector<4x923xf32>
    %38 = tpu.concatenate %36, %37 in 1 : vector<4x101xf32>, vector<4x923xf32> -> vector<4x1024xf32>
    %39 = vector.extract_strided_slice %1 {offsets = [0, 924], sizes = [4, 100], strides = [1, 1]} : vector<4x1024xf32> to vector<4x100xf32>
    %40 = vector.extract_strided_slice %1 {offsets = [0, 0], sizes = [4, 924], strides = [1, 1]} : vector<4x1024xf32> to vector<4x924xf32>
    %41 = tpu.concatenate %39, %40 in 1 : vector<4x100xf32>, vector<4x924xf32> -> vector<4x1024xf32>
    %42 = vector.extract_strided_slice %1 {offsets = [0, 925], sizes = [4, 99], strides = [1, 1]} : vector<4x1024xf32> to vector<4x99xf32>
    %43 = vector.extract_strided_slice %1 {offsets = [0, 0], sizes = [4, 925], strides = [1, 1]} : vector<4x1024xf32> to vector<4x925xf32>
    %44 = tpu.concatenate %42, %43 in 1 : vector<4x99xf32>, vector<4x925xf32> -> vector<4x1024xf32>
    %45 = vector.extract_strided_slice %1 {offsets = [0, 933], sizes = [4, 91], strides = [1, 1]} : vector<4x1024xf32> to vector<4x91xf32>
    %46 = vector.extract_strided_slice %1 {offsets = [0, 0], sizes = [4, 933], strides = [1, 1]} : vector<4x1024xf32> to vector<4x933xf32>
    %47 = tpu.concatenate %45, %46 in 1 : vector<4x91xf32>, vector<4x933xf32> -> vector<4x1024xf32>
    %48 = vector.extract_strided_slice %1 {offsets = [0, 934], sizes = [4, 90], strides = [1, 1]} : vector<4x1024xf32> to vector<4x90xf32>
    %49 = vector.extract_strided_slice %1 {offsets = [0, 0], sizes = [4, 934], strides = [1, 1]} : vector<4x1024xf32> to vector<4x934xf32>
    %50 = tpu.concatenate %48, %49 in 1 : vector<4x90xf32>, vector<4x934xf32> -> vector<4x1024xf32>
    %51 = vector.extract_strided_slice %1 {offsets = [0, 935], sizes = [4, 89], strides = [1, 1]} : vector<4x1024xf32> to vector<4x89xf32>
    %52 = vector.extract_strided_slice %1 {offsets = [0, 0], sizes = [4, 935], strides = [1, 1]} : vector<4x1024xf32> to vector<4x935xf32>
    %53 = tpu.concatenate %51, %52 in 1 : vector<4x89xf32>, vector<4x935xf32> -> vector<4x1024xf32>
    %54 = vector.extract_strided_slice %1 {offsets = [0, 1013], sizes = [4, 11], strides = [1, 1]} : vector<4x1024xf32> to vector<4x11xf32>
    %55 = vector.extract_strided_slice %1 {offsets = [0, 0], sizes = [4, 1013], strides = [1, 1]} : vector<4x1024xf32> to vector<4x1013xf32>
    %56 = tpu.concatenate %54, %55 in 1 : vector<4x11xf32>, vector<4x1013xf32> -> vector<4x1024xf32>
    %57 = vector.extract_strided_slice %1 {offsets = [0, 1014], sizes = [4, 10], strides = [1, 1]} : vector<4x1024xf32> to vector<4x10xf32>
    %58 = vector.extract_strided_slice %1 {offsets = [0, 0], sizes = [4, 1014], strides = [1, 1]} : vector<4x1024xf32> to vector<4x1014xf32>
    %59 = tpu.concatenate %57, %58 in 1 : vector<4x10xf32>, vector<4x1014xf32> -> vector<4x1024xf32>
    %60 = vector.extract_strided_slice %1 {offsets = [0, 1015], sizes = [4, 9], strides = [1, 1]} : vector<4x1024xf32> to vector<4x9xf32>
    %61 = vector.extract_strided_slice %1 {offsets = [0, 0], sizes = [4, 1015], strides = [1, 1]} : vector<4x1024xf32> to vector<4x1015xf32>
    %62 = tpu.concatenate %60, %61 in 1 : vector<4x9xf32>, vector<4x1015xf32> -> vector<4x1024xf32>
    %63 = vector.extract_strided_slice %1 {offsets = [0, 1023], sizes = [4, 1], strides = [1, 1]} : vector<4x1024xf32> to vector<4x1xf32>
    %64 = vector.extract_strided_slice %1 {offsets = [0, 0], sizes = [4, 1023], strides = [1, 1]} : vector<4x1024xf32> to vector<4x1023xf32>
    %65 = tpu.concatenate %63, %64 in 1 : vector<4x1xf32>, vector<4x1023xf32> -> vector<4x1024xf32>
    %66 = vector.extract_strided_slice %1 {offsets = [0, 1], sizes = [4, 1023], strides = [1, 1]} : vector<4x1024xf32> to vector<4x1023xf32>
    %67 = vector.extract_strided_slice %1 {offsets = [0, 0], sizes = [4, 1], strides = [1, 1]} : vector<4x1024xf32> to vector<4x1xf32>
    %68 = tpu.concatenate %66, %67 in 1 : vector<4x1023xf32>, vector<4x1xf32> -> vector<4x1024xf32>
    %69 = vector.extract_strided_slice %1 {offsets = [0, 9], sizes = [4, 1015], strides = [1, 1]} : vector<4x1024xf32> to vector<4x1015xf32>
    %70 = vector.extract_strided_slice %1 {offsets = [0, 0], sizes = [4, 9], strides = [1, 1]} : vector<4x1024xf32> to vector<4x9xf32>
    %71 = tpu.concatenate %69, %70 in 1 : vector<4x1015xf32>, vector<4x9xf32> -> vector<4x1024xf32>
    %72 = vector.extract_strided_slice %1 {offsets = [0, 10], sizes = [4, 1014], strides = [1, 1]} : vector<4x1024xf32> to vector<4x1014xf32>
    %73 = vector.extract_strided_slice %1 {offsets = [0, 0], sizes = [4, 10], strides = [1, 1]} : vector<4x1024xf32> to vector<4x10xf32>
    %74 = tpu.concatenate %72, %73 in 1 : vector<4x1014xf32>, vector<4x10xf32> -> vector<4x1024xf32>
    %75 = vector.extract_strided_slice %1 {offsets = [0, 11], sizes = [4, 1013], strides = [1, 1]} : vector<4x1024xf32> to vector<4x1013xf32>
    %76 = vector.extract_strided_slice %1 {offsets = [0, 0], sizes = [4, 11], strides = [1, 1]} : vector<4x1024xf32> to vector<4x11xf32>
    %77 = tpu.concatenate %75, %76 in 1 : vector<4x1013xf32>, vector<4x11xf32> -> vector<4x1024xf32>
    %78 = vector.extract_strided_slice %1 {offsets = [0, 89], sizes = [4, 935], strides = [1, 1]} : vector<4x1024xf32> to vector<4x935xf32>
    %79 = vector.extract_strided_slice %1 {offsets = [0, 0], sizes = [4, 89], strides = [1, 1]} : vector<4x1024xf32> to vector<4x89xf32>
    %80 = tpu.concatenate %78, %79 in 1 : vector<4x935xf32>, vector<4x89xf32> -> vector<4x1024xf32>
    %81 = vector.extract_strided_slice %1 {offsets = [0, 90], sizes = [4, 934], strides = [1, 1]} : vector<4x1024xf32> to vector<4x934xf32>
    %82 = vector.extract_strided_slice %1 {offsets = [0, 0], sizes = [4, 90], strides = [1, 1]} : vector<4x1024xf32> to vector<4x90xf32>
    %83 = tpu.concatenate %81, %82 in 1 : vector<4x934xf32>, vector<4x90xf32> -> vector<4x1024xf32>
    %84 = vector.extract_strided_slice %1 {offsets = [0, 91], sizes = [4, 933], strides = [1, 1]} : vector<4x1024xf32> to vector<4x933xf32>
    %85 = vector.extract_strided_slice %1 {offsets = [0, 0], sizes = [4, 91], strides = [1, 1]} : vector<4x1024xf32> to vector<4x91xf32>
    %86 = tpu.concatenate %84, %85 in 1 : vector<4x933xf32>, vector<4x91xf32> -> vector<4x1024xf32>
    %87 = vector.extract_strided_slice %1 {offsets = [0, 99], sizes = [4, 925], strides = [1, 1]} : vector<4x1024xf32> to vector<4x925xf32>
    %88 = vector.extract_strided_slice %1 {offsets = [0, 0], sizes = [4, 99], strides = [1, 1]} : vector<4x1024xf32> to vector<4x99xf32>
    %89 = tpu.concatenate %87, %88 in 1 : vector<4x925xf32>, vector<4x99xf32> -> vector<4x1024xf32>
    %90 = vector.extract_strided_slice %1 {offsets = [0, 100], sizes = [4, 924], strides = [1, 1]} : vector<4x1024xf32> to vector<4x924xf32>
    %91 = vector.extract_strided_slice %1 {offsets = [0, 0], sizes = [4, 100], strides = [1, 1]} : vector<4x1024xf32> to vector<4x100xf32>
    %92 = tpu.concatenate %90, %91 in 1 : vector<4x924xf32>, vector<4x100xf32> -> vector<4x1024xf32>
    %93 = vector.extract_strided_slice %1 {offsets = [0, 101], sizes = [4, 923], strides = [1, 1]} : vector<4x1024xf32> to vector<4x923xf32>
    %94 = vector.extract_strided_slice %1 {offsets = [0, 0], sizes = [4, 101], strides = [1, 1]} : vector<4x1024xf32> to vector<4x101xf32>
    %95 = tpu.concatenate %93, %94 in 1 : vector<4x923xf32>, vector<4x101xf32> -> vector<4x1024xf32>
    %96 = vector.extract_strided_slice %1 {offsets = [0, 109], sizes = [4, 915], strides = [1, 1]} : vector<4x1024xf32> to vector<4x915xf32>
    %97 = vector.extract_strided_slice %1 {offsets = [0, 0], sizes = [4, 109], strides = [1, 1]} : vector<4x1024xf32> to vector<4x109xf32>
    %98 = tpu.concatenate %96, %97 in 1 : vector<4x915xf32>, vector<4x109xf32> -> vector<4x1024xf32>
    %99 = vector.extract_strided_slice %1 {offsets = [0, 110], sizes = [4, 914], strides = [1, 1]} : vector<4x1024xf32> to vector<4x914xf32>
    %100 = vector.extract_strided_slice %1 {offsets = [0, 0], sizes = [4, 110], strides = [1, 1]} : vector<4x1024xf32> to vector<4x110xf32>
    %101 = tpu.concatenate %99, %100 in 1 : vector<4x914xf32>, vector<4x110xf32> -> vector<4x1024xf32>
    %102 = vector.extract_strided_slice %1 {offsets = [0, 111], sizes = [4, 913], strides = [1, 1]} : vector<4x1024xf32> to vector<4x913xf32>
    %103 = vector.extract_strided_slice %1 {offsets = [0, 0], sizes = [4, 111], strides = [1, 1]} : vector<4x1024xf32> to vector<4x111xf32>
    %104 = tpu.concatenate %102, %103 in 1 : vector<4x913xf32>, vector<4x111xf32> -> vector<4x1024xf32>
    %105 = tpu.concatenate %29, %32, %35, %38, %41, %44, %47, %50, %53, %56, %59, %62, %65, %1, %68, %71 in 0 : vector<4x1024xf32>, vector<4x1024xf32>, vector<4x1024xf32>, vector<4x1024xf32>, vector<4x1024xf32>, vector<4x1024xf32>, vector<4x1024xf32>, vector<4x1024xf32>, vector<4x1024xf32>, vector<4x1024xf32>, vector<4x1024xf32>, vector<4x1024xf32>, vector<4x1024xf32>, vector<4x1024xf32>, vector<4x1024xf32>, vector<4x1024xf32> -> vector<64x1024xf32>
    %106 = tpu.concatenate %74, %77, %80, %83, %86, %89, %92, %95, %98, %101, %104 in 0 : vector<4x1024xf32>, vector<4x1024xf32>, vector<4x1024xf32>, vector<4x1024xf32>, vector<4x1024xf32>, vector<4x1024xf32>, vector<4x1024xf32>, vector<4x1024xf32>, vector<4x1024xf32>, vector<4x1024xf32>, vector<4x1024xf32> -> vector<44x1024xf32>
    %107 = tpu.concatenate %105, %106 in 0 : vector<64x1024xf32>, vector<44x1024xf32> -> vector<108x1024xf32>
    %cst_11 = arith.constant dense<0.000000e+00> : vector<4x1024xf32>
    %108 = tpu.matmul %26, %107, %cst_11 {dimension_numbers = #tpu.dot_dimension_numbers<[1], [0], [0], [1], [0, 0, 1, 1], [], []>} : vector<4x108xf32>, vector<108x1024xf32>, vector<4x1024xf32> -> vector<4x1024xf32>
    %109 = vector.broadcast %25 : vector<1x1024xf32> to vector<4x1024xf32>
    %110 = arith.mulf %108, %109 : vector<4x1024xf32>
    %cst_12 = arith.constant dense<0.000000e+00> : vector<4xf32>
    %111 = vector.multi_reduction <add>, %110, %cst_12 [1] : vector<4x1024xf32> to vector<4xf32>
    %112 = vector.shape_cast %111 : vector<4xf32> to vector<4x1xf32>
    %cst_13 = arith.constant 0.001953125 : f32
    %113 = vector.broadcast %cst_13 : f32 to vector<4x1xf32>
    %114 = arith.mulf %112, %113 : vector<4x1xf32>
    %115 = vector.broadcast %114 : vector<4x1xf32> to vector<4x1024xf32>
    %116 = arith.subf %108, %115 : vector<4x1024xf32>
    %117 = arith.mulf %116, %116 : vector<4x1024xf32>
    %118 = vector.broadcast %25 : vector<1x1024xf32> to vector<4x1024xf32>
    %119 = arith.mulf %117, %118 : vector<4x1024xf32>
    %cst_14 = arith.constant dense<0.000000e+00> : vector<4xf32>
    %120 = vector.multi_reduction <add>, %119, %cst_14 [1] : vector<4x1024xf32> to vector<4xf32>
    %121 = vector.shape_cast %120 : vector<4xf32> to vector<4x1xf32>
    %cst_15 = arith.constant 0.001953125 : f32
    %122 = vector.broadcast %cst_15 : f32 to vector<4x1xf32>
    %123 = arith.mulf %121, %122 : vector<4x1xf32>
    %cst_16 = arith.constant 9.99999974E-6 : f32
    %124 = vector.broadcast %cst_16 : f32 to vector<4x1xf32>
    %125 = arith.addf %123, %124 : vector<4x1xf32>
    %126 = math.rsqrt %125 : vector<4x1xf32>
    %127 = vector.broadcast %126 : vector<4x1xf32> to vector<4x1024xf32>
    %128 = arith.mulf %116, %127 : vector<4x1024xf32>
    %cst_17 = arith.constant 0.000000e+00 : f32
    %129 = vector.broadcast %cst_17 : f32 to vector<4x1024xf32>
    %130 = arith.cmpf ogt, %128, %129 : vector<4x1024xf32>
    %cst_18 = arith.constant 2.000000e-01 : f32
    %131 = vector.broadcast %cst_18 : f32 to vector<4x1024xf32>
    %132 = arith.mulf %131, %128 : vector<4x1024xf32>
    %133 = arith.select %130, %128, %132 : vector<4x1024xi1>, vector<4x1024xf32>
    %c0_i32 = arith.constant 0 : i32
    %134 = vector.broadcast %c0_i32 : i32 to vector<1x1024xi32>
    %135 = arith.cmpi eq, %5, %134 : vector<1x1024xi32>
    %136 = vector.extract_strided_slice %133 {offsets = [0, 1], sizes = [4, 1023], strides = [1, 1]} : vector<4x1024xf32> to vector<4x1023xf32>
    %137 = vector.extract_strided_slice %133 {offsets = [0, 0], sizes = [4, 1], strides = [1, 1]} : vector<4x1024xf32> to vector<4x1xf32>
    %138 = tpu.concatenate %136, %137 in 1 : vector<4x1023xf32>, vector<4x1xf32> -> vector<4x1024xf32>
    %139 = vector.shape_cast %135 : vector<1x1024xi1> to vector<1x1024xi1>
    %140 = vector.broadcast %139 : vector<1x1024xi1> to vector<4x1024xi1>
    %141 = arith.select %140, %138, %133 : vector<4x1024xi1>, vector<4x1024xf32>
    %c9_i32 = arith.constant 9 : i32
    %142 = vector.broadcast %c9_i32 : i32 to vector<1x1024xi32>
    %143 = arith.cmpi eq, %5, %142 : vector<1x1024xi32>
    %144 = vector.extract_strided_slice %141 {offsets = [0, 1023], sizes = [4, 1], strides = [1, 1]} : vector<4x1024xf32> to vector<4x1xf32>
    %145 = vector.extract_strided_slice %141 {offsets = [0, 0], sizes = [4, 1023], strides = [1, 1]} : vector<4x1024xf32> to vector<4x1023xf32>
    %146 = tpu.concatenate %144, %145 in 1 : vector<4x1xf32>, vector<4x1023xf32> -> vector<4x1024xf32>
    %147 = vector.shape_cast %143 : vector<1x1024xi1> to vector<1x1024xi1>
    %148 = vector.broadcast %147 : vector<1x1024xi1> to vector<4x1024xi1>
    %149 = arith.select %148, %146, %141 : vector<4x1024xi1>, vector<4x1024xf32>
    %c0_i32_19 = arith.constant 0 : i32
    %150 = vector.broadcast %c0_i32_19 : i32 to vector<1x1024xi32>
    %151 = arith.cmpi eq, %4, %150 : vector<1x1024xi32>
    %152 = vector.extract_strided_slice %149 {offsets = [0, 10], sizes = [4, 1014], strides = [1, 1]} : vector<4x1024xf32> to vector<4x1014xf32>
    %153 = vector.extract_strided_slice %149 {offsets = [0, 0], sizes = [4, 10], strides = [1, 1]} : vector<4x1024xf32> to vector<4x10xf32>
    %154 = tpu.concatenate %152, %153 in 1 : vector<4x1014xf32>, vector<4x10xf32> -> vector<4x1024xf32>
    %155 = vector.shape_cast %151 : vector<1x1024xi1> to vector<1x1024xi1>
    %156 = vector.broadcast %155 : vector<1x1024xi1> to vector<4x1024xi1>
    %157 = arith.select %156, %154, %149 : vector<4x1024xi1>, vector<4x1024xf32>
    %c9_i32_20 = arith.constant 9 : i32
    %158 = vector.broadcast %c9_i32_20 : i32 to vector<1x1024xi32>
    %159 = arith.cmpi eq, %4, %158 : vector<1x1024xi32>
    %160 = vector.extract_strided_slice %157 {offsets = [0, 1014], sizes = [4, 10], strides = [1, 1]} : vector<4x1024xf32> to vector<4x10xf32>
    %161 = vector.extract_strided_slice %157 {offsets = [0, 0], sizes = [4, 1014], strides = [1, 1]} : vector<4x1024xf32> to vector<4x1014xf32>
    %162 = tpu.concatenate %160, %161 in 1 : vector<4x10xf32>, vector<4x1014xf32> -> vector<4x1024xf32>
    %163 = vector.shape_cast %159 : vector<1x1024xi1> to vector<1x1024xi1>
    %164 = vector.broadcast %163 : vector<1x1024xi1> to vector<4x1024xi1>
    %165 = arith.select %164, %162, %157 : vector<4x1024xi1>, vector<4x1024xf32>
    %c0_i32_21 = arith.constant 0 : i32
    %166 = vector.broadcast %c0_i32_21 : i32 to vector<1x1024xi32>
    %167 = arith.cmpi eq, %3, %166 : vector<1x1024xi32>
    %168 = vector.extract_strided_slice %165 {offsets = [0, 100], sizes = [4, 924], strides = [1, 1]} : vector<4x1024xf32> to vector<4x924xf32>
    %169 = vector.extract_strided_slice %165 {offsets = [0, 0], sizes = [4, 100], strides = [1, 1]} : vector<4x1024xf32> to vector<4x100xf32>
    %170 = tpu.concatenate %168, %169 in 1 : vector<4x924xf32>, vector<4x100xf32> -> vector<4x1024xf32>
    %171 = vector.shape_cast %167 : vector<1x1024xi1> to vector<1x1024xi1>
    %172 = vector.broadcast %171 : vector<1x1024xi1> to vector<4x1024xi1>
    %173 = arith.select %172, %170, %165 : vector<4x1024xi1>, vector<4x1024xf32>
    %c9_i32_22 = arith.constant 9 : i32
    %174 = vector.broadcast %c9_i32_22 : i32 to vector<1x1024xi32>
    %175 = arith.cmpi eq, %3, %174 : vector<1x1024xi32>
    %176 = vector.extract_strided_slice %173 {offsets = [0, 924], sizes = [4, 100], strides = [1, 1]} : vector<4x1024xf32> to vector<4x100xf32>
    %177 = vector.extract_strided_slice %173 {offsets = [0, 0], sizes = [4, 924], strides = [1, 1]} : vector<4x1024xf32> to vector<4x924xf32>
    %178 = tpu.concatenate %176, %177 in 1 : vector<4x100xf32>, vector<4x924xf32> -> vector<4x1024xf32>
    %179 = vector.shape_cast %175 : vector<1x1024xi1> to vector<1x1024xi1>
    %180 = vector.broadcast %179 : vector<1x1024xi1> to vector<4x1024xi1>
    %181 = arith.select %180, %178, %173 : vector<4x1024xi1>, vector<4x1024xf32>
    %c0_23 = arith.constant 0 : index
    %c0_24 = arith.constant 0 : index
    %182 = vector.load %arg4[%c0_23, %c0_24] : memref<4x108xf32, #tpu.memory_space<vmem>>, vector<4x108xf32>
    %183 = vector.extract_strided_slice %181 {offsets = [0, 913], sizes = [4, 111], strides = [1, 1]} : vector<4x1024xf32> to vector<4x111xf32>
    %184 = vector.extract_strided_slice %181 {offsets = [0, 0], sizes = [4, 913], strides = [1, 1]} : vector<4x1024xf32> to vector<4x913xf32>
    %185 = tpu.concatenate %183, %184 in 1 : vector<4x111xf32>, vector<4x913xf32> -> vector<4x1024xf32>
    %186 = vector.extract_strided_slice %181 {offsets = [0, 914], sizes = [4, 110], strides = [1, 1]} : vector<4x1024xf32> to vector<4x110xf32>
    %187 = vector.extract_strided_slice %181 {offsets = [0, 0], sizes = [4, 914], strides = [1, 1]} : vector<4x1024xf32> to vector<4x914xf32>
    %188 = tpu.concatenate %186, %187 in 1 : vector<4x110xf32>, vector<4x914xf32> -> vector<4x1024xf32>
    %189 = vector.extract_strided_slice %181 {offsets = [0, 915], sizes = [4, 109], strides = [1, 1]} : vector<4x1024xf32> to vector<4x109xf32>
    %190 = vector.extract_strided_slice %181 {offsets = [0, 0], sizes = [4, 915], strides = [1, 1]} : vector<4x1024xf32> to vector<4x915xf32>
    %191 = tpu.concatenate %189, %190 in 1 : vector<4x109xf32>, vector<4x915xf32> -> vector<4x1024xf32>
    %192 = vector.extract_strided_slice %181 {offsets = [0, 923], sizes = [4, 101], strides = [1, 1]} : vector<4x1024xf32> to vector<4x101xf32>
    %193 = vector.extract_strided_slice %181 {offsets = [0, 0], sizes = [4, 923], strides = [1, 1]} : vector<4x1024xf32> to vector<4x923xf32>
    %194 = tpu.concatenate %192, %193 in 1 : vector<4x101xf32>, vector<4x923xf32> -> vector<4x1024xf32>
    %195 = vector.extract_strided_slice %181 {offsets = [0, 924], sizes = [4, 100], strides = [1, 1]} : vector<4x1024xf32> to vector<4x100xf32>
    %196 = vector.extract_strided_slice %181 {offsets = [0, 0], sizes = [4, 924], strides = [1, 1]} : vector<4x1024xf32> to vector<4x924xf32>
    %197 = tpu.concatenate %195, %196 in 1 : vector<4x100xf32>, vector<4x924xf32> -> vector<4x1024xf32>
    %198 = vector.extract_strided_slice %181 {offsets = [0, 925], sizes = [4, 99], strides = [1, 1]} : vector<4x1024xf32> to vector<4x99xf32>
    %199 = vector.extract_strided_slice %181 {offsets = [0, 0], sizes = [4, 925], strides = [1, 1]} : vector<4x1024xf32> to vector<4x925xf32>
    %200 = tpu.concatenate %198, %199 in 1 : vector<4x99xf32>, vector<4x925xf32> -> vector<4x1024xf32>
    %201 = vector.extract_strided_slice %181 {offsets = [0, 933], sizes = [4, 91], strides = [1, 1]} : vector<4x1024xf32> to vector<4x91xf32>
    %202 = vector.extract_strided_slice %181 {offsets = [0, 0], sizes = [4, 933], strides = [1, 1]} : vector<4x1024xf32> to vector<4x933xf32>
    %203 = tpu.concatenate %201, %202 in 1 : vector<4x91xf32>, vector<4x933xf32> -> vector<4x1024xf32>
    %204 = vector.extract_strided_slice %181 {offsets = [0, 934], sizes = [4, 90], strides = [1, 1]} : vector<4x1024xf32> to vector<4x90xf32>
    %205 = vector.extract_strided_slice %181 {offsets = [0, 0], sizes = [4, 934], strides = [1, 1]} : vector<4x1024xf32> to vector<4x934xf32>
    %206 = tpu.concatenate %204, %205 in 1 : vector<4x90xf32>, vector<4x934xf32> -> vector<4x1024xf32>
    %207 = vector.extract_strided_slice %181 {offsets = [0, 935], sizes = [4, 89], strides = [1, 1]} : vector<4x1024xf32> to vector<4x89xf32>
    %208 = vector.extract_strided_slice %181 {offsets = [0, 0], sizes = [4, 935], strides = [1, 1]} : vector<4x1024xf32> to vector<4x935xf32>
    %209 = tpu.concatenate %207, %208 in 1 : vector<4x89xf32>, vector<4x935xf32> -> vector<4x1024xf32>
    %210 = vector.extract_strided_slice %181 {offsets = [0, 1013], sizes = [4, 11], strides = [1, 1]} : vector<4x1024xf32> to vector<4x11xf32>
    %211 = vector.extract_strided_slice %181 {offsets = [0, 0], sizes = [4, 1013], strides = [1, 1]} : vector<4x1024xf32> to vector<4x1013xf32>
    %212 = tpu.concatenate %210, %211 in 1 : vector<4x11xf32>, vector<4x1013xf32> -> vector<4x1024xf32>
    %213 = vector.extract_strided_slice %181 {offsets = [0, 1014], sizes = [4, 10], strides = [1, 1]} : vector<4x1024xf32> to vector<4x10xf32>
    %214 = vector.extract_strided_slice %181 {offsets = [0, 0], sizes = [4, 1014], strides = [1, 1]} : vector<4x1024xf32> to vector<4x1014xf32>
    %215 = tpu.concatenate %213, %214 in 1 : vector<4x10xf32>, vector<4x1014xf32> -> vector<4x1024xf32>
    %216 = vector.extract_strided_slice %181 {offsets = [0, 1015], sizes = [4, 9], strides = [1, 1]} : vector<4x1024xf32> to vector<4x9xf32>
    %217 = vector.extract_strided_slice %181 {offsets = [0, 0], sizes = [4, 1015], strides = [1, 1]} : vector<4x1024xf32> to vector<4x1015xf32>
    %218 = tpu.concatenate %216, %217 in 1 : vector<4x9xf32>, vector<4x1015xf32> -> vector<4x1024xf32>
    %219 = vector.extract_strided_slice %181 {offsets = [0, 1023], sizes = [4, 1], strides = [1, 1]} : vector<4x1024xf32> to vector<4x1xf32>
    %220 = vector.extract_strided_slice %181 {offsets = [0, 0], sizes = [4, 1023], strides = [1, 1]} : vector<4x1024xf32> to vector<4x1023xf32>
    %221 = tpu.concatenate %219, %220 in 1 : vector<4x1xf32>, vector<4x1023xf32> -> vector<4x1024xf32>
    %222 = vector.extract_strided_slice %181 {offsets = [0, 1], sizes = [4, 1023], strides = [1, 1]} : vector<4x1024xf32> to vector<4x1023xf32>
    %223 = vector.extract_strided_slice %181 {offsets = [0, 0], sizes = [4, 1], strides = [1, 1]} : vector<4x1024xf32> to vector<4x1xf32>
    %224 = tpu.concatenate %222, %223 in 1 : vector<4x1023xf32>, vector<4x1xf32> -> vector<4x1024xf32>
    %225 = vector.extract_strided_slice %181 {offsets = [0, 9], sizes = [4, 1015], strides = [1, 1]} : vector<4x1024xf32> to vector<4x1015xf32>
    %226 = vector.extract_strided_slice %181 {offsets = [0, 0], sizes = [4, 9], strides = [1, 1]} : vector<4x1024xf32> to vector<4x9xf32>
    %227 = tpu.concatenate %225, %226 in 1 : vector<4x1015xf32>, vector<4x9xf32> -> vector<4x1024xf32>
    %228 = vector.extract_strided_slice %181 {offsets = [0, 10], sizes = [4, 1014], strides = [1, 1]} : vector<4x1024xf32> to vector<4x1014xf32>
    %229 = vector.extract_strided_slice %181 {offsets = [0, 0], sizes = [4, 10], strides = [1, 1]} : vector<4x1024xf32> to vector<4x10xf32>
    %230 = tpu.concatenate %228, %229 in 1 : vector<4x1014xf32>, vector<4x10xf32> -> vector<4x1024xf32>
    %231 = vector.extract_strided_slice %181 {offsets = [0, 11], sizes = [4, 1013], strides = [1, 1]} : vector<4x1024xf32> to vector<4x1013xf32>
    %232 = vector.extract_strided_slice %181 {offsets = [0, 0], sizes = [4, 11], strides = [1, 1]} : vector<4x1024xf32> to vector<4x11xf32>
    %233 = tpu.concatenate %231, %232 in 1 : vector<4x1013xf32>, vector<4x11xf32> -> vector<4x1024xf32>
    %234 = vector.extract_strided_slice %181 {offsets = [0, 89], sizes = [4, 935], strides = [1, 1]} : vector<4x1024xf32> to vector<4x935xf32>
    %235 = vector.extract_strided_slice %181 {offsets = [0, 0], sizes = [4, 89], strides = [1, 1]} : vector<4x1024xf32> to vector<4x89xf32>
    %236 = tpu.concatenate %234, %235 in 1 : vector<4x935xf32>, vector<4x89xf32> -> vector<4x1024xf32>
    %237 = vector.extract_strided_slice %181 {offsets = [0, 90], sizes = [4, 934], strides = [1, 1]} : vector<4x1024xf32> to vector<4x934xf32>
    %238 = vector.extract_strided_slice %181 {offsets = [0, 0], sizes = [4, 90], strides = [1, 1]} : vector<4x1024xf32> to vector<4x90xf32>
    %239 = tpu.concatenate %237, %238 in 1 : vector<4x934xf32>, vector<4x90xf32> -> vector<4x1024xf32>
    %240 = vector.extract_strided_slice %181 {offsets = [0, 91], sizes = [4, 933], strides = [1, 1]} : vector<4x1024xf32> to vector<4x933xf32>
    %241 = vector.extract_strided_slice %181 {offsets = [0, 0], sizes = [4, 91], strides = [1, 1]} : vector<4x1024xf32> to vector<4x91xf32>
    %242 = tpu.concatenate %240, %241 in 1 : vector<4x933xf32>, vector<4x91xf32> -> vector<4x1024xf32>
    %243 = vector.extract_strided_slice %181 {offsets = [0, 99], sizes = [4, 925], strides = [1, 1]} : vector<4x1024xf32> to vector<4x925xf32>
    %244 = vector.extract_strided_slice %181 {offsets = [0, 0], sizes = [4, 99], strides = [1, 1]} : vector<4x1024xf32> to vector<4x99xf32>
    %245 = tpu.concatenate %243, %244 in 1 : vector<4x925xf32>, vector<4x99xf32> -> vector<4x1024xf32>
    %246 = vector.extract_strided_slice %181 {offsets = [0, 100], sizes = [4, 924], strides = [1, 1]} : vector<4x1024xf32> to vector<4x924xf32>
    %247 = vector.extract_strided_slice %181 {offsets = [0, 0], sizes = [4, 100], strides = [1, 1]} : vector<4x1024xf32> to vector<4x100xf32>
    %248 = tpu.concatenate %246, %247 in 1 : vector<4x924xf32>, vector<4x100xf32> -> vector<4x1024xf32>
    %249 = vector.extract_strided_slice %181 {offsets = [0, 101], sizes = [4, 923], strides = [1, 1]} : vector<4x1024xf32> to vector<4x923xf32>
    %250 = vector.extract_strided_slice %181 {offsets = [0, 0], sizes = [4, 101], strides = [1, 1]} : vector<4x1024xf32> to vector<4x101xf32>
    %251 = tpu.concatenate %249, %250 in 1 : vector<4x923xf32>, vector<4x101xf32> -> vector<4x1024xf32>
    %252 = vector.extract_strided_slice %181 {offsets = [0, 109], sizes = [4, 915], strides = [1, 1]} : vector<4x1024xf32> to vector<4x915xf32>
    %253 = vector.extract_strided_slice %181 {offsets = [0, 0], sizes = [4, 109], strides = [1, 1]} : vector<4x1024xf32> to vector<4x109xf32>
    %254 = tpu.concatenate %252, %253 in 1 : vector<4x915xf32>, vector<4x109xf32> -> vector<4x1024xf32>
    %255 = vector.extract_strided_slice %181 {offsets = [0, 110], sizes = [4, 914], strides = [1, 1]} : vector<4x1024xf32> to vector<4x914xf32>
    %256 = vector.extract_strided_slice %181 {offsets = [0, 0], sizes = [4, 110], strides = [1, 1]} : vector<4x1024xf32> to vector<4x110xf32>
    %257 = tpu.concatenate %255, %256 in 1 : vector<4x914xf32>, vector<4x110xf32> -> vector<4x1024xf32>
    %258 = vector.extract_strided_slice %181 {offsets = [0, 111], sizes = [4, 913], strides = [1, 1]} : vector<4x1024xf32> to vector<4x913xf32>
    %259 = vector.extract_strided_slice %181 {offsets = [0, 0], sizes = [4, 111], strides = [1, 1]} : vector<4x1024xf32> to vector<4x111xf32>
    %260 = tpu.concatenate %258, %259 in 1 : vector<4x913xf32>, vector<4x111xf32> -> vector<4x1024xf32>
    %261 = tpu.concatenate %185, %188, %191, %194, %197, %200, %203, %206, %209, %212, %215, %218, %221, %181, %224, %227 in 0 : vector<4x1024xf32>, vector<4x1024xf32>, vector<4x1024xf32>, vector<4x1024xf32>, vector<4x1024xf32>, vector<4x1024xf32>, vector<4x1024xf32>, vector<4x1024xf32>, vector<4x1024xf32>, vector<4x1024xf32>, vector<4x1024xf32>, vector<4x1024xf32>, vector<4x1024xf32>, vector<4x1024xf32>, vector<4x1024xf32>, vector<4x1024xf32> -> vector<64x1024xf32>
    %262 = tpu.concatenate %230, %233, %236, %239, %242, %245, %248, %251, %254, %257, %260 in 0 : vector<4x1024xf32>, vector<4x1024xf32>, vector<4x1024xf32>, vector<4x1024xf32>, vector<4x1024xf32>, vector<4x1024xf32>, vector<4x1024xf32>, vector<4x1024xf32>, vector<4x1024xf32>, vector<4x1024xf32>, vector<4x1024xf32> -> vector<44x1024xf32>
    %263 = tpu.concatenate %261, %262 in 0 : vector<64x1024xf32>, vector<44x1024xf32> -> vector<108x1024xf32>
    %cst_25 = arith.constant dense<0.000000e+00> : vector<4x1024xf32>
    %264 = tpu.matmul %182, %263, %cst_25 {dimension_numbers = #tpu.dot_dimension_numbers<[1], [0], [0], [1], [0, 0, 1, 1], [], []>} : vector<4x108xf32>, vector<108x1024xf32>, vector<4x1024xf32> -> vector<4x1024xf32>
    %265 = vector.broadcast %25 : vector<1x1024xf32> to vector<4x1024xf32>
    %266 = arith.mulf %264, %265 : vector<4x1024xf32>
    %cst_26 = arith.constant dense<0.000000e+00> : vector<4xf32>
    %267 = vector.multi_reduction <add>, %266, %cst_26 [1] : vector<4x1024xf32> to vector<4xf32>
    %268 = vector.shape_cast %267 : vector<4xf32> to vector<4x1xf32>
    %cst_27 = arith.constant 0.001953125 : f32
    %269 = vector.broadcast %cst_27 : f32 to vector<4x1xf32>
    %270 = arith.mulf %268, %269 : vector<4x1xf32>
    %271 = vector.broadcast %270 : vector<4x1xf32> to vector<4x1024xf32>
    %272 = arith.subf %264, %271 : vector<4x1024xf32>
    %273 = arith.mulf %272, %272 : vector<4x1024xf32>
    %274 = vector.broadcast %25 : vector<1x1024xf32> to vector<4x1024xf32>
    %275 = arith.mulf %273, %274 : vector<4x1024xf32>
    %cst_28 = arith.constant dense<0.000000e+00> : vector<4xf32>
    %276 = vector.multi_reduction <add>, %275, %cst_28 [1] : vector<4x1024xf32> to vector<4xf32>
    %277 = vector.shape_cast %276 : vector<4xf32> to vector<4x1xf32>
    %cst_29 = arith.constant 0.001953125 : f32
    %278 = vector.broadcast %cst_29 : f32 to vector<4x1xf32>
    %279 = arith.mulf %277, %278 : vector<4x1xf32>
    %cst_30 = arith.constant 9.99999974E-6 : f32
    %280 = vector.broadcast %cst_30 : f32 to vector<4x1xf32>
    %281 = arith.addf %279, %280 : vector<4x1xf32>
    %282 = math.rsqrt %281 : vector<4x1xf32>
    %283 = vector.broadcast %282 : vector<4x1xf32> to vector<4x1024xf32>
    %284 = arith.mulf %272, %283 : vector<4x1024xf32>
    %285 = arith.addf %284, %1 : vector<4x1024xf32>
    %c0_31 = arith.constant 0 : index
    %c0_32 = arith.constant 0 : index
    %c0_33 = arith.constant 0 : index
    %286 = vector.load %arg5[%c0_31, %c0_32, %c0_33] : memref<1x4x1024xf32, #tpu.memory_space<vmem>>, vector<1x4x1024xf32>
    %287 = vector.shape_cast %286 : vector<1x4x1024xf32> to vector<4x1024xf32>
    %288 = vector.shape_cast %285 : vector<4x1024xf32> to vector<1x4x1024xf32>
    tpu.vector_store %arg5[%c0_31, %c0_32, %c0_33], %288 {strides = array<i32>} : memref<1x4x1024xf32, #tpu.memory_space<vmem>>, vector<1x4x1024xf32>,
    return
  }
  func.func @transform_0(%arg0: i32) -> (i32, i32) {
    %c0_i32 = arith.constant 0 : i32
    %c0_i32_0 = arith.constant 0 : i32
    %c0_i32_1 = arith.constant 0 : i32
    return %c0_i32, %c0_i32_0 : i32, i32
  }
  func.func @transform_1(%arg0: i32) -> (i32, i32, i32) {
    %c0_i32 = arith.constant 0 : i32
    %c0_i32_0 = arith.constant 0 : i32
    %c0_i32_1 = arith.constant 0 : i32
    return %arg0, %c0_i32, %c0_i32_0 : i32, i32, i32
  }
  func.func @transform_2(%arg0: i32) -> (i32, i32) {
    %c0_i32 = arith.constant 0 : i32
    %c0_i32_0 = arith.constant 0 : i32
    %c0_i32_1 = arith.constant 0 : i32
    return %c0_i32, %c0_i32_0 : i32, i32
  }
  func.func @transform_3(%arg0: i32) -> (i32, i32) {
    %c0_i32 = arith.constant 0 : i32
    %c0_i32_0 = arith.constant 0 : i32
    %c0_i32_1 = arith.constant 0 : i32
    return %c0_i32, %c0_i32_0 : i32, i32
  }
  func.func @transform_4(%arg0: i32) -> (i32, i32, i32) {
    %c0_i32 = arith.constant 0 : i32
    %c0_i32_0 = arith.constant 0 : i32
    %c0_i32_1 = arith.constant 0 : i32
    return %arg0, %c0_i32, %c0_i32_0 : i32, i32, i32
  }
}

</mosaic_0001>

<llo_original>
// kernel: resnet_block_forward.1
$region0: #{resnet_block_forward.1}
  #allocation0 [shape = 'u32[]', space=smem, size = 0x4, offset = 0x4, fixed_abs, tag = 'smem constant byte address 0x4 - core index']
  #allocation1 [shape = 'u32[144,128]{1,0:T(1,128)}', space=vmem, size = 0x12000, scoped, tag = 'internal scratch']
  %s0 = inlined_call_operand.vmem [shape: s32[3,1024], index: 0, kind: input, shape index: {}]
  %s1 = inlined_call_operand.vmem [shape: f32[2,4,1024], index: 1, kind: input, shape index: {}]
  %s2 = inlined_call_operand.vmem [shape: f32[4,108], index: 2, kind: input, shape index: {}]
  %s3 = inlined_call_operand.vmem [shape: f32[4,108], index: 3, kind: input, shape index: {}]
  %s4 = inlined_call_operand.vmem [shape: f32[2,4,1024], index: 4, kind: output, shape index: {}]
  %s5 = sld [smem:[#allocation0]]
  $region49: #{resnet_block_forward.1} parent=0
    _
  %s7 = ssub.s32 1, %s5
  %s8 = scalar_select 0, %s7, %s5
  loop: start=0, step=1, limit=4
  $region2: #{resnet_block_forward.1} parent=0 // loop_pre_header
    _
  $region3: #{resnet_block_forward.1} parent=0 // loop_header
    %s10 = sphi 0, %s14
    %p11 = scmp.ge.s32.totalorder %s10, 4
    %s18 = sphi 0, %s18
    %s20 = sphi 0, %s18
    %s21 = sphi 0, %s20
    %s35 = sphi 0, %s21
    %s41 = sphi 0, %s43
    %s44 = sphi 0, %s41
    %s45 = sphi 0, %s44
    %s61 = sphi 0, %s45
    %s65 = sphi 0, %s65
    %s67 = sphi 0, %s65
    %s68 = sphi 0, %s67
    %s82 = sphi 0, %s68
    %s86 = sphi 0, %s86
    %s88 = sphi 0, %s86
    %s89 = sphi 0, %s88
    %s103 = sphi 0, %s89
    %s109 = sphi 0, %s111
    %s112 = sphi 0, %s109
    %s113 = sphi 0, %s112
    %s129 = sphi 0, %s113
  $region4: #{resnet_block_forward.1} parent=0 // loop_header_branch
    %13 = sbr.rel (%p11) target = $region8
  $region5: #{resnet_block_forward.1} parent=0 // loop_body
    %s15 = ssub.s32 %s10, 1
    %s16 = ssub.s32 %s10, 2
    %s17 = sadd.s32 %s10, 1
    %s19 = sadd.s32 %s18, 1
    %p22 = scmp.eq.s32.totalorder %s10, 1
    %p23 = scmp.ne.s32.totalorder %s18, %s20
    %p24 = scmp.eq.s32.totalorder %s10, 0
    %p25 = por %p23, %p24
    %p26 = scmp.ne.s32.totalorder %s18, %s20
    %p27 = scmp.eq.s32.totalorder %s15, 1
    %p28 = por %p26, %p27
    %p29 = scmp.ne.s32.totalorder %s20, %s21
    %p30 = scmp.eq.s32.totalorder %s15, 0
    %p31 = por %p29, %p30
    %p32 = scmp.ne.s32.totalorder %s20, %s21
    %p33 = scmp.eq.s32.totalorder %s16, 1
    %p34 = por %p32, %p33
    %p36 = scmp.ne.s32.totalorder %s21, %s35
    %p37 = scmp.eq.s32.totalorder %s16, 0
    %p38 = por %p36, %p37
    %s39 = ssub.s32 %s10, %s17
    %p40 = scmp.eq.s32.totalorder %s39, 0
    %s42 = sadd.s32 %s41, 1
    %s43 = scalar_select %p40, %s41, %s42
    %p46 = pneg %p40
    %p47 = scmp.eq.s32.totalorder %s10, 1
    %p48 = por %p46, %p47
    %p49 = scmp.ne.s32.totalorder %s41, %s44
    %p50 = scmp.eq.s32.totalorder %s10, 0
    %p51 = por %p49, %p50
    %p52 = scmp.ne.s32.totalorder %s41, %s44
    %p53 = scmp.eq.s32.totalorder %s15, 1
    %p54 = por %p52, %p53
    %p55 = scmp.ne.s32.totalorder %s44, %s45
    %p56 = scmp.eq.s32.totalorder %s15, 0
    %p57 = por %p55, %p56
    %p58 = scmp.ne.s32.totalorder %s44, %s45
    %p59 = scmp.eq.s32.totalorder %s16, 1
    %p60 = por %p58, %p59
    %p62 = scmp.ne.s32.totalorder %s45, %s61
    %p63 = scmp.eq.s32.totalorder %s16, 0
    %p64 = por %p62, %p63
    %s66 = sadd.s32 %s65, 1
    %p69 = scmp.eq.s32.totalorder %s10, 1
    %p70 = scmp.ne.s32.totalorder %s65, %s67
    %p71 = scmp.eq.s32.totalorder %s10, 0
    %p72 = por %p70, %p71
    %p73 = scmp.ne.s32.totalorder %s65, %s67
    %p74 = scmp.eq.s32.totalorder %s15, 1
    %p75 = por %p73, %p74
    %p76 = scmp.ne.s32.totalorder %s67, %s68
    %p77 = scmp.eq.s32.totalorder %s15, 0
    %p78 = por %p76, %p77
    %p79 = scmp.ne.s32.totalorder %s67, %s68
    %p80 = scmp.eq.s32.totalorder %s16, 1
    %p81 = por %p79, %p80
    %p83 = scmp.ne.s32.totalorder %s68, %s82
    %p84 = scmp.eq.s32.totalorder %s16, 0
    %p85 = por %p83, %p84
    %s87 = sadd.s32 %s86, 1
    %p90 = scmp.eq.s32.totalorder %s10, 1
    %p91 = scmp.ne.s32.totalorder %s86, %s88
    %p92 = scmp.eq.s32.totalorder %s10, 0
    %p93 = por %p91, %p92
    %p94 = scmp.ne.s32.totalorder %s86, %s88
    %p95 = scmp.eq.s32.totalorder %s15, 1
    %p96 = por %p94, %p95
    %p97 = scmp.ne.s32.totalorder %s88, %s89
    %p98 = scmp.eq.s32.totalorder %s15, 0
    %p99 = por %p97, %p98
    %p100 = scmp.ne.s32.totalorder %s88, %s89
    %p101 = scmp.eq.s32.totalorder %s16, 1
    %p102 = por %p100, %p101
    %p104 = scmp.ne.s32.totalorder %s89, %s103
    %p105 = scmp.eq.s32.totalorder %s16, 0
    %p106 = por %p104, %p105
    %s107 = ssub.s32 %s10, %s17
    %p108 = scmp.eq.s32.totalorder %s107, 0
    %s110 = sadd.s32 %s109, 1
    %s111 = scalar_select %p108, %s109, %s110
    %p114 = pneg %p108
    %p115 = scmp.eq.s32.totalorder %s10, 1
    %p116 = por %p114, %p115
    %p117 = scmp.ne.s32.totalorder %s109, %s112
    %p118 = scmp.eq.s32.totalorder %s10, 0
    %p119 = por %p117, %p118
    %p120 = scmp.ne.s32.totalorder %s109, %s112
    %p121 = scmp.eq.s32.totalorder %s15, 1
    %p122 = por %p120, %p121
    %p123 = scmp.ne.s32.totalorder %s112, %s113
    %p124 = scmp.eq.s32.totalorder %s15, 0
    %p125 = por %p123, %p124
    %p126 = scmp.ne.s32.totalorder %s112, %s113
    %p127 = scmp.eq.s32.totalorder %s16, 1
    %p128 = por %p126, %p127
    %p130 = scmp.ne.s32.totalorder %s113, %s129
    %p131 = scmp.eq.s32.totalorder %s16, 0
    %p132 = por %p130, %p131
    %p133 = scmp.le.s32.totalorder 1, %s10
    %p134 = scmp.lt.s32.totalorder %s10, 3
    %p135 = pnand %p133, %p134
    %p136 = pneg %p135
    // Predicated region
    $region9: #{resnet_block_forward.1} parent=5 // pred_check
      _
    $region10: #{resnet_block_forward.1} parent=5 // pred_check_branch
      %138 = sbr.rel (%p135) target = $region12
    $region11: #{resnet_block_forward.1} parent=5 // pred_region
      %s139 = ssub.s32 %s10, 1
      // Predicated region
      $region13: #{resnet_block_forward.1} parent=11 // pred_check
        %p140 = pneg %p31
      $region14: #{resnet_block_forward.1} parent=11 // pred_check_branch
        %142 = sbr.rel (%p140) target = $region16
      $region15: #{resnet_block_forward.1} parent=11 // pred_region
        _
      $region16: #{resnet_block_forward.1} parent=11 // pred_fallthru
        _
      // Predicated region
      $region17: #{resnet_block_forward.1} parent=11 // pred_check
        %p143 = pneg %p78
      $region18: #{resnet_block_forward.1} parent=11 // pred_check_branch
        %145 = sbr.rel (%p143) target = $region20
      $region19: #{resnet_block_forward.1} parent=11 // pred_region
        _
      $region20: #{resnet_block_forward.1} parent=11 // pred_fallthru
        _
      // Predicated region
      $region21: #{resnet_block_forward.1} parent=11 // pred_check
        %p146 = pneg %p99
      $region22: #{resnet_block_forward.1} parent=11 // pred_check_branch
        %148 = sbr.rel (%p146) target = $region24
      $region23: #{resnet_block_forward.1} parent=11 // pred_region
        _
      $region24: #{resnet_block_forward.1} parent=11 // pred_fallthru
        _
    $region12: #{resnet_block_forward.1} parent=5 // pred_fallthru
      _
    %p149 = scmp.lt.s32.totalorder %s10, 2
    // Predicated region
    $region25: #{resnet_block_forward.1} parent=5 // pred_check
      %p150 = pneg %p149
    $region26: #{resnet_block_forward.1} parent=5 // pred_check_branch
      %152 = sbr.rel (%p150) target = $region28
    $region27: #{resnet_block_forward.1} parent=5 // pred_region
      // Predicated region
      $region29: #{resnet_block_forward.1} parent=27 // pred_check
        %p153 = pneg %p51
      $region30: #{resnet_block_forward.1} parent=27 // pred_check_branch
        %155 = sbr.rel (%p153) target = $region32
      $region31: #{resnet_block_forward.1} parent=27 // pred_region
        %p156 = scmp.lt.s32.totalorder %s10, 1
        %s157 = scalar_select %p156, %s10, 1
        %s158 = smul.addr %s157, 8
        %s159 = smul.addr %s158, 4
        %s160 = scalar_lea.vmem %s1, %s159
      $region32: #{resnet_block_forward.1} parent=27 // pred_fallthru
        _
    $region28: #{resnet_block_forward.1} parent=5 // pred_fallthru
      _
    %p161 = scmp.le.s32.totalorder 1, %s10
    %p162 = scmp.lt.s32.totalorder %s10, 3
    %p163 = pnand %p161, %p162
    %p164 = pneg %p163
    // Predicated region
    $region33: #{resnet_block_forward.1} parent=5 // pred_check
      _
    $region34: #{resnet_block_forward.1} parent=5 // pred_check_branch
      %166 = sbr.rel (%p163) target = $region36
    $region35: #{resnet_block_forward.1} parent=5 // pred_region
      %s167 = ssub.s32 %s10, 1
      %p168 = pneg %p31
      %p169 = pneg %p28
      %p170 = scmp.lt.s32.totalorder %s15, 1
      %s171 = scalar_select %p170, %s15, 1
      %s172 = smul.addr %s171, 8
      %s173 = smul.addr %s172, 4
      %s174 = scalar_lea.vmem %s1, %s173
      %p175 = pneg %p57
      %p176 = pneg %p54
      %p177 = pneg %p78
      %p178 = pneg %p75
      %p179 = pneg %p99
      %p180 = pneg %p96
      %p181 = pneg %p125
      %p182 = pneg %p122
      %p183 = scmp.lt.s32.totalorder %s15, 1
      %s184 = scalar_select %p183, %s15, 1
      %s185 = smul.addr %s184, 8
      %s186 = smul.addr %s185, 4
      %s187 = scalar_lea.vmem %s4, %s186
      %p188 = scmp.lt.s32.totalorder %s15, 1
      %s189 = scalar_select %p188, %s15, 1
      %s190 = smul.addr %s189, 8
      %s191 = smul.addr %s190, 4
      %s192 = scalar_lea.vmem %s1, %s191
      %p193 = scmp.lt.s32.totalorder %s15, 1
      %s194 = scalar_select %p193, %s15, 1
      %s195 = smul.addr %s194, 8
      %s196 = smul.addr %s195, 4
      %s197 = scalar_lea.vmem %s4, %s196
      %v198 = vld [vmem:[%s192] sm:$0xff]
      %v199 = vld [vmem:[%s192 + $0x8] sm:$0xff]
      %v200 = vld [vmem:[%s192 + $0x10] sm:$0xff]
      %v201 = vld [vmem:[%s192 + $0x18] sm:$0xff]
      %v202 = vld [vmem:[%s0] sm:$0x77]
      %v203 = vld [vmem:[%s0 + $0x8] sm:$0x77]
      %v204 = vld [vmem:[%s0 + $0x10] sm:$0x77]
      %v205 = vld [vmem:[%s0 + $0x18] sm:$0x77]
      %vm206 = vcmp.ge.s32.totalorder %v202, 1
      %vm207 = vcmp.ge.s32.totalorder %v203, 1
      %vm208 = vcmp.ge.s32.totalorder %v204, 1
      %vm209 = vcmp.ge.s32.totalorder %v205, 1
      %vm210 = vcmp.le.s32.totalorder %v202, 8
      %vm211 = vcmp.le.s32.totalorder %v203, 8
      %vm212 = vcmp.le.s32.totalorder %v204, 8
      %vm213 = vcmp.le.s32.totalorder %v205, 8
      %vm214 = vmand %vm206, %vm210
      %vm215 = vmand %vm207, %vm211
      %vm216 = vmand %vm208, %vm212
      %vm217 = vmand %vm209, %vm213
      %v218 = vsel %vm206, 1, 0
      %v219 = vsel %vm207, 1, 0
      %v220 = vsel %vm208, 1, 0
      %v221 = vsel %vm209, 1, 0
      %v222 = vrot.slane %v218, 5
      %v223 = vrot.slane %v222, 4
      %v224 = vrot.slane %v219, 5
      %v225 = vrot.slane %v224, 4
      %v226 = vrot.slane %v220, 5
      %v227 = vrot.slane %v226, 4
      %v228 = vrot.slane %v221, 5
      %v229 = vrot.slane %v228, 4
      %vm230 = vcmp.ne.s32.totalorder %v223, 0
      %vm231 = vcmp.ne.s32.totalorder %v225, 0
      %vm232 = vcmp.ne.s32.totalorder %v227, 0
      %vm233 = vcmp.ne.s32.totalorder %v229, 0
      %vm234 = vmand %vm214, %vm230
      %vm235 = vmand %vm215, %vm231
      %vm236 = vmand %vm216, %vm232
      %vm237 = vmand %vm217, %vm233
      %v238 = vsel %vm210, 1, 0
      %v239 = vsel %vm211, 1, 0
      %v240 = vsel %vm212, 1, 0
      %v241 = vsel %vm213, 1, 0
      %v242 = vrot.slane %v238, 5
      %v243 = vrot.slane %v242, 4
      %v244 = vrot.slane %v239, 5
      %v245 = vrot.slane %v244, 4
      %v246 = vrot.slane %v240, 5
      %v247 = vrot.slane %v246, 4
      %v248 = vrot.slane %v241, 5
      %v249 = vrot.slane %v248, 4
      %vm250 = vcmp.ne.s32.totalorder %v243, 0
      %vm251 = vcmp.ne.s32.totalorder %v245, 0
      %vm252 = vcmp.ne.s32.totalorder %v247, 0
      %vm253 = vcmp.ne.s32.totalorder %v249, 0
      %vm254 = vmand %vm234, %vm250
      %vm255 = vmand %vm235, %vm251
      %vm256 = vmand %vm236, %vm252
      %vm257 = vmand %vm237, %vm253
      %v258 = vrot.slane %v218, 6
      %v259 = vrot.slane %v258, 4
      %v260 = vrot.slane %v219, 6
      %v261 = vrot.slane %v260, 4
      %v262 = vrot.slane %v220, 6
      %v263 = vrot.slane %v262, 4
      %v264 = vrot.slane %v221, 6
      %v265 = vrot.slane %v264, 4
      %vm266 = vcmp.ne.s32.totalorder %v259, 0
      %vm267 = vcmp.ne.s32.totalorder %v261, 0
      %vm268 = vcmp.ne.s32.totalorder %v263, 0
      %vm269 = vcmp.ne.s32.totalorder %v265, 0
      %vm270 = vmand %vm254, %vm266
      %vm271 = vmand %vm255, %vm267
      %vm272 = vmand %vm256, %vm268
      %vm273 = vmand %vm257, %vm269
      %v274 = vrot.slane %v238, 6
      %v275 = vrot.slane %v274, 4
      %v276 = vrot.slane %v239, 6
      %v277 = vrot.slane %v276, 4
      %v278 = vrot.slane %v240, 6
      %v279 = vrot.slane %v278, 4
      %v280 = vrot.slane %v241, 6
      %v281 = vrot.slane %v280, 4
      %vm282 = vcmp.ne.s32.totalorder %v275, 0
      %vm283 = vcmp.ne.s32.totalorder %v277, 0
      %vm284 = vcmp.ne.s32.totalorder %v279, 0
      %vm285 = vcmp.ne.s32.totalorder %v281, 0
      %vm286 = vmand %vm270, %vm282
      %vm287 = vmand %vm271, %vm283
      %vm288 = vmand %vm272, %vm284
      %vm289 = vmand %vm273, %vm285
      %v290 = vsel %vm286, 1.0, 0.0
      %v291 = vsel %vm287, 1.0, 0.0
      %v292 = vsel %vm288, 1.0, 0.0
      %v293 = vsel %vm289, 1.0, 0.0
      %v294 = vld [vmem:[%s2] sm:$0xf]
      %v296 = vcombine.high %v201, %v201
      %297 = vrot.lane.b32.xlu0 %v296, 111
      %v298 = vpop.permute.xlu0 %297
      %v303 = vcombine.high %v198, %v198
      %v304 = vcombine.high %v199, %v199
      %v305 = vcombine.high %v200, %v200
      %306 = vrot.lane.b32.xlu0 %v198, 111
      %v307 = vpop.permute.xlu0 %306
      %308 = vrot.lane.b32.xlu0 %v303, 111
      %v309 = vpop.permute.xlu0 %308
      %310 = vrot.lane.b32.xlu0 %v199, 111
      %v311 = vpop.permute.xlu0 %310
      %312 = vrot.lane.b32.xlu0 %v304, 111
      %v313 = vpop.permute.xlu0 %312
      %314 = vrot.lane.b32.xlu0 %v200, 111
      %v315 = vpop.permute.xlu0 %314
      %316 = vrot.lane.b32.xlu0 %v305, 111
      %v317 = vpop.permute.xlu0 %316
      %318 = vrot.lane.b32.xlu0 %v201, 111
      %v319 = vpop.permute.xlu0 %318
      %vm320 = vcmask 908288
      %v321 = vsel %vm320, %v307, %v309
      %v322 = vsel %vm320, %v309, %v311
      %v323 = vsel %vm320, %v311, %v313
      %v324 = vsel %vm320, %v313, %v315
      %v325 = vsel %vm320, %v315, %v317
      %v326 = vsel %vm320, %v317, %v319
      %v327 = vsel %vm320, %v319, %v298
      %v336 = vsel %vm320, %v298, %v307
      %337 = vrot.lane.b32.xlu0 %v296, 110
      %v338 = vpop.permute.xlu0 %337
      %340 = vrot.lane.b32.xlu0 %v198, 110
      %v341 = vpop.permute.xlu0 %340
      %342 = vrot.lane.b32.xlu0 %v303, 110
      %v343 = vpop.permute.xlu0 %342
      %344 = vrot.lane.b32.xlu0 %v199, 110
      %v345 = vpop.permute.xlu0 %344
      %346 = vrot.lane.b32.xlu0 %v304, 110
      %v347 = vpop.permute.xlu0 %346
      %348 = vrot.lane.b32.xlu0 %v200, 110
      %v349 = vpop.permute.xlu0 %348
      %350 = vrot.lane.b32.xlu0 %v305, 110
      %v351 = vpop.permute.xlu0 %350
      %352 = vrot.lane.b32.xlu0 %v201, 110
      %v353 = vpop.permute.xlu0 %352
      %vm354 = vcmask 900096
      %v355 = vsel %vm354, %v341, %v343
      %v356 = vsel %vm354, %v343, %v345
      %v357 = vsel %vm354, %v345, %v347
      %v358 = vsel %vm354, %v347, %v349
      %v359 = vsel %vm354, %v349, %v351
      %v360 = vsel %vm354, %v351, %v353
      %v361 = vsel %vm354, %v353, %v338
      %v363 = vsel %vm354, %v338, %v341
      %364 = vrot.lane.b32.xlu0 %v296, 109
      %v365 = vpop.permute.xlu0 %364
      %367 = vrot.lane.b32.xlu0 %v198, 109
      %v368 = vpop.permute.xlu0 %367
      %369 = vrot.lane.b32.xlu0 %v303, 109
      %v370 = vpop.permute.xlu0 %369
      %371 = vrot.lane.b32.xlu0 %v199, 109
      %v372 = vpop.permute.xlu0 %371
      %373 = vrot.lane.b32.xlu0 %v304, 109
      %v374 = vpop.permute.xlu0 %373
      %375 = vrot.lane.b32.xlu0 %v200, 109
      %v376 = vpop.permute.xlu0 %375
      %377 = vrot.lane.b32.xlu0 %v305, 109
      %v378 = vpop.permute.xlu0 %377
      %379 = vrot.lane.b32.xlu0 %v201, 109
      %v380 = vpop.permute.xlu0 %379
      %vm381 = vcmask 891904
      %v382 = vsel %vm381, %v368, %v370
      %v383 = vsel %vm381, %v370, %v372
      %v384 = vsel %vm381, %v372, %v374
      %v385 = vsel %vm381, %v374, %v376
      %v386 = vsel %vm381, %v376, %v378
      %v387 = vsel %vm381, %v378, %v380
      %v388 = vsel %vm381, %v380, %v365
      %v397 = vsel %vm381, %v365, %v368
      %398 = vrot.lane.b32.xlu0 %v296, 101
      %v399 = vpop.permute.xlu0 %398
      %401 = vrot.lane.b32.xlu0 %v198, 101
      %v402 = vpop.permute.xlu0 %401
      %403 = vrot.lane.b32.xlu0 %v303, 101
      %v404 = vpop.permute.xlu0 %403
      %405 = vrot.lane.b32.xlu0 %v199, 101
      %v406 = vpop.permute.xlu0 %405
      %407 = vrot.lane.b32.xlu0 %v304, 101
      %v408 = vpop.permute.xlu0 %407
      %409 = vrot.lane.b32.xlu0 %v200, 101
      %v410 = vpop.permute.xlu0 %409
      %411 = vrot.lane.b32.xlu0 %v305, 101
      %v412 = vpop.permute.xlu0 %411
      %413 = vrot.lane.b32.xlu0 %v201, 101
      %v414 = vpop.permute.xlu0 %413
      %vm415 = vcmask 826368
      %v416 = vsel %vm415, %v402, %v404
      %v417 = vsel %vm415, %v404, %v406
      %v418 = vsel %vm415, %v406, %v408
      %v419 = vsel %vm415, %v408, %v410
      %v420 = vsel %vm415, %v410, %v412
      %v421 = vsel %vm415, %v412, %v414
      %v422 = vsel %vm415, %v414, %v399
      %v424 = vsel %vm415, %v399, %v402
      %425 = vrot.lane.b32.xlu0 %v296, 100
      %v426 = vpop.permute.xlu0 %425
      %428 = vrot.lane.b32.xlu0 %v198, 100
      %v429 = vpop.permute.xlu0 %428
      %430 = vrot.lane.b32.xlu0 %v303, 100
      %v431 = vpop.permute.xlu0 %430
      %432 = vrot.lane.b32.xlu0 %v199, 100
      %v433 = vpop.permute.xlu0 %432
      %434 = vrot.lane.b32.xlu0 %v304, 100
      %v435 = vpop.permute.xlu0 %434
      %436 = vrot.lane.b32.xlu0 %v200, 100
      %v437 = vpop.permute.xlu0 %436
      %438 = vrot.lane.b32.xlu0 %v305, 100
      %v439 = vpop.permute.xlu0 %438
      %440 = vrot.lane.b32.xlu0 %v201, 100
      %v441 = vpop.permute.xlu0 %440
      %vm442 = vcmask 818176
      %v443 = vsel %vm442, %v429, %v431
      %v444 = vsel %vm442, %v431, %v433
      %v445 = vsel %vm442, %v433, %v435
      %v446 = vsel %vm442, %v435, %v437
      %v447 = vsel %vm442, %v437, %v439
      %v448 = vsel %vm442, %v439, %v441
      %v449 = vsel %vm442, %v441, %v426
      %v458 = vsel %vm442, %v426, %v429
      %459 = vrot.lane.b32.xlu0 %v296, 99
      %v460 = vpop.permute.xlu0 %459
      %462 = vrot.lane.b32.xlu0 %v198, 99
      %v463 = vpop.permute.xlu0 %462
      %464 = vrot.lane.b32.xlu0 %v303, 99
      %v465 = vpop.permute.xlu0 %464
      %466 = vrot.lane.b32.xlu0 %v199, 99
      %v467 = vpop.permute.xlu0 %466
      %468 = vrot.lane.b32.xlu0 %v304, 99
      %v469 = vpop.permute.xlu0 %468
      %470 = vrot.lane.b32.xlu0 %v200, 99
      %v471 = vpop.permute.xlu0 %470
      %472 = vrot.lane.b32.xlu0 %v305, 99
      %v473 = vpop.permute.xlu0 %472
      %474 = vrot.lane.b32.xlu0 %v201, 99
      %v475 = vpop.permute.xlu0 %474
      %vm476 = vcmask 809984
      %v477 = vsel %vm476, %v463, %v465
      %v478 = vsel %vm476, %v465, %v467
      %v479 = vsel %vm476, %v467, %v469
      %v480 = vsel %vm476, %v469, %v471
      %v481 = vsel %vm476, %v471, %v473
      %v482 = vsel %vm476, %v473, %v475
      %v483 = vsel %vm476, %v475, %v460
      %v485 = vsel %vm476, %v460, %v463
      %486 = vrot.lane.b32.xlu0 %v296, 91
      %v487 = vpop.permute.xlu0 %486
      %489 = vrot.lane.b32.xlu0 %v198, 91
      %v490 = vpop.permute.xlu0 %489
      %491 = vrot.lane.b32.xlu0 %v303, 91
      %v492 = vpop.permute.xlu0 %491
      %493 = vrot.lane.b32.xlu0 %v199, 91
      %v494 = vpop.permute.xlu0 %493
      %495 = vrot.lane.b32.xlu0 %v304, 91
      %v496 = vpop.permute.xlu0 %495
      %497 = vrot.lane.b32.xlu0 %v200, 91
      %v498 = vpop.permute.xlu0 %497
      %499 = vrot.lane.b32.xlu0 %v305, 91
      %v500 = vpop.permute.xlu0 %499
      %501 = vrot.lane.b32.xlu0 %v201, 91
      %v502 = vpop.permute.xlu0 %501
      %vm503 = vcmask 744448
      %v504 = vsel %vm503, %v490, %v492
      %v505 = vsel %vm503, %v492, %v494
      %v506 = vsel %vm503, %v494, %v496
      %v507 = vsel %vm503, %v496, %v498
      %v508 = vsel %vm503, %v498, %v500
      %v509 = vsel %vm503, %v500, %v502
      %v510 = vsel %vm503, %v502, %v487
      %v519 = vsel %vm503, %v487, %v490
      %520 = vrot.lane.b32.xlu0 %v296, 90
      %v521 = vpop.permute.xlu0 %520
      %523 = vrot.lane.b32.xlu0 %v198, 90
      %v524 = vpop.permute.xlu0 %523
      %525 = vrot.lane.b32.xlu0 %v303, 90
      %v526 = vpop.permute.xlu0 %525
      %527 = vrot.lane.b32.xlu0 %v199, 90
      %v528 = vpop.permute.xlu0 %527
      %529 = vrot.lane.b32.xlu0 %v304, 90
      %v530 = vpop.permute.xlu0 %529
      %531 = vrot.lane.b32.xlu0 %v200, 90
      %v532 = vpop.permute.xlu0 %531
      %533 = vrot.lane.b32.xlu0 %v305, 90
      %v534 = vpop.permute.xlu0 %533
      %535 = vrot.lane.b32.xlu0 %v201, 90
      %v536 = vpop.permute.xlu0 %535
      %vm537 = vcmask 736256
      %v538 = vsel %vm537, %v524, %v526
      %v539 = vsel %vm537, %v526, %v528
      %v540 = vsel %vm537, %v528, %v530
      %v541 = vsel %vm537, %v530, %v532
      %v542 = vsel %vm537, %v532, %v534
      %v543 = vsel %vm537, %v534, %v536
      %v544 = vsel %vm537, %v536, %v521
      %v546 = vsel %vm537, %v521, %v524
      %547 = vrot.lane.b32.xlu0 %v296, 89
      %v548 = vpop.permute.xlu0 %547
      %550 = vrot.lane.b32.xlu0 %v198, 89
      %v551 = vpop.permute.xlu0 %550
      %552 = vrot.lane.b32.xlu0 %v303, 89
      %v553 = vpop.permute.xlu0 %552
      %554 = vrot.lane.b32.xlu0 %v199, 89
      %v555 = vpop.permute.xlu0 %554
      %556 = vrot.lane.b32.xlu0 %v304, 89
      %v557 = vpop.permute.xlu0 %556
      %558 = vrot.lane.b32.xlu0 %v200, 89
      %v559 = vpop.permute.xlu0 %558
      %560 = vrot.lane.b32.xlu0 %v305, 89
      %v561 = vpop.permute.xlu0 %560
      %562 = vrot.lane.b32.xlu0 %v201, 89
      %v563 = vpop.permute.xlu0 %562
      %vm564 = vcmask 728064
      %v565 = vsel %vm564, %v551, %v553
      %v566 = vsel %vm564, %v553, %v555
      %v567 = vsel %vm564, %v555, %v557
      %v568 = vsel %vm564, %v557, %v559
      %v569 = vsel %vm564, %v559, %v561
      %v570 = vsel %vm564, %v561, %v563
      %v571 = vsel %vm564, %v563, %v548
      %v580 = vsel %vm564, %v548, %v551
      %581 = vrot.lane.b32.xlu0 %v296, 11
      %v582 = vpop.permute.xlu0 %581
      %584 = vrot.lane.b32.xlu0 %v198, 11
      %v585 = vpop.permute.xlu0 %584
      %586 = vrot.lane.b32.xlu0 %v303, 11
      %v587 = vpop.permute.xlu0 %586
      %588 = vrot.lane.b32.xlu0 %v199, 11
      %v589 = vpop.permute.xlu0 %588
      %590 = vrot.lane.b32.xlu0 %v304, 11
      %v591 = vpop.permute.xlu0 %590
      %592 = vrot.lane.b32.xlu0 %v200, 11
      %v593 = vpop.permute.xlu0 %592
      %594 = vrot.lane.b32.xlu0 %v305, 11
      %v595 = vpop.permute.xlu0 %594
      %596 = vrot.lane.b32.xlu0 %v201, 11
      %v597 = vpop.permute.xlu0 %596
      %vm598 = vcmask 89088
      %v599 = vsel %vm598, %v585, %v587
      %v600 = vsel %vm598, %v587, %v589
      %v601 = vsel %vm598, %v589, %v591
      %v602 = vsel %vm598, %v591, %v593
      %v603 = vsel %vm598, %v593, %v595
      %v604 = vsel %vm598, %v595, %v597
      %v605 = vsel %vm598, %v597, %v582
      %v607 = vsel %vm598, %v582, %v585
      %608 = vrot.lane.b32.xlu0 %v296, 10
      %v609 = vpop.permute.xlu0 %608
      %611 = vrot.lane.b32.xlu0 %v198, 10
      %v612 = vpop.permute.xlu0 %611
      %613 = vrot.lane.b32.xlu0 %v303, 10
      %v614 = vpop.permute.xlu0 %613
      %615 = vrot.lane.b32.xlu0 %v199, 10
      %v616 = vpop.permute.xlu0 %615
      %617 = vrot.lane.b32.xlu0 %v304, 10
      %v618 = vpop.permute.xlu0 %617
      %619 = vrot.lane.b32.xlu0 %v200, 10
      %v620 = vpop.permute.xlu0 %619
      %621 = vrot.lane.b32.xlu0 %v305, 10
      %v622 = vpop.permute.xlu0 %621
      %623 = vrot.lane.b32.xlu0 %v201, 10
      %v624 = vpop.permute.xlu0 %623
      %vm625 = vcmask 80896
      %v626 = vsel %vm625, %v612, %v614
      %v627 = vsel %vm625, %v614, %v616
      %v628 = vsel %vm625, %v616, %v618
      %v629 = vsel %vm625, %v618, %v620
      %v630 = vsel %vm625, %v620, %v622
      %v631 = vsel %vm625, %v622, %v624
      %v632 = vsel %vm625, %v624, %v609
      %v641 = vsel %vm625, %v609, %v612
      %642 = vrot.lane.b32.xlu0 %v296, 9
      %v643 = vpop.permute.xlu0 %642
      %645 = vrot.lane.b32.xlu0 %v198, 9
      %v646 = vpop.permute.xlu0 %645
      %647 = vrot.lane.b32.xlu0 %v303, 9
      %v648 = vpop.permute.xlu0 %647
      %649 = vrot.lane.b32.xlu0 %v199, 9
      %v650 = vpop.permute.xlu0 %649
      %651 = vrot.lane.b32.xlu0 %v304, 9
      %v652 = vpop.permute.xlu0 %651
      %653 = vrot.lane.b32.xlu0 %v200, 9
      %v654 = vpop.permute.xlu0 %653
      %655 = vrot.lane.b32.xlu0 %v305, 9
      %v656 = vpop.permute.xlu0 %655
      %657 = vrot.lane.b32.xlu0 %v201, 9
      %v658 = vpop.permute.xlu0 %657
      %vm659 = vcmask 72704
      %v660 = vsel %vm659, %v646, %v648
      %v661 = vsel %vm659, %v648, %v650
      %v662 = vsel %vm659, %v650, %v652
      %v663 = vsel %vm659, %v652, %v654
      %v664 = vsel %vm659, %v654, %v656
      %v665 = vsel %vm659, %v656, %v658
      %v666 = vsel %vm659, %v658, %v643
      %v668 = vsel %vm659, %v643, %v646
      %669 = vrot.lane.b32.xlu0 %v296, 1
      %v670 = vpop.permute.xlu0 %669
      %672 = vrot.lane.b32.xlu0 %v198, 1
      %v673 = vpop.permute.xlu0 %672
      %674 = vrot.lane.b32.xlu0 %v303, 1
      %v675 = vpop.permute.xlu0 %674
      %676 = vrot.lane.b32.xlu0 %v199, 1
      %v677 = vpop.permute.xlu0 %676
      %678 = vrot.lane.b32.xlu0 %v304, 1
      %v679 = vpop.permute.xlu0 %678
      %680 = vrot.lane.b32.xlu0 %v200, 1
      %v681 = vpop.permute.xlu0 %680
      %682 = vrot.lane.b32.xlu0 %v305, 1
      %v683 = vpop.permute.xlu0 %682
      %684 = vrot.lane.b32.xlu0 %v201, 1
      %v685 = vpop.permute.xlu0 %684
      %vm686 = vcmask 7168
      %v687 = vsel %vm686, %v673, %v675
      %v688 = vsel %vm686, %v675, %v677
      %v689 = vsel %vm686, %v677, %v679
      %v690 = vsel %vm686, %v679, %v681
      %v691 = vsel %vm686, %v681, %v683
      %v692 = vsel %vm686, %v683, %v685
      %v693 = vsel %vm686, %v685, %v670
      %v702 = vsel %vm686, %v670, %v673
      %703 = vrot.lane.b32.xlu0 %v198, 127
      %v704 = vpop.permute.xlu0 %703
      %705 = vrot.lane.b32.xlu0 %v303, 127
      %v706 = vpop.permute.xlu0 %705
      %707 = vrot.lane.b32.xlu0 %v199, 127
      %v708 = vpop.permute.xlu0 %707
      %709 = vrot.lane.b32.xlu0 %v304, 127
      %v710 = vpop.permute.xlu0 %709
      %711 = vrot.lane.b32.xlu0 %v200, 127
      %v712 = vpop.permute.xlu0 %711
      %713 = vrot.lane.b32.xlu0 %v305, 127
      %v714 = vpop.permute.xlu0 %713
      %715 = vrot.lane.b32.xlu0 %v201, 127
      %v716 = vpop.permute.xlu0 %715
      %717 = vrot.lane.b32.xlu0 %v296, 127
      %v718 = vpop.permute.xlu0 %717
      %vm719 = vcmask 1039360
      %v720 = vsel %vm719, %v704, %v706
      %v721 = vsel %vm719, %v706, %v708
      %v722 = vsel %vm719, %v708, %v710
      %v723 = vsel %vm719, %v710, %v712
      %v724 = vsel %vm719, %v712, %v714
      %v725 = vsel %vm719, %v714, %v716
      %v726 = vsel %vm719, %v716, %v718
      %v736 = vsel %vm719, %v718, %v704
      %737 = vrot.lane.b32.xlu0 %v198, 119
      %v738 = vpop.permute.xlu0 %737
      %739 = vrot.lane.b32.xlu0 %v303, 119
      %v740 = vpop.permute.xlu0 %739
      %741 = vrot.lane.b32.xlu0 %v199, 119
      %v742 = vpop.permute.xlu0 %741
      %743 = vrot.lane.b32.xlu0 %v304, 119
      %v744 = vpop.permute.xlu0 %743
      %745 = vrot.lane.b32.xlu0 %v200, 119
      %v746 = vpop.permute.xlu0 %745
      %747 = vrot.lane.b32.xlu0 %v305, 119
      %v748 = vpop.permute.xlu0 %747
      %749 = vrot.lane.b32.xlu0 %v201, 119
      %v750 = vpop.permute.xlu0 %749
      %751 = vrot.lane.b32.xlu0 %v296, 119
      %v752 = vpop.permute.xlu0 %751
      %vm753 = vcmask 973824
      %v754 = vsel %vm753, %v738, %v740
      %v755 = vsel %vm753, %v740, %v742
      %v756 = vsel %vm753, %v742, %v744
      %v757 = vsel %vm753, %v744, %v746
      %v758 = vsel %vm753, %v746, %v748
      %v759 = vsel %vm753, %v748, %v750
      %v760 = vsel %vm753, %v750, %v752
      %v763 = vsel %vm753, %v752, %v738
      %764 = vrot.lane.b32.xlu0 %v198, 118
      %v765 = vpop.permute.xlu0 %764
      %766 = vrot.lane.b32.xlu0 %v303, 118
      %v767 = vpop.permute.xlu0 %766
      %768 = vrot.lane.b32.xlu0 %v199, 118
      %v769 = vpop.permute.xlu0 %768
      %770 = vrot.lane.b32.xlu0 %v304, 118
      %v771 = vpop.permute.xlu0 %770
      %772 = vrot.lane.b32.xlu0 %v200, 118
      %v773 = vpop.permute.xlu0 %772
      %774 = vrot.lane.b32.xlu0 %v305, 118
      %v775 = vpop.permute.xlu0 %774
      %776 = vrot.lane.b32.xlu0 %v201, 118
      %v777 = vpop.permute.xlu0 %776
      %778 = vrot.lane.b32.xlu0 %v296, 118
      %v779 = vpop.permute.xlu0 %778
      %vm780 = vcmask 965632
      %v781 = vsel %vm780, %v765, %v767
      %v782 = vsel %vm780, %v767, %v769
      %v783 = vsel %vm780, %v769, %v771
      %v784 = vsel %vm780, %v771, %v773
      %v785 = vsel %vm780, %v773, %v775
      %v786 = vsel %vm780, %v775, %v777
      %v787 = vsel %vm780, %v777, %v779
      %v797 = vsel %vm780, %v779, %v765
      %798 = vrot.lane.b32.xlu0 %v198, 117
      %v799 = vpop.permute.xlu0 %798
      %800 = vrot.lane.b32.xlu0 %v303, 117
      %v801 = vpop.permute.xlu0 %800
      %802 = vrot.lane.b32.xlu0 %v199, 117
      %v803 = vpop.permute.xlu0 %802
      %804 = vrot.lane.b32.xlu0 %v304, 117
      %v805 = vpop.permute.xlu0 %804
      %806 = vrot.lane.b32.xlu0 %v200, 117
      %v807 = vpop.permute.xlu0 %806
      %808 = vrot.lane.b32.xlu0 %v305, 117
      %v809 = vpop.permute.xlu0 %808
      %810 = vrot.lane.b32.xlu0 %v201, 117
      %v811 = vpop.permute.xlu0 %810
      %812 = vrot.lane.b32.xlu0 %v296, 117
      %v813 = vpop.permute.xlu0 %812
      %vm814 = vcmask 957440
      %v815 = vsel %vm814, %v799, %v801
      %v816 = vsel %vm814, %v801, %v803
      %v817 = vsel %vm814, %v803, %v805
      %v818 = vsel %vm814, %v805, %v807
      %v819 = vsel %vm814, %v807, %v809
      %v820 = vsel %vm814, %v809, %v811
      %v821 = vsel %vm814, %v811, %v813
      %v824 = vsel %vm814, %v813, %v799
      %825 = vrot.lane.b32.xlu0 %v198, 39
      %v826 = vpop.permute.xlu0 %825
      %827 = vrot.lane.b32.xlu0 %v303, 39
      %v828 = vpop.permute.xlu0 %827
      %829 = vrot.lane.b32.xlu0 %v199, 39
      %v830 = vpop.permute.xlu0 %829
      %831 = vrot.lane.b32.xlu0 %v304, 39
      %v832 = vpop.permute.xlu0 %831
      %833 = vrot.lane.b32.xlu0 %v200, 39
      %v834 = vpop.permute.xlu0 %833
      %835 = vrot.lane.b32.xlu0 %v305, 39
      %v836 = vpop.permute.xlu0 %835
      %837 = vrot.lane.b32.xlu0 %v201, 39
      %v838 = vpop.permute.xlu0 %837
      %839 = vrot.lane.b32.xlu0 %v296, 39
      %v840 = vpop.permute.xlu0 %839
      %vm841 = vcmask 318464
      %v842 = vsel %vm841, %v826, %v828
      %v843 = vsel %vm841, %v828, %v830
      %v844 = vsel %vm841, %v830, %v832
      %v845 = vsel %vm841, %v832, %v834
      %v846 = vsel %vm841, %v834, %v836
      %v847 = vsel %vm841, %v836, %v838
      %v848 = vsel %vm841, %v838, %v840
      %v858 = vsel %vm841, %v840, %v826
      %859 = vrot.lane.b32.xlu0 %v198, 38
      %v860 = vpop.permute.xlu0 %859
      %861 = vrot.lane.b32.xlu0 %v303, 38
      %v862 = vpop.permute.xlu0 %861
      %863 = vrot.lane.b32.xlu0 %v199, 38
      %v864 = vpop.permute.xlu0 %863
      %865 = vrot.lane.b32.xlu0 %v304, 38
      %v866 = vpop.permute.xlu0 %865
      %867 = vrot.lane.b32.xlu0 %v200, 38
      %v868 = vpop.permute.xlu0 %867
      %869 = vrot.lane.b32.xlu0 %v305, 38
      %v870 = vpop.permute.xlu0 %869
      %871 = vrot.lane.b32.xlu0 %v201, 38
      %v872 = vpop.permute.xlu0 %871
      %873 = vrot.lane.b32.xlu0 %v296, 38
      %v874 = vpop.permute.xlu0 %873
      %vm875 = vcmask 310272
      %v876 = vsel %vm875, %v860, %v862
      %v877 = vsel %vm875, %v862, %v864
      %v878 = vsel %vm875, %v864, %v866
      %v879 = vsel %vm875, %v866, %v868
      %v880 = vsel %vm875, %v868, %v870
      %v881 = vsel %vm875, %v870, %v872
      %v882 = vsel %vm875, %v872, %v874
      %v885 = vsel %vm875, %v874, %v860
      %886 = vrot.lane.b32.xlu0 %v198, 37
      %v887 = vpop.permute.xlu0 %886
      %888 = vrot.lane.b32.xlu0 %v303, 37
      %v889 = vpop.permute.xlu0 %888
      %890 = vrot.lane.b32.xlu0 %v199, 37
      %v891 = vpop.permute.xlu0 %890
      %892 = vrot.lane.b32.xlu0 %v304, 37
      %v893 = vpop.permute.xlu0 %892
      %894 = vrot.lane.b32.xlu0 %v200, 37
      %v895 = vpop.permute.xlu0 %894
      %896 = vrot.lane.b32.xlu0 %v305, 37
      %v897 = vpop.permute.xlu0 %896
      %898 = vrot.lane.b32.xlu0 %v201, 37
      %v899 = vpop.permute.xlu0 %898
      %900 = vrot.lane.b32.xlu0 %v296, 37
      %v901 = vpop.permute.xlu0 %900
      %vm902 = vcmask 302080
      %v903 = vsel %vm902, %v887, %v889
      %v904 = vsel %vm902, %v889, %v891
      %v905 = vsel %vm902, %v891, %v893
      %v906 = vsel %vm902, %v893, %v895
      %v907 = vsel %vm902, %v895, %v897
      %v908 = vsel %vm902, %v897, %v899
      %v909 = vsel %vm902, %v899, %v901
      %v919 = vsel %vm902, %v901, %v887
      %920 = vrot.lane.b32.xlu0 %v198, 29
      %v921 = vpop.permute.xlu0 %920
      %922 = vrot.lane.b32.xlu0 %v303, 29
      %v923 = vpop.permute.xlu0 %922
      %924 = vrot.lane.b32.xlu0 %v199, 29
      %v925 = vpop.permute.xlu0 %924
      %926 = vrot.lane.b32.xlu0 %v304, 29
      %v927 = vpop.permute.xlu0 %926
      %928 = vrot.lane.b32.xlu0 %v200, 29
      %v929 = vpop.permute.xlu0 %928
      %930 = vrot.lane.b32.xlu0 %v305, 29
      %v931 = vpop.permute.xlu0 %930
      %932 = vrot.lane.b32.xlu0 %v201, 29
      %v933 = vpop.permute.xlu0 %932
      %934 = vrot.lane.b32.xlu0 %v296, 29
      %v935 = vpop.permute.xlu0 %934
      %vm936 = vcmask 236544
      %v937 = vsel %vm936, %v921, %v923
      %v938 = vsel %vm936, %v923, %v925
      %v939 = vsel %vm936, %v925, %v927
      %v940 = vsel %vm936, %v927, %v929
      %v941 = vsel %vm936, %v929, %v931
      %v942 = vsel %vm936, %v931, %v933
      %v943 = vsel %vm936, %v933, %v935
      %v946 = vsel %vm936, %v935, %v921
      %947 = vrot.lane.b32.xlu0 %v198, 28
      %v948 = vpop.permute.xlu0 %947
      %949 = vrot.lane.b32.xlu0 %v303, 28
      %v950 = vpop.permute.xlu0 %949
      %951 = vrot.lane.b32.xlu0 %v199, 28
      %v952 = vpop.permute.xlu0 %951
      %953 = vrot.lane.b32.xlu0 %v304, 28
      %v954 = vpop.permute.xlu0 %953
      %955 = vrot.lane.b32.xlu0 %v200, 28
      %v956 = vpop.permute.xlu0 %955
      %957 = vrot.lane.b32.xlu0 %v305, 28
      %v958 = vpop.permute.xlu0 %957
      %959 = vrot.lane.b32.xlu0 %v201, 28
      %v960 = vpop.permute.xlu0 %959
      %961 = vrot.lane.b32.xlu0 %v296, 28
      %v962 = vpop.permute.xlu0 %961
      %vm963 = vcmask 228352
      %v964 = vsel %vm963, %v948, %v950
      %v965 = vsel %vm963, %v950, %v952
      %v966 = vsel %vm963, %v952, %v954
      %v967 = vsel %vm963, %v954, %v956
      %v968 = vsel %vm963, %v956, %v958
      %v969 = vsel %vm963, %v958, %v960
      %v970 = vsel %vm963, %v960, %v962
      %v980 = vsel %vm963, %v962, %v948
      %981 = vrot.lane.b32.xlu0 %v198, 27
      %v982 = vpop.permute.xlu0 %981
      %983 = vrot.lane.b32.xlu0 %v303, 27
      %v984 = vpop.permute.xlu0 %983
      %985 = vrot.lane.b32.xlu0 %v199, 27
      %v986 = vpop.permute.xlu0 %985
      %987 = vrot.lane.b32.xlu0 %v304, 27
      %v988 = vpop.permute.xlu0 %987
      %989 = vrot.lane.b32.xlu0 %v200, 27
      %v990 = vpop.permute.xlu0 %989
      %991 = vrot.lane.b32.xlu0 %v305, 27
      %v992 = vpop.permute.xlu0 %991
      %993 = vrot.lane.b32.xlu0 %v201, 27
      %v994 = vpop.permute.xlu0 %993
      %995 = vrot.lane.b32.xlu0 %v296, 27
      %v996 = vpop.permute.xlu0 %995
      %vm997 = vcmask 220160
      %v998 = vsel %vm997, %v982, %v984
      %v999 = vsel %vm997, %v984, %v986
      %v1000 = vsel %vm997, %v986, %v988
      %v1001 = vsel %vm997, %v988, %v990
      %v1002 = vsel %vm997, %v990, %v992
      %v1003 = vsel %vm997, %v992, %v994
      %v1004 = vsel %vm997, %v994, %v996
      %v1007 = vsel %vm997, %v996, %v982
      %1008 = vrot.lane.b32.xlu0 %v198, 19
      %v1009 = vpop.permute.xlu0 %1008
      %1010 = vrot.lane.b32.xlu0 %v303, 19
      %v1011 = vpop.permute.xlu0 %1010
      %1012 = vrot.lane.b32.xlu0 %v199, 19
      %v1013 = vpop.permute.xlu0 %1012
      %1014 = vrot.lane.b32.xlu0 %v304, 19
      %v1015 = vpop.permute.xlu0 %1014
      %1016 = vrot.lane.b32.xlu0 %v200, 19
      %v1017 = vpop.permute.xlu0 %1016
      %1018 = vrot.lane.b32.xlu0 %v305, 19
      %v1019 = vpop.permute.xlu0 %1018
      %1020 = vrot.lane.b32.xlu0 %v201, 19
      %v1021 = vpop.permute.xlu0 %1020
      %1022 = vrot.lane.b32.xlu0 %v296, 19
      %v1023 = vpop.permute.xlu0 %1022
      %vm1024 = vcmask 154624
      %v1025 = vsel %vm1024, %v1009, %v1011
      %v1026 = vsel %vm1024, %v1011, %v1013
      %v1027 = vsel %vm1024, %v1013, %v1015
      %v1028 = vsel %vm1024, %v1015, %v1017
      %v1029 = vsel %vm1024, %v1017, %v1019
      %v1030 = vsel %vm1024, %v1019, %v1021
      %v1031 = vsel %vm1024, %v1021, %v1023
      %v1041 = vsel %vm1024, %v1023, %v1009
      %1042 = vrot.lane.b32.xlu0 %v198, 18
      %v1043 = vpop.permute.xlu0 %1042
      %1044 = vrot.lane.b32.xlu0 %v303, 18
      %v1045 = vpop.permute.xlu0 %1044
      %1046 = vrot.lane.b32.xlu0 %v199, 18
      %v1047 = vpop.permute.xlu0 %1046
      %1048 = vrot.lane.b32.xlu0 %v304, 18
      %v1049 = vpop.permute.xlu0 %1048
      %1050 = vrot.lane.b32.xlu0 %v200, 18
      %v1051 = vpop.permute.xlu0 %1050
      %1052 = vrot.lane.b32.xlu0 %v305, 18
      %v1053 = vpop.permute.xlu0 %1052
      %1054 = vrot.lane.b32.xlu0 %v201, 18
      %v1055 = vpop.permute.xlu0 %1054
      %1056 = vrot.lane.b32.xlu0 %v296, 18
      %v1057 = vpop.permute.xlu0 %1056
      %vm1058 = vcmask 146432
      %v1059 = vsel %vm1058, %v1043, %v1045
      %v1060 = vsel %vm1058, %v1045, %v1047
      %v1061 = vsel %vm1058, %v1047, %v1049
      %v1062 = vsel %vm1058, %v1049, %v1051
      %v1063 = vsel %vm1058, %v1051, %v1053
      %v1064 = vsel %vm1058, %v1053, %v1055
      %v1065 = vsel %vm1058, %v1055, %v1057
      %v1068 = vsel %vm1058, %v1057, %v1043
      %1069 = vrot.lane.b32.xlu0 %v198, 17
      %v1070 = vpop.permute.xlu0 %1069
      %1071 = vrot.lane.b32.xlu0 %v303, 17
      %v1072 = vpop.permute.xlu0 %1071
      %1073 = vrot.lane.b32.xlu0 %v199, 17
      %v1074 = vpop.permute.xlu0 %1073
      %1075 = vrot.lane.b32.xlu0 %v304, 17
      %v1076 = vpop.permute.xlu0 %1075
      %1077 = vrot.lane.b32.xlu0 %v200, 17
      %v1078 = vpop.permute.xlu0 %1077
      %1079 = vrot.lane.b32.xlu0 %v305, 17
      %v1080 = vpop.permute.xlu0 %1079
      %1081 = vrot.lane.b32.xlu0 %v201, 17
      %v1082 = vpop.permute.xlu0 %1081
      %1083 = vrot.lane.b32.xlu0 %v296, 17
      %v1084 = vpop.permute.xlu0 %1083
      %vm1085 = vcmask 138240
      %v1086 = vsel %vm1085, %v1070, %v1072
      %v1087 = vsel %vm1085, %v1072, %v1074
      %v1088 = vsel %vm1085, %v1074, %v1076
      %v1089 = vsel %vm1085, %v1076, %v1078
      %v1090 = vsel %vm1085, %v1078, %v1080
      %v1091 = vsel %vm1085, %v1080, %v1082
      %v1092 = vsel %vm1085, %v1082, %v1084
      %v1095 = vsel %vm1085, %v1084, %v1070
      %v1097 = vrot.slane %v363, 4
      %v1098 = vrot.slane %v355, 4
      %v1099 = vrot.slane %v356, 4
      %v1100 = vrot.slane %v357, 4
      %v1101 = vrot.slane %v358, 4
      %v1102 = vrot.slane %v359, 4
      %v1103 = vrot.slane %v360, 4
      %v1104 = vrot.slane %v361, 4
      %v1114 = vrot.slane %v424, 4
      %v1115 = vrot.slane %v416, 4
      %v1116 = vrot.slane %v417, 4
      %v1117 = vrot.slane %v418, 4
      %v1118 = vrot.slane %v419, 4
      %v1119 = vrot.slane %v420, 4
      %v1120 = vrot.slane %v421, 4
      %v1121 = vrot.slane %v422, 4
      %v1131 = vrot.slane %v485, 4
      %v1132 = vrot.slane %v477, 4
      %v1133 = vrot.slane %v478, 4
      %v1134 = vrot.slane %v479, 4
      %v1135 = vrot.slane %v480, 4
      %v1136 = vrot.slane %v481, 4
      %v1137 = vrot.slane %v482, 4
      %v1138 = vrot.slane %v483, 4
      %v1148 = vrot.slane %v546, 4
      %v1149 = vrot.slane %v538, 4
      %v1150 = vrot.slane %v539, 4
      %v1151 = vrot.slane %v540, 4
      %v1152 = vrot.slane %v541, 4
      %v1153 = vrot.slane %v542, 4
      %v1154 = vrot.slane %v543, 4
      %v1155 = vrot.slane %v544, 4
      %v1165 = vrot.slane %v607, 4
      %v1166 = vrot.slane %v599, 4
      %v1167 = vrot.slane %v600, 4
      %v1168 = vrot.slane %v601, 4
      %v1169 = vrot.slane %v602, 4
      %v1170 = vrot.slane %v603, 4
      %v1171 = vrot.slane %v604, 4
      %v1172 = vrot.slane %v605, 4
      %v1182 = vrot.slane %v668, 4
      %v1183 = vrot.slane %v660, 4
      %v1184 = vrot.slane %v661, 4
      %v1185 = vrot.slane %v662, 4
      %v1186 = vrot.slane %v663, 4
      %v1187 = vrot.slane %v664, 4
      %v1188 = vrot.slane %v665, 4
      %v1189 = vrot.slane %v666, 4
      %v1198 = vcombine.low %v198, %v198
      %v1199 = vcombine.low %v199, %v199
      %v1200 = vcombine.low %v200, %v200
      %v1201 = vcombine.low %v201, %v201
      %v1207 = vrot.slane %v754, 4
      %v1208 = vrot.slane %v755, 4
      %v1209 = vrot.slane %v756, 4
      %v1210 = vrot.slane %v757, 4
      %v1211 = vrot.slane %v758, 4
      %v1212 = vrot.slane %v759, 4
      %v1213 = vrot.slane %v760, 4
      %v1214 = vrot.slane %v763, 4
      %vm1223 = vcmask 1043456
      %v1224 = vsel %vm1223, %v336, %v1097
      %v1225 = vsel %vm1223, %v321, %v1098
      %v1226 = vsel %vm1223, %v322, %v1099
      %v1227 = vsel %vm1223, %v323, %v1100
      %v1228 = vsel %vm1223, %v324, %v1101
      %v1229 = vsel %vm1223, %v325, %v1102
      %v1230 = vsel %vm1223, %v326, %v1103
      %v1231 = vsel %vm1223, %v327, %v1104
      %v1232 = vsel %vm1223, %v397, %v1114
      %v1233 = vsel %vm1223, %v382, %v1115
      %v1234 = vsel %vm1223, %v383, %v1116
      %v1235 = vsel %vm1223, %v384, %v1117
      %v1236 = vsel %vm1223, %v385, %v1118
      %v1237 = vsel %vm1223, %v386, %v1119
      %v1238 = vsel %vm1223, %v387, %v1120
      %v1239 = vsel %vm1223, %v388, %v1121
      %v1240 = vsel %vm1223, %v458, %v1131
      %v1241 = vsel %vm1223, %v443, %v1132
      %v1242 = vsel %vm1223, %v444, %v1133
      %v1243 = vsel %vm1223, %v445, %v1134
      %v1244 = vsel %vm1223, %v446, %v1135
      %v1245 = vsel %vm1223, %v447, %v1136
      %v1246 = vsel %vm1223, %v448, %v1137
      %v1247 = vsel %vm1223, %v449, %v1138
      %v1248 = vsel %vm1223, %v519, %v1148
      %v1249 = vsel %vm1223, %v504, %v1149
      %v1250 = vsel %vm1223, %v505, %v1150
      %v1251 = vsel %vm1223, %v506, %v1151
      %v1252 = vsel %vm1223, %v507, %v1152
      %v1253 = vsel %vm1223, %v508, %v1153
      %v1254 = vsel %vm1223, %v509, %v1154
      %v1255 = vsel %vm1223, %v510, %v1155
      %v1256 = vsel %vm1223, %v580, %v1165
      %v1257 = vsel %vm1223, %v565, %v1166
      %v1258 = vsel %vm1223, %v566, %v1167
      %v1259 = vsel %vm1223, %v567, %v1168
      %v1260 = vsel %vm1223, %v568, %v1169
      %v1261 = vsel %vm1223, %v569, %v1170
      %v1262 = vsel %vm1223, %v570, %v1171
      %v1263 = vsel %vm1223, %v571, %v1172
      %v1264 = vsel %vm1223, %v641, %v1182
      %v1265 = vsel %vm1223, %v626, %v1183
      %v1266 = vsel %vm1223, %v627, %v1184
      %v1267 = vsel %vm1223, %v628, %v1185
      %v1268 = vsel %vm1223, %v629, %v1186
      %v1269 = vsel %vm1223, %v630, %v1187
      %v1270 = vsel %vm1223, %v631, %v1188
      %v1271 = vsel %vm1223, %v632, %v1189
      %v1272 = vsel %vm1223, %v702, %v1198
      %v1273 = vsel %vm1223, %v687, %v198
      %v1274 = vsel %vm1223, %v688, %v1199
      %v1275 = vsel %vm1223, %v689, %v199
      %v1276 = vsel %vm1223, %v690, %v1200
      %v1277 = vsel %vm1223, %v691, %v200
      %v1278 = vsel %vm1223, %v692, %v1201
      %v1279 = vsel %vm1223, %v693, %v201
      %v1280 = vsel %vm1223, %v720, %v1207
      %v1281 = vsel %vm1223, %v721, %v1208
      %v1282 = vsel %vm1223, %v722, %v1209
      %v1283 = vsel %vm1223, %v723, %v1210
      %v1284 = vsel %vm1223, %v724, %v1211
      %v1285 = vsel %vm1223, %v725, %v1212
      %v1286 = vsel %vm1223, %v726, %v1213
      %v1287 = vsel %vm1223, %v736, %v1214
      %v1289 = vrot.slane %v815, 4
      %v1290 = vrot.slane %v816, 4
      %v1291 = vrot.slane %v817, 4
      %v1292 = vrot.slane %v818, 4
      %v1293 = vrot.slane %v819, 4
      %v1294 = vrot.slane %v820, 4
      %v1295 = vrot.slane %v821, 4
      %v1296 = vrot.slane %v824, 4
      %v1306 = vrot.slane %v876, 4
      %v1307 = vrot.slane %v877, 4
      %v1308 = vrot.slane %v878, 4
      %v1309 = vrot.slane %v879, 4
      %v1310 = vrot.slane %v880, 4
      %v1311 = vrot.slane %v881, 4
      %v1312 = vrot.slane %v882, 4
      %v1313 = vrot.slane %v885, 4
      %v1323 = vrot.slane %v937, 4
      %v1324 = vrot.slane %v938, 4
      %v1325 = vrot.slane %v939, 4
      %v1326 = vrot.slane %v940, 4
      %v1327 = vrot.slane %v941, 4
      %v1328 = vrot.slane %v942, 4
      %v1329 = vrot.slane %v943, 4
      %v1330 = vrot.slane %v946, 4
      %v1340 = vrot.slane %v998, 4
      %v1341 = vrot.slane %v999, 4
      %v1342 = vrot.slane %v1000, 4
      %v1343 = vrot.slane %v1001, 4
      %v1344 = vrot.slane %v1002, 4
      %v1345 = vrot.slane %v1003, 4
      %v1346 = vrot.slane %v1004, 4
      %v1347 = vrot.slane %v1007, 4
      %v1357 = vrot.slane %v1059, 4
      %v1358 = vrot.slane %v1060, 4
      %v1359 = vrot.slane %v1061, 4
      %v1360 = vrot.slane %v1062, 4
      %v1361 = vrot.slane %v1063, 4
      %v1362 = vrot.slane %v1064, 4
      %v1363 = vrot.slane %v1065, 4
      %v1364 = vrot.slane %v1068, 4
      %v1373 = vsel %vm1223, %v781, %v1289
      %v1374 = vsel %vm1223, %v782, %v1290
      %v1375 = vsel %vm1223, %v783, %v1291
      %v1376 = vsel %vm1223, %v784, %v1292
      %v1377 = vsel %vm1223, %v785, %v1293
      %v1378 = vsel %vm1223, %v786, %v1294
      %v1379 = vsel %vm1223, %v787, %v1295
      %v1380 = vsel %vm1223, %v797, %v1296
      %v1381 = vsel %vm1223, %v842, %v1306
      %v1382 = vsel %vm1223, %v843, %v1307
      %v1383 = vsel %vm1223, %v844, %v1308
      %v1384 = vsel %vm1223, %v845, %v1309
      %v1385 = vsel %vm1223, %v846, %v1310
      %v1386 = vsel %vm1223, %v847, %v1311
      %v1387 = vsel %vm1223, %v848, %v1312
      %v1388 = vsel %vm1223, %v858, %v1313
      %v1389 = vsel %vm1223, %v903, %v1323
      %v1390 = vsel %vm1223, %v904, %v1324
      %v1391 = vsel %vm1223, %v905, %v1325
      %v1392 = vsel %vm1223, %v906, %v1326
      %v1393 = vsel %vm1223, %v907, %v1327
      %v1394 = vsel %vm1223, %v908, %v1328
      %v1395 = vsel %vm1223, %v909, %v1329
      %v1396 = vsel %vm1223, %v919, %v1330
      %v1397 = vsel %vm1223, %v964, %v1340
      %v1398 = vsel %vm1223, %v965, %v1341
      %v1399 = vsel %vm1223, %v966, %v1342
      %v1400 = vsel %vm1223, %v967, %v1343
      %v1401 = vsel %vm1223, %v968, %v1344
      %v1402 = vsel %vm1223, %v969, %v1345
      %v1403 = vsel %vm1223, %v970, %v1346
      %v1404 = vsel %vm1223, %v980, %v1347
      %v1405 = vsel %vm1223, %v1025, %v1357
      %v1406 = vsel %vm1223, %v1026, %v1358
      %v1407 = vsel %vm1223, %v1027, %v1359
      %v1408 = vsel %vm1223, %v1028, %v1360
      %v1409 = vsel %vm1223, %v1029, %v1361
      %v1410 = vsel %vm1223, %v1030, %v1362
      %v1411 = vsel %vm1223, %v1031, %v1363
      %v1412 = vsel %vm1223, %v1041, %v1364
      %vm1413 = vcmask 883712
      %v1415 = vsel %vm1413, %v294, 0
      %v1417 = vsel %vm1223, %v1086, 0
      %v1419 = vsel %vm1223, %v1087, 0
      %v1421 = vsel %vm1223, %v1088, 0
      %v1423 = vsel %vm1223, %v1089, 0
      %v1425 = vsel %vm1223, %v1090, 0
      %v1427 = vsel %vm1223, %v1091, 0
      %v1429 = vsel %vm1223, %v1092, 0
      %v1432 = vsel %vm1223, %v1095, 0
      %1434 = vmatprep.subr.mxu0 %v1225
      %1435 = vmatpush1.msra.mxu0 %v1224
      %1436 = vmatprep.subr.mxu0 %v1233
      %1437 = vmatpush1.msra.mxu0 %v1232
      %1438 = vmatprep.subr.mxu0 %v1241
      %1439 = vmatpush1.msra.mxu0 %v1240
      %1440 = vmatprep.subr.mxu0 %v1249
      %1441 = vmatpush1.msra.mxu0 %v1248
      %1442 = vmatprep.subr.mxu0 %v1257
      %1443 = vmatpush1.msra.mxu0 %v1256
      %1444 = vmatprep.subr.mxu0 %v1265
      %1445 = vmatpush1.msra.mxu0 %v1264
      %1446 = vmatprep.subr.mxu0 %v1273
      %1447 = vmatpush1.msra.mxu0 %v1272
      %1448 = vmatprep.subr.mxu0 %v1281
      %1449 = vmatpush1.msra.mxu0 %v1280
      %1450 = vmatprep.subr.mxu0 %v1374
      %1451 = vmatpush1.msra.mxu0 %v1373
      %1452 = vmatprep.subr.mxu0 %v1382
      %1453 = vmatpush1.msra.mxu0 %v1381
      %1454 = vmatprep.subr.mxu0 %v1390
      %1455 = vmatpush1.msra.mxu0 %v1389
      %1456 = vmatprep.subr.mxu0 %v1398
      %1457 = vmatpush1.msra.mxu0 %v1397
      %1458 = vmatprep.subr.mxu0 %v1406
      %1459 = vmatpush1.msra.mxu0 %v1405
      %1460 = vmatprep.subr.mxu0 %v1419
      %1461 = vmatpush1.msra.mxu0 %v1417
      %1462 = vmatprep.subr.mxu0 0.0
      %1463 = vmatpush1.msra.mxu0 0.0
      %1464 = vmatprep.subr.mxu0 0.0
      %1465 = vmatpush1.msra.mxu0 0.0
      %1466 = vmatprep.subr.mxu0 0.0
      %1467 = vmatpush1.msra.mxu0 0.0
      %1468 = vmatprep.subr.mxu0 0.0
      %1469 = vmatpush1.msra.mxu0 0.0
      %1470 = vmatprep.subr.mxu0 0.0
      %1471 = vmatpush1.msra.mxu0 0.0
      %1472 = vmatprep.subr.mxu0 0.0
      %1473 = vmatpush1.msra.mxu0 0.0
      %1474 = vmatprep.subr.mxu0 0.0
      %1475 = vmatpush1.msra.mxu0 0.0
      %1476 = vmatprep.subr.mxu0 0.0
      %1477 = vmatpush1.msra.mxu0 0.0
      %1478 = vmatprep.subr.mxu0 0.0
      %1479 = vmatpush1.msra.mxu0 0.0
      %1480 = vmatprep.subr.mxu0 0.0
      %1481 = vmatpush1.msra.mxu0 0.0
      %1482 = vmatprep.subr.mxu0 0.0
      %1483 = vmatpush1.msra.mxu0 0.0
      %1484 = vmatprep.subr.mxu0 0.0
      %1485 = vmatpush1.msra.mxu0 0.0
      %1486 = vmatprep.subr.mxu0 0.0
      %1487 = vmatpush1.msra.mxu0 0.0
      %1488 = vmatprep.subr.mxu0 0.0
      %1489 = vmatpush1.msra.mxu0 0.0
      %1490 = vmatprep.subr.mxu0 0.0
      %1491 = vmatpush1.msra.mxu0 0.0
      %1492 = vmatprep.subr.mxu0 0.0
      %1493 = vmatpush1.msra.mxu0 0.0
      %1494 = vmatprep.subr.mxu0 0.0
      %1495 = vmatpush1.msra.mxu0 0.0
      %1496 = vmatprep.subr.mxu0 0.0
      %1497 = vmatpush1.msra.mxu0 0.0
      %1498 = vmatprep.mubr.f32.mxu0 0.0
      %1499 = vmatmul.mubr.f32.gmra.mrb[0].mxu0 %v1415
      %v1500 = vpop.f32.mrb[0].mxu0
      %v1501 = vadd.f32 0.0, %v1500
      %v1502 = vpop.f32.mrb[0].mxu0
      %v1503 = vadd.f32 0.0, %v1502
      %1504 = vdwg.mxu0
      %1505 = vmatprep.subr.mxu0 %v1227
      %1506 = vmatpush1.msra.mxu0 %v1226
      %1507 = vmatprep.subr.mxu0 %v1235
      %1508 = vmatpush1.msra.mxu0 %v1234
      %1509 = vmatprep.subr.mxu0 %v1243
      %1510 = vmatpush1.msra.mxu0 %v1242
      %1511 = vmatprep.subr.mxu0 %v1251
      %1512 = vmatpush1.msra.mxu0 %v1250
      %1513 = vmatprep.subr.mxu0 %v1259
      %1514 = vmatpush1.msra.mxu0 %v1258
      %1515 = vmatprep.subr.mxu0 %v1267
      %1516 = vmatpush1.msra.mxu0 %v1266
      %1517 = vmatprep.subr.mxu0 %v1275
      %1518 = vmatpush1.msra.mxu0 %v1274
      %1519 = vmatprep.subr.mxu0 %v1283
      %1520 = vmatpush1.msra.mxu0 %v1282
      %1521 = vmatprep.subr.mxu0 %v1376
      %1522 = vmatpush1.msra.mxu0 %v1375
      %1523 = vmatprep.subr.mxu0 %v1384
      %1524 = vmatpush1.msra.mxu0 %v1383
      %1525 = vmatprep.subr.mxu0 %v1392
      %1526 = vmatpush1.msra.mxu0 %v1391
      %1527 = vmatprep.subr.mxu0 %v1400
      %1528 = vmatpush1.msra.mxu0 %v1399
      %1529 = vmatprep.subr.mxu0 %v1408
      %1530 = vmatpush1.msra.mxu0 %v1407
      %1531 = vmatprep.subr.mxu0 %v1423
      %1532 = vmatpush1.msra.mxu0 %v1421
      %1533 = vmatprep.subr.mxu0 0.0
      %1534 = vmatpush1.msra.mxu0 0.0
      %1535 = vmatprep.subr.mxu0 0.0
      %1536 = vmatpush1.msra.mxu0 0.0
      %1537 = vmatprep.subr.mxu0 0.0
      %1538 = vmatpush1.msra.mxu0 0.0
      %1539 = vmatprep.subr.mxu0 0.0
      %1540 = vmatpush1.msra.mxu0 0.0
      %1541 = vmatprep.subr.mxu0 0.0
      %1542 = vmatpush1.msra.mxu0 0.0
      %1543 = vmatprep.subr.mxu0 0.0
      %1544 = vmatpush1.msra.mxu0 0.0
      %1545 = vmatprep.subr.mxu0 0.0
      %1546 = vmatpush1.msra.mxu0 0.0
      %1547 = vmatprep.subr.mxu0 0.0
      %1548 = vmatpush1.msra.mxu0 0.0
      %1549 = vmatprep.subr.mxu0 0.0
      %1550 = vmatpush1.msra.mxu0 0.0
      %1551 = vmatprep.subr.mxu0 0.0
      %1552 = vmatpush1.msra.mxu0 0.0
      %1553 = vmatprep.subr.mxu0 0.0
      %1554 = vmatpush1.msra.mxu0 0.0
      %1555 = vmatprep.subr.mxu0 0.0
      %1556 = vmatpush1.msra.mxu0 0.0
      %1557 = vmatprep.subr.mxu0 0.0
      %1558 = vmatpush1.msra.mxu0 0.0
      %1559 = vmatprep.subr.mxu0 0.0
      %1560 = vmatpush1.msra.mxu0 0.0
      %1561 = vmatprep.subr.mxu0 0.0
      %1562 = vmatpush1.msra.mxu0 0.0
      %1563 = vmatprep.subr.mxu0 0.0
      %1564 = vmatpush1.msra.mxu0 0.0
      %1565 = vmatprep.subr.mxu0 0.0
      %1566 = vmatpush1.msra.mxu0 0.0
      %1567 = vmatprep.subr.mxu0 0.0
      %1568 = vmatpush1.msra.mxu0 0.0
      %1569 = vmatprep.mubr.f32.mxu0 0.0
      %1570 = vmatmul.mubr.f32.gmra.mrb[0].mxu0 %v1415
      %v1571 = vpop.f32.mrb[0].mxu0
      %v1572 = vadd.f32 0.0, %v1571
      %v1573 = vpop.f32.mrb[0].mxu0
      %v1574 = vadd.f32 0.0, %v1573
      %1575 = vdwg.mxu0
      %1576 = vmatprep.subr.mxu0 %v1229
      %1577 = vmatpush1.msra.mxu0 %v1228
      %1578 = vmatprep.subr.mxu0 %v1237
      %1579 = vmatpush1.msra.mxu0 %v1236
      %1580 = vmatprep.subr.mxu0 %v1245
      %1581 = vmatpush1.msra.mxu0 %v1244
      %1582 = vmatprep.subr.mxu0 %v1253
      %1583 = vmatpush1.msra.mxu0 %v1252
      %1584 = vmatprep.subr.mxu0 %v1261
      %1585 = vmatpush1.msra.mxu0 %v1260
      %1586 = vmatprep.subr.mxu0 %v1269
      %1587 = vmatpush1.msra.mxu0 %v1268
      %1588 = vmatprep.subr.mxu0 %v1277
      %1589 = vmatpush1.msra.mxu0 %v1276
      %1590 = vmatprep.subr.mxu0 %v1285
      %1591 = vmatpush1.msra.mxu0 %v1284
      %1592 = vmatprep.subr.mxu0 %v1378
      %1593 = vmatpush1.msra.mxu0 %v1377
      %1594 = vmatprep.subr.mxu0 %v1386
      %1595 = vmatpush1.msra.mxu0 %v1385
      %1596 = vmatprep.subr.mxu0 %v1394
      %1597 = vmatpush1.msra.mxu0 %v1393
      %1598 = vmatprep.subr.mxu0 %v1402
      %1599 = vmatpush1.msra.mxu0 %v1401
      %1600 = vmatprep.subr.mxu0 %v1410
      %1601 = vmatpush1.msra.mxu0 %v1409
      %1602 = vmatprep.subr.mxu0 %v1427
      %1603 = vmatpush1.msra.mxu0 %v1425
      %1604 = vmatprep.subr.mxu0 0.0
      %1605 = vmatpush1.msra.mxu0 0.0
      %1606 = vmatprep.subr.mxu0 0.0
      %1607 = vmatpush1.msra.mxu0 0.0
      %1608 = vmatprep.subr.mxu0 0.0
      %1609 = vmatpush1.msra.mxu0 0.0
      %1610 = vmatprep.subr.mxu0 0.0
      %1611 = vmatpush1.msra.mxu0 0.0
      %1612 = vmatprep.subr.mxu0 0.0
      %1613 = vmatpush1.msra.mxu0 0.0
      %1614 = vmatprep.subr.mxu0 0.0
      %1615 = vmatpush1.msra.mxu0 0.0
      %1616 = vmatprep.subr.mxu0 0.0
      %1617 = vmatpush1.msra.mxu0 0.0
      %1618 = vmatprep.subr.mxu0 0.0
      %1619 = vmatpush1.msra.mxu0 0.0
      %1620 = vmatprep.subr.mxu0 0.0
      %1621 = vmatpush1.msra.mxu0 0.0
      %1622 = vmatprep.subr.mxu0 0.0
      %1623 = vmatpush1.msra.mxu0 0.0
      %1624 = vmatprep.subr.mxu0 0.0
      %1625 = vmatpush1.msra.mxu0 0.0
      %1626 = vmatprep.subr.mxu0 0.0
      %1627 = vmatpush1.msra.mxu0 0.0
      %1628 = vmatprep.subr.mxu0 0.0
      %1629 = vmatpush1.msra.mxu0 0.0
      %1630 = vmatprep.subr.mxu0 0.0
      %1631 = vmatpush1.msra.mxu0 0.0
      %1632 = vmatprep.subr.mxu0 0.0
      %1633 = vmatpush1.msra.mxu0 0.0
      %1634 = vmatprep.subr.mxu0 0.0
      %1635 = vmatpush1.msra.mxu0 0.0
      %1636 = vmatprep.subr.mxu0 0.0
      %1637 = vmatpush1.msra.mxu0 0.0
      %1638 = vmatprep.subr.mxu0 0.0
      %1639 = vmatpush1.msra.mxu0 0.0
      %1640 = vmatprep.mubr.f32.mxu0 0.0
      %1641 = vmatmul.mubr.f32.gmra.mrb[0].mxu0 %v1415
      %v1642 = vpop.f32.mrb[0].mxu0
      %v1643 = vadd.f32 0.0, %v1642
      %v1644 = vpop.f32.mrb[0].mxu0
      %v1645 = vadd.f32 0.0, %v1644
      %1646 = vdwg.mxu0
      %1647 = vmatprep.subr.mxu0 %v1231
      %1648 = vmatpush1.msra.mxu0 %v1230
      %1649 = vmatprep.subr.mxu0 %v1239
      %1650 = vmatpush1.msra.mxu0 %v1238
      %1651 = vmatprep.subr.mxu0 %v1247
      %1652 = vmatpush1.msra.mxu0 %v1246
      %1653 = vmatprep.subr.mxu0 %v1255
      %1654 = vmatpush1.msra.mxu0 %v1254
      %1655 = vmatprep.subr.mxu0 %v1263
      %1656 = vmatpush1.msra.mxu0 %v1262
      %1657 = vmatprep.subr.mxu0 %v1271
      %1658 = vmatpush1.msra.mxu0 %v1270
      %1659 = vmatprep.subr.mxu0 %v1279
      %1660 = vmatpush1.msra.mxu0 %v1278
      %1661 = vmatprep.subr.mxu0 %v1287
      %1662 = vmatpush1.msra.mxu0 %v1286
      %1663 = vmatprep.subr.mxu0 %v1380
      %1664 = vmatpush1.msra.mxu0 %v1379
      %1665 = vmatprep.subr.mxu0 %v1388
      %1666 = vmatpush1.msra.mxu0 %v1387
      %1667 = vmatprep.subr.mxu0 %v1396
      %1668 = vmatpush1.msra.mxu0 %v1395
      %1669 = vmatprep.subr.mxu0 %v1404
      %1670 = vmatpush1.msra.mxu0 %v1403
      %1671 = vmatprep.subr.mxu0 %v1412
      %1672 = vmatpush1.msra.mxu0 %v1411
      %1673 = vmatprep.subr.mxu0 %v1432
      %1674 = vmatpush1.msra.mxu0 %v1429
      %1675 = vmatprep.subr.mxu0 0.0
      %1676 = vmatpush1.msra.mxu0 0.0
      %1677 = vmatprep.subr.mxu0 0.0
      %1678 = vmatpush1.msra.mxu0 0.0
      %1679 = vmatprep.subr.mxu0 0.0
      %1680 = vmatpush1.msra.mxu0 0.0
      %1681 = vmatprep.subr.mxu0 0.0
      %1682 = vmatpush1.msra.mxu0 0.0
      %1683 = vmatprep.subr.mxu0 0.0
      %1684 = vmatpush1.msra.mxu0 0.0
      %1685 = vmatprep.subr.mxu0 0.0
      %1686 = vmatpush1.msra.mxu0 0.0
      %1687 = vmatprep.subr.mxu0 0.0
      %1688 = vmatpush1.msra.mxu0 0.0
      %1689 = vmatprep.subr.mxu0 0.0
      %1690 = vmatpush1.msra.mxu0 0.0
      %1691 = vmatprep.subr.mxu0 0.0
      %1692 = vmatpush1.msra.mxu0 0.0
      %1693 = vmatprep.subr.mxu0 0.0
      %1694 = vmatpush1.msra.mxu0 0.0
      %1695 = vmatprep.subr.mxu0 0.0
      %1696 = vmatpush1.msra.mxu0 0.0
      %1697 = vmatprep.subr.mxu0 0.0
      %1698 = vmatpush1.msra.mxu0 0.0
      %1699 = vmatprep.subr.mxu0 0.0
      %1700 = vmatpush1.msra.mxu0 0.0
      %1701 = vmatprep.subr.mxu0 0.0
      %1702 = vmatpush1.msra.mxu0 0.0
      %1703 = vmatprep.subr.mxu0 0.0
      %1704 = vmatpush1.msra.mxu0 0.0
      %1705 = vmatprep.subr.mxu0 0.0
      %1706 = vmatpush1.msra.mxu0 0.0
      %1707 = vmatprep.subr.mxu0 0.0
      %1708 = vmatpush1.msra.mxu0 0.0
      %1709 = vmatprep.subr.mxu0 0.0
      %1710 = vmatpush1.msra.mxu0 0.0
      %1711 = vmatprep.mubr.f32.mxu0 0.0
      %1712 = vmatmul.mubr.f32.gmra.mrb[0].mxu0 %v1415
      %v1713 = vpop.f32.mrb[0].mxu0
      %v1714 = vadd.f32 0.0, %v1713
      %v1715 = vpop.f32.mrb[0].mxu0
      %v1716 = vadd.f32 0.0, %v1715
      %1717 = vdwg.mxu0
      %v1722 = vlaneseq
      %v1723 = vshrl.u32 %v1722, 7
      %v1724 = vsub.s32 0, %v1723
      %v1725 = vrot.slane %v290, %v1724
      %v1726 = vlaneseq
      %v1727 = vshrl.u32 %v1726, 7
      %v1728 = vsub.s32 4, %v1727
      %v1729 = vrot.slane %v290, %v1728
      %v1730 = vlaneseq
      %v1731 = vshrl.u32 %v1730, 7
      %v1732 = vsub.s32 0, %v1731
      %v1733 = vrot.slane %v291, %v1732
      %v1734 = vlaneseq
      %v1735 = vshrl.u32 %v1734, 7
      %v1736 = vsub.s32 4, %v1735
      %v1737 = vrot.slane %v291, %v1736
      %v1738 = vlaneseq
      %v1739 = vshrl.u32 %v1738, 7
      %v1740 = vsub.s32 0, %v1739
      %v1741 = vrot.slane %v292, %v1740
      %v1742 = vlaneseq
      %v1743 = vshrl.u32 %v1742, 7
      %v1744 = vsub.s32 4, %v1743
      %v1745 = vrot.slane %v292, %v1744
      %v1746 = vlaneseq
      %v1747 = vshrl.u32 %v1746, 7
      %v1748 = vsub.s32 0, %v1747
      %v1749 = vrot.slane %v293, %v1748
      %v1750 = vlaneseq
      %v1751 = vshrl.u32 %v1750, 7
      %v1752 = vsub.s32 4, %v1751
      %v1753 = vrot.slane %v293, %v1752
      %v1762 = vlaneseq
      %v1763 = vshrl.u32 %v1762, 7
      %v1764 = vsub.s32 0, %v1763
      %v1765 = vrot.slane %v1725, %v1764
      %v1766 = vlaneseq
      %v1767 = vshrl.u32 %v1766, 7
      %v1768 = vsub.s32 0, %v1767
      %v1769 = vrot.slane %v1729, %v1768
      %v1770 = vlaneseq
      %v1771 = vshrl.u32 %v1770, 7
      %v1772 = vsub.s32 0, %v1771
      %v1773 = vrot.slane %v1733, %v1772
      %v1774 = vlaneseq
      %v1775 = vshrl.u32 %v1774, 7
      %v1776 = vsub.s32 0, %v1775
      %v1777 = vrot.slane %v1737, %v1776
      %v1778 = vlaneseq
      %v1779 = vshrl.u32 %v1778, 7
      %v1780 = vsub.s32 0, %v1779
      %v1781 = vrot.slane %v1741, %v1780
      %v1782 = vlaneseq
      %v1783 = vshrl.u32 %v1782, 7
      %v1784 = vsub.s32 0, %v1783
      %v1785 = vrot.slane %v1745, %v1784
      %v1786 = vlaneseq
      %v1787 = vshrl.u32 %v1786, 7
      %v1788 = vsub.s32 0, %v1787
      %v1789 = vrot.slane %v1749, %v1788
      %v1790 = vlaneseq
      %v1791 = vshrl.u32 %v1790, 7
      %v1792 = vsub.s32 0, %v1791
      %v1793 = vrot.slane %v1753, %v1792
      %v1794 = vmul.f32 %v1501, %v1765
      %v1795 = vmul.f32 %v1503, %v1769
      %v1796 = vmul.f32 %v1572, %v1773
      %v1797 = vmul.f32 %v1574, %v1777
      %v1798 = vmul.f32 %v1643, %v1781
      %v1799 = vmul.f32 %v1645, %v1785
      %v1800 = vmul.f32 %v1714, %v1789
      %v1801 = vmul.f32 %v1716, %v1793
      %v1802 = vsel %vm1223, %v1794, 0.0
      %v1803 = vsel %vm1223, %v1795, 0.0
      %v1804 = vadd.f32 %v1802, %v1803
      %v1805 = vsel %vm1223, %v1796, 0.0
      %v1806 = vadd.f32 %v1804, %v1805
      %v1807 = vsel %vm1223, %v1797, 0.0
      %v1808 = vadd.f32 %v1806, %v1807
      %v1809 = vsel %vm1223, %v1798, 0.0
      %v1810 = vadd.f32 %v1808, %v1809
      %v1811 = vsel %vm1223, %v1799, 0.0
      %v1812 = vadd.f32 %v1810, %v1811
      %v1813 = vsel %vm1223, %v1800, 0.0
      %v1814 = vadd.f32 %v1812, %v1813
      %v1815 = vsel %vm1223, %v1801, 0.0
      %v1816 = vadd.f32 %v1814, %v1815
      %1817 = vadd.xlane.f32.xlu0 %v1816
      %v1818 = vpop.xlane.xlu0 %1817
      %v1819 = vmul.f32 %v1818, 0.001953125
      %v1820 = vsub.f32 %v1501, %v1819
      %v1821 = vsub.f32 %v1503, %v1819
      %v1822 = vsub.f32 %v1572, %v1819
      %v1823 = vsub.f32 %v1574, %v1819
      %v1824 = vsub.f32 %v1643, %v1819
      %v1825 = vsub.f32 %v1645, %v1819
      %v1826 = vsub.f32 %v1714, %v1819
      %v1827 = vsub.f32 %v1716, %v1819
      %v1828 = vmul.f32 %v1820, %v1820
      %v1829 = vmul.f32 %v1821, %v1821
      %v1830 = vmul.f32 %v1822, %v1822
      %v1831 = vmul.f32 %v1823, %v1823
      %v1832 = vmul.f32 %v1824, %v1824
      %v1833 = vmul.f32 %v1825, %v1825
      %v1834 = vmul.f32 %v1826, %v1826
      %v1835 = vmul.f32 %v1827, %v1827
      %v1836 = vmul.f32 %v1828, %v1765
      %v1837 = vmul.f32 %v1829, %v1769
      %v1838 = vmul.f32 %v1830, %v1773
      %v1839 = vmul.f32 %v1831, %v1777
      %v1840 = vmul.f32 %v1832, %v1781
      %v1841 = vmul.f32 %v1833, %v1785
      %v1842 = vmul.f32 %v1834, %v1789
      %v1843 = vmul.f32 %v1835, %v1793
      %v1844 = vsel %vm1223, %v1836, 0.0
      %v1845 = vsel %vm1223, %v1837, 0.0
      %v1846 = vadd.f32 %v1844, %v1845
      %v1847 = vsel %vm1223, %v1838, 0.0
      %v1848 = vadd.f32 %v1846, %v1847
      %v1849 = vsel %vm1223, %v1839, 0.0
      %v1850 = vadd.f32 %v1848, %v1849
      %v1851 = vsel %vm1223, %v1840, 0.0
      %v1852 = vadd.f32 %v1850, %v1851
      %v1853 = vsel %vm1223, %v1841, 0.0
      %v1854 = vadd.f32 %v1852, %v1853
      %v1855 = vsel %vm1223, %v1842, 0.0
      %v1856 = vadd.f32 %v1854, %v1855
      %v1857 = vsel %vm1223, %v1843, 0.0
      %v1858 = vadd.f32 %v1856, %v1857
      %1859 = vadd.xlane.f32.xlu0 %v1858
      %v1860 = vpop.xlane.xlu0 %1859
      %v1861 = vmul.f32 %v1860, 0.001953125
      %v1862 = vadd.f32 %v1861, 1e-05
      %v1863 = vrsqrt.pop %v1862
      %v1864 = vmul.f32 %v1820, %v1863
      %v1865 = vmul.f32 %v1821, %v1863
      %v1866 = vmul.f32 %v1822, %v1863
      %v1867 = vmul.f32 %v1823, %v1863
      %v1868 = vmul.f32 %v1824, %v1863
      %v1869 = vmul.f32 %v1825, %v1863
      %v1870 = vmul.f32 %v1826, %v1863
      %v1871 = vmul.f32 %v1827, %v1863
      %vm1872 = vcmp.gt.f32.partialorder %v1864, 0.0
      %vm1873 = vcmp.gt.f32.partialorder %v1865, 0.0
      %vm1874 = vcmp.gt.f32.partialorder %v1866, 0.0
      %vm1875 = vcmp.gt.f32.partialorder %v1867, 0.0
      %vm1876 = vcmp.gt.f32.partialorder %v1868, 0.0
      %vm1877 = vcmp.gt.f32.partialorder %v1869, 0.0
      %vm1878 = vcmp.gt.f32.partialorder %v1870, 0.0
      %vm1879 = vcmp.gt.f32.partialorder %v1871, 0.0
      %v1880 = vmul.f32 %v1864, 0.2
      %v1881 = vmul.f32 %v1865, 0.2
      %v1882 = vmul.f32 %v1866, 0.2
      %v1883 = vmul.f32 %v1867, 0.2
      %v1884 = vmul.f32 %v1868, 0.2
      %v1885 = vmul.f32 %v1869, 0.2
      %v1886 = vmul.f32 %v1870, 0.2
      %v1887 = vmul.f32 %v1871, 0.2
      %v1888 = vsel %vm1872, %v1864, %v1880
      %v1889 = vsel %vm1873, %v1865, %v1881
      %v1890 = vsel %vm1874, %v1866, %v1882
      %v1891 = vsel %vm1875, %v1867, %v1883
      %v1892 = vsel %vm1876, %v1868, %v1884
      %v1893 = vsel %vm1877, %v1869, %v1885
      %v1894 = vsel %vm1878, %v1870, %v1886
      %v1895 = vsel %vm1879, %v1871, %v1887
      %vm1896 = vcmp.eq.s32.totalorder %v202, 0
      %vm1897 = vcmp.eq.s32.totalorder %v203, 0
      %vm1898 = vcmp.eq.s32.totalorder %v204, 0
      %vm1899 = vcmp.eq.s32.totalorder %v205, 0
      %1908 = vrot.lane.b32.xlu0 %v1888, 127
      %v1909 = vpop.permute.xlu0 %1908
      %1910 = vrot.lane.b32.xlu0 %v1889, 127
      %v1911 = vpop.permute.xlu0 %1910
      %1912 = vrot.lane.b32.xlu0 %v1890, 127
      %v1913 = vpop.permute.xlu0 %1912
      %1914 = vrot.lane.b32.xlu0 %v1891, 127
      %v1915 = vpop.permute.xlu0 %1914
      %1916 = vrot.lane.b32.xlu0 %v1892, 127
      %v1917 = vpop.permute.xlu0 %1916
      %1918 = vrot.lane.b32.xlu0 %v1893, 127
      %v1919 = vpop.permute.xlu0 %1918
      %1920 = vrot.lane.b32.xlu0 %v1894, 127
      %v1921 = vpop.permute.xlu0 %1920
      %1922 = vrot.lane.b32.xlu0 %v1895, 127
      %v1923 = vpop.permute.xlu0 %1922
      %v1924 = vsel %vm719, %v1909, %v1911
      %v1925 = vsel %vm719, %v1911, %v1913
      %v1926 = vsel %vm719, %v1913, %v1915
      %v1927 = vsel %vm719, %v1915, %v1917
      %v1928 = vsel %vm719, %v1917, %v1919
      %v1929 = vsel %vm719, %v1919, %v1921
      %v1930 = vsel %vm719, %v1921, %v1923
      %v1940 = vsel %vm719, %v1923, %v1909
      %v1941 = vsel %vm1896, 1, 0
      %v1942 = vsel %vm1897, 1, 0
      %v1943 = vsel %vm1898, 1, 0
      %v1944 = vsel %vm1899, 1, 0
      %v1945 = vlaneseq
      %v1946 = vshrl.u32 %v1945, 7
      %v1947 = vsub.s32 2, %v1946
      %v1948 = vrot.slane %v1941, %v1947
      %v1949 = vlaneseq
      %v1950 = vshrl.u32 %v1949, 7
      %v1951 = vsub.s32 6, %v1950
      %v1952 = vrot.slane %v1941, %v1951
      %v1953 = vlaneseq
      %v1954 = vshrl.u32 %v1953, 7
      %v1955 = vsub.s32 2, %v1954
      %v1956 = vrot.slane %v1942, %v1955
      %v1957 = vlaneseq
      %v1958 = vshrl.u32 %v1957, 7
      %v1959 = vsub.s32 6, %v1958
      %v1960 = vrot.slane %v1942, %v1959
      %v1961 = vlaneseq
      %v1962 = vshrl.u32 %v1961, 7
      %v1963 = vsub.s32 2, %v1962
      %v1964 = vrot.slane %v1943, %v1963
      %v1965 = vlaneseq
      %v1966 = vshrl.u32 %v1965, 7
      %v1967 = vsub.s32 6, %v1966
      %v1968 = vrot.slane %v1943, %v1967
      %v1969 = vlaneseq
      %v1970 = vshrl.u32 %v1969, 7
      %v1971 = vsub.s32 2, %v1970
      %v1972 = vrot.slane %v1944, %v1971
      %v1973 = vlaneseq
      %v1974 = vshrl.u32 %v1973, 7
      %v1975 = vsub.s32 6, %v1974
      %v1976 = vrot.slane %v1944, %v1975
      %v1977 = vlaneseq
      %v1978 = vshrl.u32 %v1977, 7
      %v1979 = vsub.s32 2, %v1978
      %v1980 = vrot.slane %v1948, %v1979
      %v1981 = vlaneseq
      %v1982 = vshrl.u32 %v1981, 7
      %v1983 = vsub.s32 2, %v1982
      %v1984 = vrot.slane %v1952, %v1983
      %v1985 = vlaneseq
      %v1986 = vshrl.u32 %v1985, 7
      %v1987 = vsub.s32 2, %v1986
      %v1988 = vrot.slane %v1956, %v1987
      %v1989 = vlaneseq
      %v1990 = vshrl.u32 %v1989, 7
      %v1991 = vsub.s32 2, %v1990
      %v1992 = vrot.slane %v1960, %v1991
      %v1993 = vlaneseq
      %v1994 = vshrl.u32 %v1993, 7
      %v1995 = vsub.s32 2, %v1994
      %v1996 = vrot.slane %v1964, %v1995
      %v1997 = vlaneseq
      %v1998 = vshrl.u32 %v1997, 7
      %v1999 = vsub.s32 2, %v1998
      %v2000 = vrot.slane %v1968, %v1999
      %v2001 = vlaneseq
      %v2002 = vshrl.u32 %v2001, 7
      %v2003 = vsub.s32 2, %v2002
      %v2004 = vrot.slane %v1972, %v2003
      %v2005 = vlaneseq
      %v2006 = vshrl.u32 %v2005, 7
      %v2007 = vsub.s32 2, %v2006
      %v2008 = vrot.slane %v1976, %v2007
      %vm2009 = vcmp.eq.s32.totalorder %v1980, 1
      %vm2010 = vcmp.eq.s32.totalorder %v1984, 1
      %vm2011 = vcmp.eq.s32.totalorder %v1988, 1
      %vm2012 = vcmp.eq.s32.totalorder %v1992, 1
      %vm2013 = vcmp.eq.s32.totalorder %v1996, 1
      %vm2014 = vcmp.eq.s32.totalorder %v2000, 1
      %vm2015 = vcmp.eq.s32.totalorder %v2004, 1
      %vm2016 = vcmp.eq.s32.totalorder %v2008, 1
      %v2017 = vsel %vm2009, %v1924, %v1888
      %v2018 = vsel %vm2010, %v1925, %v1889
      %v2019 = vsel %vm2011, %v1926, %v1890
      %v2020 = vsel %vm2012, %v1927, %v1891
      %v2021 = vsel %vm2013, %v1928, %v1892
      %v2022 = vsel %vm2014, %v1929, %v1893
      %v2023 = vsel %vm2015, %v1930, %v1894
      %v2024 = vsel %vm2016, %v1940, %v1895
      %vm2025 = vcmp.eq.s32.totalorder %v202, 9
      %vm2026 = vcmp.eq.s32.totalorder %v203, 9
      %vm2027 = vcmp.eq.s32.totalorder %v204, 9
      %vm2028 = vcmp.eq.s32.totalorder %v205, 9
      %2030 = vrot.lane.b32.xlu0 %v2024, 1
      %v2031 = vpop.permute.xlu0 %2030
      %2040 = vrot.lane.b32.xlu0 %v2017, 1
      %v2041 = vpop.permute.xlu0 %2040
      %2042 = vrot.lane.b32.xlu0 %v2018, 1
      %v2043 = vpop.permute.xlu0 %2042
      %2044 = vrot.lane.b32.xlu0 %v2019, 1
      %v2045 = vpop.permute.xlu0 %2044
      %2046 = vrot.lane.b32.xlu0 %v2020, 1
      %v2047 = vpop.permute.xlu0 %2046
      %2048 = vrot.lane.b32.xlu0 %v2021, 1
      %v2049 = vpop.permute.xlu0 %2048
      %2050 = vrot.lane.b32.xlu0 %v2022, 1
      %v2051 = vpop.permute.xlu0 %2050
      %2052 = vrot.lane.b32.xlu0 %v2023, 1
      %v2053 = vpop.permute.xlu0 %2052
      %v2054 = vsel %vm686, %v2041, %v2043
      %v2055 = vsel %vm686, %v2043, %v2045
      %v2056 = vsel %vm686, %v2045, %v2047
      %v2057 = vsel %vm686, %v2047, %v2049
      %v2058 = vsel %vm686, %v2049, %v2051
      %v2059 = vsel %vm686, %v2051, %v2053
      %v2060 = vsel %vm686, %v2053, %v2031
      %v2069 = vsel %vm686, %v2031, %v2041
      %v2070 = vsel %vm2025, 1, 0
      %v2071 = vsel %vm2026, 1, 0
      %v2072 = vsel %vm2027, 1, 0
      %v2073 = vsel %vm2028, 1, 0
      %v2074 = vlaneseq
      %v2075 = vshrl.u32 %v2074, 7
      %v2076 = vsub.s32 2, %v2075
      %v2077 = vrot.slane %v2070, %v2076
      %v2078 = vlaneseq
      %v2079 = vshrl.u32 %v2078, 7
      %v2080 = vsub.s32 6, %v2079
      %v2081 = vrot.slane %v2070, %v2080
      %v2082 = vlaneseq
      %v2083 = vshrl.u32 %v2082, 7
      %v2084 = vsub.s32 2, %v2083
      %v2085 = vrot.slane %v2071, %v2084
      %v2086 = vlaneseq
      %v2087 = vshrl.u32 %v2086, 7
      %v2088 = vsub.s32 6, %v2087
      %v2089 = vrot.slane %v2071, %v2088
      %v2090 = vlaneseq
      %v2091 = vshrl.u32 %v2090, 7
      %v2092 = vsub.s32 2, %v2091
      %v2093 = vrot.slane %v2072, %v2092
      %v2094 = vlaneseq
      %v2095 = vshrl.u32 %v2094, 7
      %v2096 = vsub.s32 6, %v2095
      %v2097 = vrot.slane %v2072, %v2096
      %v2098 = vlaneseq
      %v2099 = vshrl.u32 %v2098, 7
      %v2100 = vsub.s32 2, %v2099
      %v2101 = vrot.slane %v2073, %v2100
      %v2102 = vlaneseq
      %v2103 = vshrl.u32 %v2102, 7
      %v2104 = vsub.s32 6, %v2103
      %v2105 = vrot.slane %v2073, %v2104
      %v2106 = vlaneseq
      %v2107 = vshrl.u32 %v2106, 7
      %v2108 = vsub.s32 2, %v2107
      %v2109 = vrot.slane %v2077, %v2108
      %v2110 = vlaneseq
      %v2111 = vshrl.u32 %v2110, 7
      %v2112 = vsub.s32 2, %v2111
      %v2113 = vrot.slane %v2081, %v2112
      %v2114 = vlaneseq
      %v2115 = vshrl.u32 %v2114, 7
      %v2116 = vsub.s32 2, %v2115
      %v2117 = vrot.slane %v2085, %v2116
      %v2118 = vlaneseq
      %v2119 = vshrl.u32 %v2118, 7
      %v2120 = vsub.s32 2, %v2119
      %v2121 = vrot.slane %v2089, %v2120
      %v2122 = vlaneseq
      %v2123 = vshrl.u32 %v2122, 7
      %v2124 = vsub.s32 2, %v2123
      %v2125 = vrot.slane %v2093, %v2124
      %v2126 = vlaneseq
      %v2127 = vshrl.u32 %v2126, 7
      %v2128 = vsub.s32 2, %v2127
      %v2129 = vrot.slane %v2097, %v2128
      %v2130 = vlaneseq
      %v2131 = vshrl.u32 %v2130, 7
      %v2132 = vsub.s32 2, %v2131
      %v2133 = vrot.slane %v2101, %v2132
      %v2134 = vlaneseq
      %v2135 = vshrl.u32 %v2134, 7
      %v2136 = vsub.s32 2, %v2135
      %v2137 = vrot.slane %v2105, %v2136
      %vm2138 = vcmp.eq.s32.totalorder %v2109, 1
      %vm2139 = vcmp.eq.s32.totalorder %v2113, 1
      %vm2140 = vcmp.eq.s32.totalorder %v2117, 1
      %vm2141 = vcmp.eq.s32.totalorder %v2121, 1
      %vm2142 = vcmp.eq.s32.totalorder %v2125, 1
      %vm2143 = vcmp.eq.s32.totalorder %v2129, 1
      %vm2144 = vcmp.eq.s32.totalorder %v2133, 1
      %vm2145 = vcmp.eq.s32.totalorder %v2137, 1
      %v2146 = vsel %vm2138, %v2069, %v2017
      %v2147 = vsel %vm2139, %v2054, %v2018
      %v2148 = vsel %vm2140, %v2055, %v2019
      %v2149 = vsel %vm2141, %v2056, %v2020
      %v2150 = vsel %vm2142, %v2057, %v2021
      %v2151 = vsel %vm2143, %v2058, %v2022
      %v2152 = vsel %vm2144, %v2059, %v2023
      %v2153 = vsel %vm2145, %v2060, %v2024
      %2162 = vrot.lane.b32.xlu0 %v2146, 118
      %v2163 = vpop.permute.xlu0 %2162
      %2164 = vrot.lane.b32.xlu0 %v2147, 118
      %v2165 = vpop.permute.xlu0 %2164
      %2166 = vrot.lane.b32.xlu0 %v2148, 118
      %v2167 = vpop.permute.xlu0 %2166
      %2168 = vrot.lane.b32.xlu0 %v2149, 118
      %v2169 = vpop.permute.xlu0 %2168
      %2170 = vrot.lane.b32.xlu0 %v2150, 118
      %v2171 = vpop.permute.xlu0 %2170
      %2172 = vrot.lane.b32.xlu0 %v2151, 118
      %v2173 = vpop.permute.xlu0 %2172
      %2174 = vrot.lane.b32.xlu0 %v2152, 118
      %v2175 = vpop.permute.xlu0 %2174
      %2176 = vrot.lane.b32.xlu0 %v2153, 118
      %v2177 = vpop.permute.xlu0 %2176
      %v2178 = vsel %vm780, %v2163, %v2165
      %v2179 = vsel %vm780, %v2165, %v2167
      %v2180 = vsel %vm780, %v2167, %v2169
      %v2181 = vsel %vm780, %v2169, %v2171
      %v2182 = vsel %vm780, %v2171, %v2173
      %v2183 = vsel %vm780, %v2173, %v2175
      %v2184 = vsel %vm780, %v2175, %v2177
      %v2194 = vsel %vm780, %v2177, %v2163
      %v2195 = vlaneseq
      %v2196 = vshrl.u32 %v2195, 7
      %v2197 = vsub.s32 1, %v2196
      %v2198 = vrot.slane %v1941, %v2197
      %v2199 = vlaneseq
      %v2200 = vshrl.u32 %v2199, 7
      %v2201 = vsub.s32 5, %v2200
      %v2202 = vrot.slane %v1941, %v2201
      %v2203 = vlaneseq
      %v2204 = vshrl.u32 %v2203, 7
      %v2205 = vsub.s32 1, %v2204
      %v2206 = vrot.slane %v1942, %v2205
      %v2207 = vlaneseq
      %v2208 = vshrl.u32 %v2207, 7
      %v2209 = vsub.s32 5, %v2208
      %v2210 = vrot.slane %v1942, %v2209
      %v2211 = vlaneseq
      %v2212 = vshrl.u32 %v2211, 7
      %v2213 = vsub.s32 1, %v2212
      %v2214 = vrot.slane %v1943, %v2213
      %v2215 = vlaneseq
      %v2216 = vshrl.u32 %v2215, 7
      %v2217 = vsub.s32 5, %v2216
      %v2218 = vrot.slane %v1943, %v2217
      %v2219 = vlaneseq
      %v2220 = vshrl.u32 %v2219, 7
      %v2221 = vsub.s32 1, %v2220
      %v2222 = vrot.slane %v1944, %v2221
      %v2223 = vlaneseq
      %v2224 = vshrl.u32 %v2223, 7
      %v2225 = vsub.s32 5, %v2224
      %v2226 = vrot.slane %v1944, %v2225
      %v2227 = vlaneseq
      %v2228 = vshrl.u32 %v2227, 7
      %v2229 = vsub.s32 1, %v2228
      %v2230 = vrot.slane %v2198, %v2229
      %v2231 = vlaneseq
      %v2232 = vshrl.u32 %v2231, 7
      %v2233 = vsub.s32 1, %v2232
      %v2234 = vrot.slane %v2202, %v2233
      %v2235 = vlaneseq
      %v2236 = vshrl.u32 %v2235, 7
      %v2237 = vsub.s32 1, %v2236
      %v2238 = vrot.slane %v2206, %v2237
      %v2239 = vlaneseq
      %v2240 = vshrl.u32 %v2239, 7
      %v2241 = vsub.s32 1, %v2240
      %v2242 = vrot.slane %v2210, %v2241
      %v2243 = vlaneseq
      %v2244 = vshrl.u32 %v2243, 7
      %v2245 = vsub.s32 1, %v2244
      %v2246 = vrot.slane %v2214, %v2245
      %v2247 = vlaneseq
      %v2248 = vshrl.u32 %v2247, 7
      %v2249 = vsub.s32 1, %v2248
      %v2250 = vrot.slane %v2218, %v2249
      %v2251 = vlaneseq
      %v2252 = vshrl.u32 %v2251, 7
      %v2253 = vsub.s32 1, %v2252
      %v2254 = vrot.slane %v2222, %v2253
      %v2255 = vlaneseq
      %v2256 = vshrl.u32 %v2255, 7
      %v2257 = vsub.s32 1, %v2256
      %v2258 = vrot.slane %v2226, %v2257
      %vm2259 = vcmp.eq.s32.totalorder %v2230, 1
      %vm2260 = vcmp.eq.s32.totalorder %v2234, 1
      %vm2261 = vcmp.eq.s32.totalorder %v2238, 1
      %vm2262 = vcmp.eq.s32.totalorder %v2242, 1
      %vm2263 = vcmp.eq.s32.totalorder %v2246, 1
      %vm2264 = vcmp.eq.s32.totalorder %v2250, 1
      %vm2265 = vcmp.eq.s32.totalorder %v2254, 1
      %vm2266 = vcmp.eq.s32.totalorder %v2258, 1
      %v2267 = vsel %vm2259, %v2178, %v2146
      %v2268 = vsel %vm2260, %v2179, %v2147
      %v2269 = vsel %vm2261, %v2180, %v2148
      %v2270 = vsel %vm2262, %v2181, %v2149
      %v2271 = vsel %vm2263, %v2182, %v2150
      %v2272 = vsel %vm2264, %v2183, %v2151
      %v2273 = vsel %vm2265, %v2184, %v2152
      %v2274 = vsel %vm2266, %v2194, %v2153
      %2276 = vrot.lane.b32.xlu0 %v2274, 10
      %v2277 = vpop.permute.xlu0 %2276
      %2286 = vrot.lane.b32.xlu0 %v2267, 10
      %v2287 = vpop.permute.xlu0 %2286
      %2288 = vrot.lane.b32.xlu0 %v2268, 10
      %v2289 = vpop.permute.xlu0 %2288
      %2290 = vrot.lane.b32.xlu0 %v2269, 10
      %v2291 = vpop.permute.xlu0 %2290
      %2292 = vrot.lane.b32.xlu0 %v2270, 10
      %v2293 = vpop.permute.xlu0 %2292
      %2294 = vrot.lane.b32.xlu0 %v2271, 10
      %v2295 = vpop.permute.xlu0 %2294
      %2296 = vrot.lane.b32.xlu0 %v2272, 10
      %v2297 = vpop.permute.xlu0 %2296
      %2298 = vrot.lane.b32.xlu0 %v2273, 10
      %v2299 = vpop.permute.xlu0 %2298
      %v2300 = vsel %vm625, %v2287, %v2289
      %v2301 = vsel %vm625, %v2289, %v2291
      %v2302 = vsel %vm625, %v2291, %v2293
      %v2303 = vsel %vm625, %v2293, %v2295
      %v2304 = vsel %vm625, %v2295, %v2297
      %v2305 = vsel %vm625, %v2297, %v2299
      %v2306 = vsel %vm625, %v2299, %v2277
      %v2315 = vsel %vm625, %v2277, %v2287
      %v2316 = vlaneseq
      %v2317 = vshrl.u32 %v2316, 7
      %v2318 = vsub.s32 1, %v2317
      %v2319 = vrot.slane %v2070, %v2318
      %v2320 = vlaneseq
      %v2321 = vshrl.u32 %v2320, 7
      %v2322 = vsub.s32 5, %v2321
      %v2323 = vrot.slane %v2070, %v2322
      %v2324 = vlaneseq
      %v2325 = vshrl.u32 %v2324, 7
      %v2326 = vsub.s32 1, %v2325
      %v2327 = vrot.slane %v2071, %v2326
      %v2328 = vlaneseq
      %v2329 = vshrl.u32 %v2328, 7
      %v2330 = vsub.s32 5, %v2329
      %v2331 = vrot.slane %v2071, %v2330
      %v2332 = vlaneseq
      %v2333 = vshrl.u32 %v2332, 7
      %v2334 = vsub.s32 1, %v2333
      %v2335 = vrot.slane %v2072, %v2334
      %v2336 = vlaneseq
      %v2337 = vshrl.u32 %v2336, 7
      %v2338 = vsub.s32 5, %v2337
      %v2339 = vrot.slane %v2072, %v2338
      %v2340 = vlaneseq
      %v2341 = vshrl.u32 %v2340, 7
      %v2342 = vsub.s32 1, %v2341
      %v2343 = vrot.slane %v2073, %v2342
      %v2344 = vlaneseq
      %v2345 = vshrl.u32 %v2344, 7
      %v2346 = vsub.s32 5, %v2345
      %v2347 = vrot.slane %v2073, %v2346
      %v2348 = vlaneseq
      %v2349 = vshrl.u32 %v2348, 7
      %v2350 = vsub.s32 1, %v2349
      %v2351 = vrot.slane %v2319, %v2350
      %v2352 = vlaneseq
      %v2353 = vshrl.u32 %v2352, 7
      %v2354 = vsub.s32 1, %v2353
      %v2355 = vrot.slane %v2323, %v2354
      %v2356 = vlaneseq
      %v2357 = vshrl.u32 %v2356, 7
      %v2358 = vsub.s32 1, %v2357
      %v2359 = vrot.slane %v2327, %v2358
      %v2360 = vlaneseq
      %v2361 = vshrl.u32 %v2360, 7
      %v2362 = vsub.s32 1, %v2361
      %v2363 = vrot.slane %v2331, %v2362
      %v2364 = vlaneseq
      %v2365 = vshrl.u32 %v2364, 7
      %v2366 = vsub.s32 1, %v2365
      %v2367 = vrot.slane %v2335, %v2366
      %v2368 = vlaneseq
      %v2369 = vshrl.u32 %v2368, 7
      %v2370 = vsub.s32 1, %v2369
      %v2371 = vrot.slane %v2339, %v2370
      %v2372 = vlaneseq
      %v2373 = vshrl.u32 %v2372, 7
      %v2374 = vsub.s32 1, %v2373
      %v2375 = vrot.slane %v2343, %v2374
      %v2376 = vlaneseq
      %v2377 = vshrl.u32 %v2376, 7
      %v2378 = vsub.s32 1, %v2377
      %v2379 = vrot.slane %v2347, %v2378
      %vm2380 = vcmp.eq.s32.totalorder %v2351, 1
      %vm2381 = vcmp.eq.s32.totalorder %v2355, 1
      %vm2382 = vcmp.eq.s32.totalorder %v2359, 1
      %vm2383 = vcmp.eq.s32.totalorder %v2363, 1
      %vm2384 = vcmp.eq.s32.totalorder %v2367, 1
      %vm2385 = vcmp.eq.s32.totalorder %v2371, 1
      %vm2386 = vcmp.eq.s32.totalorder %v2375, 1
      %vm2387 = vcmp.eq.s32.totalorder %v2379, 1
      %v2388 = vsel %vm2380, %v2315, %v2267
      %v2389 = vsel %vm2381, %v2300, %v2268
      %v2390 = vsel %vm2382, %v2301, %v2269
      %v2391 = vsel %vm2383, %v2302, %v2270
      %v2392 = vsel %vm2384, %v2303, %v2271
      %v2393 = vsel %vm2385, %v2304, %v2272
      %v2394 = vsel %vm2386, %v2305, %v2273
      %v2395 = vsel %vm2387, %v2306, %v2274
      %2404 = vrot.lane.b32.xlu0 %v2388, 28
      %v2405 = vpop.permute.xlu0 %2404
      %2406 = vrot.lane.b32.xlu0 %v2389, 28
      %v2407 = vpop.permute.xlu0 %2406
      %2408 = vrot.lane.b32.xlu0 %v2390, 28
      %v2409 = vpop.permute.xlu0 %2408
      %2410 = vrot.lane.b32.xlu0 %v2391, 28
      %v2411 = vpop.permute.xlu0 %2410
      %2412 = vrot.lane.b32.xlu0 %v2392, 28
      %v2413 = vpop.permute.xlu0 %2412
      %2414 = vrot.lane.b32.xlu0 %v2393, 28
      %v2415 = vpop.permute.xlu0 %2414
      %2416 = vrot.lane.b32.xlu0 %v2394, 28
      %v2417 = vpop.permute.xlu0 %2416
      %2418 = vrot.lane.b32.xlu0 %v2395, 28
      %v2419 = vpop.permute.xlu0 %2418
      %v2420 = vsel %vm963, %v2405, %v2407
      %v2421 = vsel %vm963, %v2407, %v2409
      %v2422 = vsel %vm963, %v2409, %v2411
      %v2423 = vsel %vm963, %v2411, %v2413
      %v2424 = vsel %vm963, %v2413, %v2415
      %v2425 = vsel %vm963, %v2415, %v2417
      %v2426 = vsel %vm963, %v2417, %v2419
      %v2436 = vsel %vm963, %v2419, %v2405
      %v2437 = vlaneseq
      %v2438 = vshrl.u32 %v2437, 7
      %v2439 = vsub.s32 0, %v2438
      %v2440 = vrot.slane %v1941, %v2439
      %v2441 = vlaneseq
      %v2442 = vshrl.u32 %v2441, 7
      %v2443 = vsub.s32 4, %v2442
      %v2444 = vrot.slane %v1941, %v2443
      %v2445 = vlaneseq
      %v2446 = vshrl.u32 %v2445, 7
      %v2447 = vsub.s32 0, %v2446
      %v2448 = vrot.slane %v1942, %v2447
      %v2449 = vlaneseq
      %v2450 = vshrl.u32 %v2449, 7
      %v2451 = vsub.s32 4, %v2450
      %v2452 = vrot.slane %v1942, %v2451
      %v2453 = vlaneseq
      %v2454 = vshrl.u32 %v2453, 7
      %v2455 = vsub.s32 0, %v2454
      %v2456 = vrot.slane %v1943, %v2455
      %v2457 = vlaneseq
      %v2458 = vshrl.u32 %v2457, 7
      %v2459 = vsub.s32 4, %v2458
      %v2460 = vrot.slane %v1943, %v2459
      %v2461 = vlaneseq
      %v2462 = vshrl.u32 %v2461, 7
      %v2463 = vsub.s32 0, %v2462
      %v2464 = vrot.slane %v1944, %v2463
      %v2465 = vlaneseq
      %v2466 = vshrl.u32 %v2465, 7
      %v2467 = vsub.s32 4, %v2466
      %v2468 = vrot.slane %v1944, %v2467
      %v2469 = vlaneseq
      %v2470 = vshrl.u32 %v2469, 7
      %v2471 = vsub.s32 0, %v2470
      %v2472 = vrot.slane %v2440, %v2471
      %v2473 = vlaneseq
      %v2474 = vshrl.u32 %v2473, 7
      %v2475 = vsub.s32 0, %v2474
      %v2476 = vrot.slane %v2444, %v2475
      %v2477 = vlaneseq
      %v2478 = vshrl.u32 %v2477, 7
      %v2479 = vsub.s32 0, %v2478
      %v2480 = vrot.slane %v2448, %v2479
      %v2481 = vlaneseq
      %v2482 = vshrl.u32 %v2481, 7
      %v2483 = vsub.s32 0, %v2482
      %v2484 = vrot.slane %v2452, %v2483
      %v2485 = vlaneseq
      %v2486 = vshrl.u32 %v2485, 7
      %v2487 = vsub.s32 0, %v2486
      %v2488 = vrot.slane %v2456, %v2487
      %v2489 = vlaneseq
      %v2490 = vshrl.u32 %v2489, 7
      %v2491 = vsub.s32 0, %v2490
      %v2492 = vrot.slane %v2460, %v2491
      %v2493 = vlaneseq
      %v2494 = vshrl.u32 %v2493, 7
      %v2495 = vsub.s32 0, %v2494
      %v2496 = vrot.slane %v2464, %v2495
      %v2497 = vlaneseq
      %v2498 = vshrl.u32 %v2497, 7
      %v2499 = vsub.s32 0, %v2498
      %v2500 = vrot.slane %v2468, %v2499
      %vm2501 = vcmp.eq.s32.totalorder %v2472, 1
      %vm2502 = vcmp.eq.s32.totalorder %v2476, 1
      %vm2503 = vcmp.eq.s32.totalorder %v2480, 1
      %vm2504 = vcmp.eq.s32.totalorder %v2484, 1
      %vm2505 = vcmp.eq.s32.totalorder %v2488, 1
      %vm2506 = vcmp.eq.s32.totalorder %v2492, 1
      %vm2507 = vcmp.eq.s32.totalorder %v2496, 1
      %vm2508 = vcmp.eq.s32.totalorder %v2500, 1
      %v2509 = vsel %vm2501, %v2420, %v2388
      %v2510 = vsel %vm2502, %v2421, %v2389
      %v2511 = vsel %vm2503, %v2422, %v2390
      %v2512 = vsel %vm2504, %v2423, %v2391
      %v2513 = vsel %vm2505, %v2424, %v2392
      %v2514 = vsel %vm2506, %v2425, %v2393
      %v2515 = vsel %vm2507, %v2426, %v2394
      %v2516 = vsel %vm2508, %v2436, %v2395
      %2518 = vrot.lane.b32.xlu0 %v2516, 100
      %v2519 = vpop.permute.xlu0 %2518
      %2528 = vrot.lane.b32.xlu0 %v2509, 100
      %v2529 = vpop.permute.xlu0 %2528
      %2530 = vrot.lane.b32.xlu0 %v2510, 100
      %v2531 = vpop.permute.xlu0 %2530
      %2532 = vrot.lane.b32.xlu0 %v2511, 100
      %v2533 = vpop.permute.xlu0 %2532
      %2534 = vrot.lane.b32.xlu0 %v2512, 100
      %v2535 = vpop.permute.xlu0 %2534
      %2536 = vrot.lane.b32.xlu0 %v2513, 100
      %v2537 = vpop.permute.xlu0 %2536
      %2538 = vrot.lane.b32.xlu0 %v2514, 100
      %v2539 = vpop.permute.xlu0 %2538
      %2540 = vrot.lane.b32.xlu0 %v2515, 100
      %v2541 = vpop.permute.xlu0 %2540
      %v2542 = vsel %vm442, %v2529, %v2531
      %v2543 = vsel %vm442, %v2531, %v2533
      %v2544 = vsel %vm442, %v2533, %v2535
      %v2545 = vsel %vm442, %v2535, %v2537
      %v2546 = vsel %vm442, %v2537, %v2539
      %v2547 = vsel %vm442, %v2539, %v2541
      %v2548 = vsel %vm442, %v2541, %v2519
      %v2557 = vsel %vm442, %v2519, %v2529
      %v2558 = vlaneseq
      %v2559 = vshrl.u32 %v2558, 7
      %v2560 = vsub.s32 0, %v2559
      %v2561 = vrot.slane %v2070, %v2560
      %v2562 = vlaneseq
      %v2563 = vshrl.u32 %v2562, 7
      %v2564 = vsub.s32 4, %v2563
      %v2565 = vrot.slane %v2070, %v2564
      %v2566 = vlaneseq
      %v2567 = vshrl.u32 %v2566, 7
      %v2568 = vsub.s32 0, %v2567
      %v2569 = vrot.slane %v2071, %v2568
      %v2570 = vlaneseq
      %v2571 = vshrl.u32 %v2570, 7
      %v2572 = vsub.s32 4, %v2571
      %v2573 = vrot.slane %v2071, %v2572
      %v2574 = vlaneseq
      %v2575 = vshrl.u32 %v2574, 7
      %v2576 = vsub.s32 0, %v2575
      %v2577 = vrot.slane %v2072, %v2576
      %v2578 = vlaneseq
      %v2579 = vshrl.u32 %v2578, 7
      %v2580 = vsub.s32 4, %v2579
      %v2581 = vrot.slane %v2072, %v2580
      %v2582 = vlaneseq
      %v2583 = vshrl.u32 %v2582, 7
      %v2584 = vsub.s32 0, %v2583
      %v2585 = vrot.slane %v2073, %v2584
      %v2586 = vlaneseq
      %v2587 = vshrl.u32 %v2586, 7
      %v2588 = vsub.s32 4, %v2587
      %v2589 = vrot.slane %v2073, %v2588
      %v2590 = vlaneseq
      %v2591 = vshrl.u32 %v2590, 7
      %v2592 = vsub.s32 0, %v2591
      %v2593 = vrot.slane %v2561, %v2592
      %v2594 = vlaneseq
      %v2595 = vshrl.u32 %v2594, 7
      %v2596 = vsub.s32 0, %v2595
      %v2597 = vrot.slane %v2565, %v2596
      %v2598 = vlaneseq
      %v2599 = vshrl.u32 %v2598, 7
      %v2600 = vsub.s32 0, %v2599
      %v2601 = vrot.slane %v2569, %v2600
      %v2602 = vlaneseq
      %v2603 = vshrl.u32 %v2602, 7
      %v2604 = vsub.s32 0, %v2603
      %v2605 = vrot.slane %v2573, %v2604
      %v2606 = vlaneseq
      %v2607 = vshrl.u32 %v2606, 7
      %v2608 = vsub.s32 0, %v2607
      %v2609 = vrot.slane %v2577, %v2608
      %v2610 = vlaneseq
      %v2611 = vshrl.u32 %v2610, 7
      %v2612 = vsub.s32 0, %v2611
      %v2613 = vrot.slane %v2581, %v2612
      %v2614 = vlaneseq
      %v2615 = vshrl.u32 %v2614, 7
      %v2616 = vsub.s32 0, %v2615
      %v2617 = vrot.slane %v2585, %v2616
      %v2618 = vlaneseq
      %v2619 = vshrl.u32 %v2618, 7
      %v2620 = vsub.s32 0, %v2619
      %v2621 = vrot.slane %v2589, %v2620
      %vm2622 = vcmp.eq.s32.totalorder %v2593, 1
      %vm2623 = vcmp.eq.s32.totalorder %v2597, 1
      %vm2624 = vcmp.eq.s32.totalorder %v2601, 1
      %vm2625 = vcmp.eq.s32.totalorder %v2605, 1
      %vm2626 = vcmp.eq.s32.totalorder %v2609, 1
      %vm2627 = vcmp.eq.s32.totalorder %v2613, 1
      %vm2628 = vcmp.eq.s32.totalorder %v2617, 1
      %vm2629 = vcmp.eq.s32.totalorder %v2621, 1
      %v2630 = vsel %vm2622, %v2557, %v2509
      %v2631 = vsel %vm2623, %v2542, %v2510
      %v2632 = vsel %vm2624, %v2543, %v2511
      %v2633 = vsel %vm2625, %v2544, %v2512
      %v2634 = vsel %vm2626, %v2545, %v2513
      %v2635 = vsel %vm2627, %v2546, %v2514
      %v2636 = vsel %vm2628, %v2547, %v2515
      %v2637 = vsel %vm2629, %v2548, %v2516
      %v2638 = vld [vmem:[%s3] sm:$0xf]
      %2640 = vrot.lane.b32.xlu0 %v2637, 111
      %v2641 = vpop.permute.xlu0 %2640
      %2650 = vrot.lane.b32.xlu0 %v2630, 111
      %v2651 = vpop.permute.xlu0 %2650
      %2652 = vrot.lane.b32.xlu0 %v2631, 111
      %v2653 = vpop.permute.xlu0 %2652
      %2654 = vrot.lane.b32.xlu0 %v2632, 111
      %v2655 = vpop.permute.xlu0 %2654
      %2656 = vrot.lane.b32.xlu0 %v2633, 111
      %v2657 = vpop.permute.xlu0 %2656
      %2658 = vrot.lane.b32.xlu0 %v2634, 111
      %v2659 = vpop.permute.xlu0 %2658
      %2660 = vrot.lane.b32.xlu0 %v2635, 111
      %v2661 = vpop.permute.xlu0 %2660
      %2662 = vrot.lane.b32.xlu0 %v2636, 111
      %v2663 = vpop.permute.xlu0 %2662
      %v2664 = vsel %vm320, %v2651, %v2653
      %v2665 = vsel %vm320, %v2653, %v2655
      %v2666 = vsel %vm320, %v2655, %v2657
      %v2667 = vsel %vm320, %v2657, %v2659
      %v2668 = vsel %vm320, %v2659, %v2661
      %v2669 = vsel %vm320, %v2661, %v2663
      %v2670 = vsel %vm320, %v2663, %v2641
      %v2679 = vsel %vm320, %v2641, %v2651
      %2680 = vrot.lane.b32.xlu0 %v2637, 110
      %v2681 = vpop.permute.xlu0 %2680
      %2683 = vrot.lane.b32.xlu0 %v2630, 110
      %v2684 = vpop.permute.xlu0 %2683
      %2685 = vrot.lane.b32.xlu0 %v2631, 110
      %v2686 = vpop.permute.xlu0 %2685
      %2687 = vrot.lane.b32.xlu0 %v2632, 110
      %v2688 = vpop.permute.xlu0 %2687
      %2689 = vrot.lane.b32.xlu0 %v2633, 110
      %v2690 = vpop.permute.xlu0 %2689
      %2691 = vrot.lane.b32.xlu0 %v2634, 110
      %v2692 = vpop.permute.xlu0 %2691
      %2693 = vrot.lane.b32.xlu0 %v2635, 110
      %v2694 = vpop.permute.xlu0 %2693
      %2695 = vrot.lane.b32.xlu0 %v2636, 110
      %v2696 = vpop.permute.xlu0 %2695
      %v2697 = vsel %vm354, %v2684, %v2686
      %v2698 = vsel %vm354, %v2686, %v2688
      %v2699 = vsel %vm354, %v2688, %v2690
      %v2700 = vsel %vm354, %v2690, %v2692
      %v2701 = vsel %vm354, %v2692, %v2694
      %v2702 = vsel %vm354, %v2694, %v2696
      %v2703 = vsel %vm354, %v2696, %v2681
      %v2705 = vsel %vm354, %v2681, %v2684
      %2706 = vrot.lane.b32.xlu0 %v2637, 109
      %v2707 = vpop.permute.xlu0 %2706
      %2709 = vrot.lane.b32.xlu0 %v2630, 109
      %v2710 = vpop.permute.xlu0 %2709
      %2711 = vrot.lane.b32.xlu0 %v2631, 109
      %v2712 = vpop.permute.xlu0 %2711
      %2713 = vrot.lane.b32.xlu0 %v2632, 109
      %v2714 = vpop.permute.xlu0 %2713
      %2715 = vrot.lane.b32.xlu0 %v2633, 109
      %v2716 = vpop.permute.xlu0 %2715
      %2717 = vrot.lane.b32.xlu0 %v2634, 109
      %v2718 = vpop.permute.xlu0 %2717
      %2719 = vrot.lane.b32.xlu0 %v2635, 109
      %v2720 = vpop.permute.xlu0 %2719
      %2721 = vrot.lane.b32.xlu0 %v2636, 109
      %v2722 = vpop.permute.xlu0 %2721
      %v2723 = vsel %vm381, %v2710, %v2712
      %v2724 = vsel %vm381, %v2712, %v2714
      %v2725 = vsel %vm381, %v2714, %v2716
      %v2726 = vsel %vm381, %v2716, %v2718
      %v2727 = vsel %vm381, %v2718, %v2720
      %v2728 = vsel %vm381, %v2720, %v2722
      %v2729 = vsel %vm381, %v2722, %v2707
      %v2738 = vsel %vm381, %v2707, %v2710
      %2739 = vrot.lane.b32.xlu0 %v2637, 101
      %v2740 = vpop.permute.xlu0 %2739
      %2742 = vrot.lane.b32.xlu0 %v2630, 101
      %v2743 = vpop.permute.xlu0 %2742
      %2744 = vrot.lane.b32.xlu0 %v2631, 101
      %v2745 = vpop.permute.xlu0 %2744
      %2746 = vrot.lane.b32.xlu0 %v2632, 101
      %v2747 = vpop.permute.xlu0 %2746
      %2748 = vrot.lane.b32.xlu0 %v2633, 101
      %v2749 = vpop.permute.xlu0 %2748
      %2750 = vrot.lane.b32.xlu0 %v2634, 101
      %v2751 = vpop.permute.xlu0 %2750
      %2752 = vrot.lane.b32.xlu0 %v2635, 101
      %v2753 = vpop.permute.xlu0 %2752
      %2754 = vrot.lane.b32.xlu0 %v2636, 101
      %v2755 = vpop.permute.xlu0 %2754
      %v2756 = vsel %vm415, %v2743, %v2745
      %v2757 = vsel %vm415, %v2745, %v2747
      %v2758 = vsel %vm415, %v2747, %v2749
      %v2759 = vsel %vm415, %v2749, %v2751
      %v2760 = vsel %vm415, %v2751, %v2753
      %v2761 = vsel %vm415, %v2753, %v2755
      %v2762 = vsel %vm415, %v2755, %v2740
      %v2764 = vsel %vm415, %v2740, %v2743
      %2765 = vrot.lane.b32.xlu0 %v2637, 100
      %v2766 = vpop.permute.xlu0 %2765
      %2768 = vrot.lane.b32.xlu0 %v2630, 100
      %v2769 = vpop.permute.xlu0 %2768
      %2770 = vrot.lane.b32.xlu0 %v2631, 100
      %v2771 = vpop.permute.xlu0 %2770
      %2772 = vrot.lane.b32.xlu0 %v2632, 100
      %v2773 = vpop.permute.xlu0 %2772
      %2774 = vrot.lane.b32.xlu0 %v2633, 100
      %v2775 = vpop.permute.xlu0 %2774
      %2776 = vrot.lane.b32.xlu0 %v2634, 100
      %v2777 = vpop.permute.xlu0 %2776
      %2778 = vrot.lane.b32.xlu0 %v2635, 100
      %v2779 = vpop.permute.xlu0 %2778
      %2780 = vrot.lane.b32.xlu0 %v2636, 100
      %v2781 = vpop.permute.xlu0 %2780
      %v2782 = vsel %vm442, %v2769, %v2771
      %v2783 = vsel %vm442, %v2771, %v2773
      %v2784 = vsel %vm442, %v2773, %v2775
      %v2785 = vsel %vm442, %v2775, %v2777
      %v2786 = vsel %vm442, %v2777, %v2779
      %v2787 = vsel %vm442, %v2779, %v2781
      %v2788 = vsel %vm442, %v2781, %v2766
      %v2797 = vsel %vm442, %v2766, %v2769
      %2798 = vrot.lane.b32.xlu0 %v2637, 99
      %v2799 = vpop.permute.xlu0 %2798
      %2801 = vrot.lane.b32.xlu0 %v2630, 99
      %v2802 = vpop.permute.xlu0 %2801
      %2803 = vrot.lane.b32.xlu0 %v2631, 99
      %v2804 = vpop.permute.xlu0 %2803
      %2805 = vrot.lane.b32.xlu0 %v2632, 99
      %v2806 = vpop.permute.xlu0 %2805
      %2807 = vrot.lane.b32.xlu0 %v2633, 99
      %v2808 = vpop.permute.xlu0 %2807
      %2809 = vrot.lane.b32.xlu0 %v2634, 99
      %v2810 = vpop.permute.xlu0 %2809
      %2811 = vrot.lane.b32.xlu0 %v2635, 99
      %v2812 = vpop.permute.xlu0 %2811
      %2813 = vrot.lane.b32.xlu0 %v2636, 99
      %v2814 = vpop.permute.xlu0 %2813
      %v2815 = vsel %vm476, %v2802, %v2804
      %v2816 = vsel %vm476, %v2804, %v2806
      %v2817 = vsel %vm476, %v2806, %v2808
      %v2818 = vsel %vm476, %v2808, %v2810
      %v2819 = vsel %vm476, %v2810, %v2812
      %v2820 = vsel %vm476, %v2812, %v2814
      %v2821 = vsel %vm476, %v2814, %v2799
      %v2823 = vsel %vm476, %v2799, %v2802
      %2824 = vrot.lane.b32.xlu0 %v2637, 91
      %v2825 = vpop.permute.xlu0 %2824
      %2827 = vrot.lane.b32.xlu0 %v2630, 91
      %v2828 = vpop.permute.xlu0 %2827
      %2829 = vrot.lane.b32.xlu0 %v2631, 91
      %v2830 = vpop.permute.xlu0 %2829
      %2831 = vrot.lane.b32.xlu0 %v2632, 91
      %v2832 = vpop.permute.xlu0 %2831
      %2833 = vrot.lane.b32.xlu0 %v2633, 91
      %v2834 = vpop.permute.xlu0 %2833
      %2835 = vrot.lane.b32.xlu0 %v2634, 91
      %v2836 = vpop.permute.xlu0 %2835
      %2837 = vrot.lane.b32.xlu0 %v2635, 91
      %v2838 = vpop.permute.xlu0 %2837
      %2839 = vrot.lane.b32.xlu0 %v2636, 91
      %v2840 = vpop.permute.xlu0 %2839
      %v2841 = vsel %vm503, %v2828, %v2830
      %v2842 = vsel %vm503, %v2830, %v2832
      %v2843 = vsel %vm503, %v2832, %v2834
      %v2844 = vsel %vm503, %v2834, %v2836
      %v2845 = vsel %vm503, %v2836, %v2838
      %v2846 = vsel %vm503, %v2838, %v2840
      %v2847 = vsel %vm503, %v2840, %v2825
      %v2856 = vsel %vm503, %v2825, %v2828
      %2857 = vrot.lane.b32.xlu0 %v2637, 90
      %v2858 = vpop.permute.xlu0 %2857
      %2860 = vrot.lane.b32.xlu0 %v2630, 90
      %v2861 = vpop.permute.xlu0 %2860
      %2862 = vrot.lane.b32.xlu0 %v2631, 90
      %v2863 = vpop.permute.xlu0 %2862
      %2864 = vrot.lane.b32.xlu0 %v2632, 90
      %v2865 = vpop.permute.xlu0 %2864
      %2866 = vrot.lane.b32.xlu0 %v2633, 90
      %v2867 = vpop.permute.xlu0 %2866
      %2868 = vrot.lane.b32.xlu0 %v2634, 90
      %v2869 = vpop.permute.xlu0 %2868
      %2870 = vrot.lane.b32.xlu0 %v2635, 90
      %v2871 = vpop.permute.xlu0 %2870
      %2872 = vrot.lane.b32.xlu0 %v2636, 90
      %v2873 = vpop.permute.xlu0 %2872
      %v2874 = vsel %vm537, %v2861, %v2863
      %v2875 = vsel %vm537, %v2863, %v2865
      %v2876 = vsel %vm537, %v2865, %v2867
      %v2877 = vsel %vm537, %v2867, %v2869
      %v2878 = vsel %vm537, %v2869, %v2871
      %v2879 = vsel %vm537, %v2871, %v2873
      %v2880 = vsel %vm537, %v2873, %v2858
      %v2882 = vsel %vm537, %v2858, %v2861
      %2883 = vrot.lane.b32.xlu0 %v2637, 89
      %v2884 = vpop.permute.xlu0 %2883
      %2886 = vrot.lane.b32.xlu0 %v2630, 89
      %v2887 = vpop.permute.xlu0 %2886
      %2888 = vrot.lane.b32.xlu0 %v2631, 89
      %v2889 = vpop.permute.xlu0 %2888
      %2890 = vrot.lane.b32.xlu0 %v2632, 89
      %v2891 = vpop.permute.xlu0 %2890
      %2892 = vrot.lane.b32.xlu0 %v2633, 89
      %v2893 = vpop.permute.xlu0 %2892
      %2894 = vrot.lane.b32.xlu0 %v2634, 89
      %v2895 = vpop.permute.xlu0 %2894
      %2896 = vrot.lane.b32.xlu0 %v2635, 89
      %v2897 = vpop.permute.xlu0 %2896
      %2898 = vrot.lane.b32.xlu0 %v2636, 89
      %v2899 = vpop.permute.xlu0 %2898
      %v2900 = vsel %vm564, %v2887, %v2889
      %v2901 = vsel %vm564, %v2889, %v2891
      %v2902 = vsel %vm564, %v2891, %v2893
      %v2903 = vsel %vm564, %v2893, %v2895
      %v2904 = vsel %vm564, %v2895, %v2897
      %v2905 = vsel %vm564, %v2897, %v2899
      %v2906 = vsel %vm564, %v2899, %v2884
      %v2915 = vsel %vm564, %v2884, %v2887
      %2916 = vrot.lane.b32.xlu0 %v2637, 11
      %v2917 = vpop.permute.xlu0 %2916
      %2919 = vrot.lane.b32.xlu0 %v2630, 11
      %v2920 = vpop.permute.xlu0 %2919
      %2921 = vrot.lane.b32.xlu0 %v2631, 11
      %v2922 = vpop.permute.xlu0 %2921
      %2923 = vrot.lane.b32.xlu0 %v2632, 11
      %v2924 = vpop.permute.xlu0 %2923
      %2925 = vrot.lane.b32.xlu0 %v2633, 11
      %v2926 = vpop.permute.xlu0 %2925
      %2927 = vrot.lane.b32.xlu0 %v2634, 11
      %v2928 = vpop.permute.xlu0 %2927
      %2929 = vrot.lane.b32.xlu0 %v2635, 11
      %v2930 = vpop.permute.xlu0 %2929
      %2931 = vrot.lane.b32.xlu0 %v2636, 11
      %v2932 = vpop.permute.xlu0 %2931
      %v2933 = vsel %vm598, %v2920, %v2922
      %v2934 = vsel %vm598, %v2922, %v2924
      %v2935 = vsel %vm598, %v2924, %v2926
      %v2936 = vsel %vm598, %v2926, %v2928
      %v2937 = vsel %vm598, %v2928, %v2930
      %v2938 = vsel %vm598, %v2930, %v2932
      %v2939 = vsel %vm598, %v2932, %v2917
      %v2941 = vsel %vm598, %v2917, %v2920
      %2942 = vrot.lane.b32.xlu0 %v2637, 10
      %v2943 = vpop.permute.xlu0 %2942
      %2945 = vrot.lane.b32.xlu0 %v2630, 10
      %v2946 = vpop.permute.xlu0 %2945
      %2947 = vrot.lane.b32.xlu0 %v2631, 10
      %v2948 = vpop.permute.xlu0 %2947
      %2949 = vrot.lane.b32.xlu0 %v2632, 10
      %v2950 = vpop.permute.xlu0 %2949
      %2951 = vrot.lane.b32.xlu0 %v2633, 10
      %v2952 = vpop.permute.xlu0 %2951
      %2953 = vrot.lane.b32.xlu0 %v2634, 10
      %v2954 = vpop.permute.xlu0 %2953
      %2955 = vrot.lane.b32.xlu0 %v2635, 10
      %v2956 = vpop.permute.xlu0 %2955
      %2957 = vrot.lane.b32.xlu0 %v2636, 10
      %v2958 = vpop.permute.xlu0 %2957
      %v2959 = vsel %vm625, %v2946, %v2948
      %v2960 = vsel %vm625, %v2948, %v2950
      %v2961 = vsel %vm625, %v2950, %v2952
      %v2962 = vsel %vm625, %v2952, %v2954
      %v2963 = vsel %vm625, %v2954, %v2956
      %v2964 = vsel %vm625, %v2956, %v2958
      %v2965 = vsel %vm625, %v2958, %v2943
      %v2974 = vsel %vm625, %v2943, %v2946
      %2975 = vrot.lane.b32.xlu0 %v2637, 9
      %v2976 = vpop.permute.xlu0 %2975
      %2978 = vrot.lane.b32.xlu0 %v2630, 9
      %v2979 = vpop.permute.xlu0 %2978
      %2980 = vrot.lane.b32.xlu0 %v2631, 9
      %v2981 = vpop.permute.xlu0 %2980
      %2982 = vrot.lane.b32.xlu0 %v2632, 9
      %v2983 = vpop.permute.xlu0 %2982
      %2984 = vrot.lane.b32.xlu0 %v2633, 9
      %v2985 = vpop.permute.xlu0 %2984
      %2986 = vrot.lane.b32.xlu0 %v2634, 9
      %v2987 = vpop.permute.xlu0 %2986
      %2988 = vrot.lane.b32.xlu0 %v2635, 9
      %v2989 = vpop.permute.xlu0 %2988
      %2990 = vrot.lane.b32.xlu0 %v2636, 9
      %v2991 = vpop.permute.xlu0 %2990
      %v2992 = vsel %vm659, %v2979, %v2981
      %v2993 = vsel %vm659, %v2981, %v2983
      %v2994 = vsel %vm659, %v2983, %v2985
      %v2995 = vsel %vm659, %v2985, %v2987
      %v2996 = vsel %vm659, %v2987, %v2989
      %v2997 = vsel %vm659, %v2989, %v2991
      %v2998 = vsel %vm659, %v2991, %v2976
      %v3000 = vsel %vm659, %v2976, %v2979
      %3001 = vrot.lane.b32.xlu0 %v2637, 1
      %v3002 = vpop.permute.xlu0 %3001
      %3004 = vrot.lane.b32.xlu0 %v2630, 1
      %v3005 = vpop.permute.xlu0 %3004
      %3006 = vrot.lane.b32.xlu0 %v2631, 1
      %v3007 = vpop.permute.xlu0 %3006
      %3008 = vrot.lane.b32.xlu0 %v2632, 1
      %v3009 = vpop.permute.xlu0 %3008
      %3010 = vrot.lane.b32.xlu0 %v2633, 1
      %v3011 = vpop.permute.xlu0 %3010
      %3012 = vrot.lane.b32.xlu0 %v2634, 1
      %v3013 = vpop.permute.xlu0 %3012
      %3014 = vrot.lane.b32.xlu0 %v2635, 1
      %v3015 = vpop.permute.xlu0 %3014
      %3016 = vrot.lane.b32.xlu0 %v2636, 1
      %v3017 = vpop.permute.xlu0 %3016
      %v3018 = vsel %vm686, %v3005, %v3007
      %v3019 = vsel %vm686, %v3007, %v3009
      %v3020 = vsel %vm686, %v3009, %v3011
      %v3021 = vsel %vm686, %v3011, %v3013
      %v3022 = vsel %vm686, %v3013, %v3015
      %v3023 = vsel %vm686, %v3015, %v3017
      %v3024 = vsel %vm686, %v3017, %v3002
      %v3033 = vsel %vm686, %v3002, %v3005
      %3034 = vrot.lane.b32.xlu0 %v2630, 127
      %v3035 = vpop.permute.xlu0 %3034
      %3036 = vrot.lane.b32.xlu0 %v2631, 127
      %v3037 = vpop.permute.xlu0 %3036
      %3038 = vrot.lane.b32.xlu0 %v2632, 127
      %v3039 = vpop.permute.xlu0 %3038
      %3040 = vrot.lane.b32.xlu0 %v2633, 127
      %v3041 = vpop.permute.xlu0 %3040
      %3042 = vrot.lane.b32.xlu0 %v2634, 127
      %v3043 = vpop.permute.xlu0 %3042
      %3044 = vrot.lane.b32.xlu0 %v2635, 127
      %v3045 = vpop.permute.xlu0 %3044
      %3046 = vrot.lane.b32.xlu0 %v2636, 127
      %v3047 = vpop.permute.xlu0 %3046
      %3048 = vrot.lane.b32.xlu0 %v2637, 127
      %v3049 = vpop.permute.xlu0 %3048
      %v3050 = vsel %vm719, %v3035, %v3037
      %v3051 = vsel %vm719, %v3037, %v3039
      %v3052 = vsel %vm719, %v3039, %v3041
      %v3053 = vsel %vm719, %v3041, %v3043
      %v3054 = vsel %vm719, %v3043, %v3045
      %v3055 = vsel %vm719, %v3045, %v3047
      %v3056 = vsel %vm719, %v3047, %v3049
      %v3066 = vsel %vm719, %v3049, %v3035
      %3067 = vrot.lane.b32.xlu0 %v2630, 119
      %v3068 = vpop.permute.xlu0 %3067
      %3069 = vrot.lane.b32.xlu0 %v2631, 119
      %v3070 = vpop.permute.xlu0 %3069
      %3071 = vrot.lane.b32.xlu0 %v2632, 119
      %v3072 = vpop.permute.xlu0 %3071
      %3073 = vrot.lane.b32.xlu0 %v2633, 119
      %v3074 = vpop.permute.xlu0 %3073
      %3075 = vrot.lane.b32.xlu0 %v2634, 119
      %v3076 = vpop.permute.xlu0 %3075
      %3077 = vrot.lane.b32.xlu0 %v2635, 119
      %v3078 = vpop.permute.xlu0 %3077
      %3079 = vrot.lane.b32.xlu0 %v2636, 119
      %v3080 = vpop.permute.xlu0 %3079
      %3081 = vrot.lane.b32.xlu0 %v2637, 119
      %v3082 = vpop.permute.xlu0 %3081
      %v3083 = vsel %vm753, %v3068, %v3070
      %v3084 = vsel %vm753, %v3070, %v3072
      %v3085 = vsel %vm753, %v3072, %v3074
      %v3086 = vsel %vm753, %v3074, %v3076
      %v3087 = vsel %vm753, %v3076, %v3078
      %v3088 = vsel %vm753, %v3078, %v3080
      %v3089 = vsel %vm753, %v3080, %v3082
      %v3092 = vsel %vm753, %v3082, %v3068
      %3093 = vrot.lane.b32.xlu0 %v2630, 118
      %v3094 = vpop.permute.xlu0 %3093
      %3095 = vrot.lane.b32.xlu0 %v2631, 118
      %v3096 = vpop.permute.xlu0 %3095
      %3097 = vrot.lane.b32.xlu0 %v2632, 118
      %v3098 = vpop.permute.xlu0 %3097
      %3099 = vrot.lane.b32.xlu0 %v2633, 118
      %v3100 = vpop.permute.xlu0 %3099
      %3101 = vrot.lane.b32.xlu0 %v2634, 118
      %v3102 = vpop.permute.xlu0 %3101
      %3103 = vrot.lane.b32.xlu0 %v2635, 118
      %v3104 = vpop.permute.xlu0 %3103
      %3105 = vrot.lane.b32.xlu0 %v2636, 118
      %v3106 = vpop.permute.xlu0 %3105
      %3107 = vrot.lane.b32.xlu0 %v2637, 118
      %v3108 = vpop.permute.xlu0 %3107
      %v3109 = vsel %vm780, %v3094, %v3096
      %v3110 = vsel %vm780, %v3096, %v3098
      %v3111 = vsel %vm780, %v3098, %v3100
      %v3112 = vsel %vm780, %v3100, %v3102
      %v3113 = vsel %vm780, %v3102, %v3104
      %v3114 = vsel %vm780, %v3104, %v3106
      %v3115 = vsel %vm780, %v3106, %v3108
      %v3125 = vsel %vm780, %v3108, %v3094
      %3126 = vrot.lane.b32.xlu0 %v2630, 117
      %v3127 = vpop.permute.xlu0 %3126
      %3128 = vrot.lane.b32.xlu0 %v2631, 117
      %v3129 = vpop.permute.xlu0 %3128
      %3130 = vrot.lane.b32.xlu0 %v2632, 117
      %v3131 = vpop.permute.xlu0 %3130
      %3132 = vrot.lane.b32.xlu0 %v2633, 117
      %v3133 = vpop.permute.xlu0 %3132
      %3134 = vrot.lane.b32.xlu0 %v2634, 117
      %v3135 = vpop.permute.xlu0 %3134
      %3136 = vrot.lane.b32.xlu0 %v2635, 117
      %v3137 = vpop.permute.xlu0 %3136
      %3138 = vrot.lane.b32.xlu0 %v2636, 117
      %v3139 = vpop.permute.xlu0 %3138
      %3140 = vrot.lane.b32.xlu0 %v2637, 117
      %v3141 = vpop.permute.xlu0 %3140
      %v3142 = vsel %vm814, %v3127, %v3129
      %v3143 = vsel %vm814, %v3129, %v3131
      %v3144 = vsel %vm814, %v3131, %v3133
      %v3145 = vsel %vm814, %v3133, %v3135
      %v3146 = vsel %vm814, %v3135, %v3137
      %v3147 = vsel %vm814, %v3137, %v3139
      %v3148 = vsel %vm814, %v3139, %v3141
      %v3151 = vsel %vm814, %v3141, %v3127
      %3152 = vrot.lane.b32.xlu0 %v2630, 39
      %v3153 = vpop.permute.xlu0 %3152
      %3154 = vrot.lane.b32.xlu0 %v2631, 39
      %v3155 = vpop.permute.xlu0 %3154
      %3156 = vrot.lane.b32.xlu0 %v2632, 39
      %v3157 = vpop.permute.xlu0 %3156
      %3158 = vrot.lane.b32.xlu0 %v2633, 39
      %v3159 = vpop.permute.xlu0 %3158
      %3160 = vrot.lane.b32.xlu0 %v2634, 39
      %v3161 = vpop.permute.xlu0 %3160
      %3162 = vrot.lane.b32.xlu0 %v2635, 39
      %v3163 = vpop.permute.xlu0 %3162
      %3164 = vrot.lane.b32.xlu0 %v2636, 39
      %v3165 = vpop.permute.xlu0 %3164
      %3166 = vrot.lane.b32.xlu0 %v2637, 39
      %v3167 = vpop.permute.xlu0 %3166
      %v3168 = vsel %vm841, %v3153, %v3155
      %v3169 = vsel %vm841, %v3155, %v3157
      %v3170 = vsel %vm841, %v3157, %v3159
      %v3171 = vsel %vm841, %v3159, %v3161
      %v3172 = vsel %vm841, %v3161, %v3163
      %v3173 = vsel %vm841, %v3163, %v3165
      %v3174 = vsel %vm841, %v3165, %v3167
      %v3184 = vsel %vm841, %v3167, %v3153
      %3185 = vrot.lane.b32.xlu0 %v2630, 38
      %v3186 = vpop.permute.xlu0 %3185
      %3187 = vrot.lane.b32.xlu0 %v2631, 38
      %v3188 = vpop.permute.xlu0 %3187
      %3189 = vrot.lane.b32.xlu0 %v2632, 38
      %v3190 = vpop.permute.xlu0 %3189
      %3191 = vrot.lane.b32.xlu0 %v2633, 38
      %v3192 = vpop.permute.xlu0 %3191
      %3193 = vrot.lane.b32.xlu0 %v2634, 38
      %v3194 = vpop.permute.xlu0 %3193
      %3195 = vrot.lane.b32.xlu0 %v2635, 38
      %v3196 = vpop.permute.xlu0 %3195
      %3197 = vrot.lane.b32.xlu0 %v2636, 38
      %v3198 = vpop.permute.xlu0 %3197
      %3199 = vrot.lane.b32.xlu0 %v2637, 38
      %v3200 = vpop.permute.xlu0 %3199
      %v3201 = vsel %vm875, %v3186, %v3188
      %v3202 = vsel %vm875, %v3188, %v3190
      %v3203 = vsel %vm875, %v3190, %v3192
      %v3204 = vsel %vm875, %v3192, %v3194
      %v3205 = vsel %vm875, %v3194, %v3196
      %v3206 = vsel %vm875, %v3196, %v3198
      %v3207 = vsel %vm875, %v3198, %v3200
      %v3210 = vsel %vm875, %v3200, %v3186
      %3211 = vrot.lane.b32.xlu0 %v2630, 37
      %v3212 = vpop.permute.xlu0 %3211
      %3213 = vrot.lane.b32.xlu0 %v2631, 37
      %v3214 = vpop.permute.xlu0 %3213
      %3215 = vrot.lane.b32.xlu0 %v2632, 37
      %v3216 = vpop.permute.xlu0 %3215
      %3217 = vrot.lane.b32.xlu0 %v2633, 37
      %v3218 = vpop.permute.xlu0 %3217
      %3219 = vrot.lane.b32.xlu0 %v2634, 37
      %v3220 = vpop.permute.xlu0 %3219
      %3221 = vrot.lane.b32.xlu0 %v2635, 37
      %v3222 = vpop.permute.xlu0 %3221
      %3223 = vrot.lane.b32.xlu0 %v2636, 37
      %v3224 = vpop.permute.xlu0 %3223
      %3225 = vrot.lane.b32.xlu0 %v2637, 37
      %v3226 = vpop.permute.xlu0 %3225
      %v3227 = vsel %vm902, %v3212, %v3214
      %v3228 = vsel %vm902, %v3214, %v3216
      %v3229 = vsel %vm902, %v3216, %v3218
      %v3230 = vsel %vm902, %v3218, %v3220
      %v3231 = vsel %vm902, %v3220, %v3222
      %v3232 = vsel %vm902, %v3222, %v3224
      %v3233 = vsel %vm902, %v3224, %v3226
      %v3243 = vsel %vm902, %v3226, %v3212
      %3244 = vrot.lane.b32.xlu0 %v2630, 29
      %v3245 = vpop.permute.xlu0 %3244
      %3246 = vrot.lane.b32.xlu0 %v2631, 29
      %v3247 = vpop.permute.xlu0 %3246
      %3248 = vrot.lane.b32.xlu0 %v2632, 29
      %v3249 = vpop.permute.xlu0 %3248
      %3250 = vrot.lane.b32.xlu0 %v2633, 29
      %v3251 = vpop.permute.xlu0 %3250
      %3252 = vrot.lane.b32.xlu0 %v2634, 29
      %v3253 = vpop.permute.xlu0 %3252
      %3254 = vrot.lane.b32.xlu0 %v2635, 29
      %v3255 = vpop.permute.xlu0 %3254
      %3256 = vrot.lane.b32.xlu0 %v2636, 29
      %v3257 = vpop.permute.xlu0 %3256
      %3258 = vrot.lane.b32.xlu0 %v2637, 29
      %v3259 = vpop.permute.xlu0 %3258
      %v3260 = vsel %vm936, %v3245, %v3247
      %v3261 = vsel %vm936, %v3247, %v3249
      %v3262 = vsel %vm936, %v3249, %v3251
      %v3263 = vsel %vm936, %v3251, %v3253
      %v3264 = vsel %vm936, %v3253, %v3255
      %v3265 = vsel %vm936, %v3255, %v3257
      %v3266 = vsel %vm936, %v3257, %v3259
      %v3269 = vsel %vm936, %v3259, %v3245
      %3270 = vrot.lane.b32.xlu0 %v2630, 28
      %v3271 = vpop.permute.xlu0 %3270
      %3272 = vrot.lane.b32.xlu0 %v2631, 28
      %v3273 = vpop.permute.xlu0 %3272
      %3274 = vrot.lane.b32.xlu0 %v2632, 28
      %v3275 = vpop.permute.xlu0 %3274
      %3276 = vrot.lane.b32.xlu0 %v2633, 28
      %v3277 = vpop.permute.xlu0 %3276
      %3278 = vrot.lane.b32.xlu0 %v2634, 28
      %v3279 = vpop.permute.xlu0 %3278
      %3280 = vrot.lane.b32.xlu0 %v2635, 28
      %v3281 = vpop.permute.xlu0 %3280
      %3282 = vrot.lane.b32.xlu0 %v2636, 28
      %v3283 = vpop.permute.xlu0 %3282
      %3284 = vrot.lane.b32.xlu0 %v2637, 28
      %v3285 = vpop.permute.xlu0 %3284
      %v3286 = vsel %vm963, %v3271, %v3273
      %v3287 = vsel %vm963, %v3273, %v3275
      %v3288 = vsel %vm963, %v3275, %v3277
      %v3289 = vsel %vm963, %v3277, %v3279
      %v3290 = vsel %vm963, %v3279, %v3281
      %v3291 = vsel %vm963, %v3281, %v3283
      %v3292 = vsel %vm963, %v3283, %v3285
      %v3302 = vsel %vm963, %v3285, %v3271
      %3303 = vrot.lane.b32.xlu0 %v2630, 27
      %v3304 = vpop.permute.xlu0 %3303
      %3305 = vrot.lane.b32.xlu0 %v2631, 27
      %v3306 = vpop.permute.xlu0 %3305
      %3307 = vrot.lane.b32.xlu0 %v2632, 27
      %v3308 = vpop.permute.xlu0 %3307
      %3309 = vrot.lane.b32.xlu0 %v2633, 27
      %v3310 = vpop.permute.xlu0 %3309
      %3311 = vrot.lane.b32.xlu0 %v2634, 27
      %v3312 = vpop.permute.xlu0 %3311
      %3313 = vrot.lane.b32.xlu0 %v2635, 27
      %v3314 = vpop.permute.xlu0 %3313
      %3315 = vrot.lane.b32.xlu0 %v2636, 27
      %v3316 = vpop.permute.xlu0 %3315
      %3317 = vrot.lane.b32.xlu0 %v2637, 27
      %v3318 = vpop.permute.xlu0 %3317
      %v3319 = vsel %vm997, %v3304, %v3306
      %v3320 = vsel %vm997, %v3306, %v3308
      %v3321 = vsel %vm997, %v3308, %v3310
      %v3322 = vsel %vm997, %v3310, %v3312
      %v3323 = vsel %vm997, %v3312, %v3314
      %v3324 = vsel %vm997, %v3314, %v3316
      %v3325 = vsel %vm997, %v3316, %v3318
      %v3328 = vsel %vm997, %v3318, %v3304
      %3329 = vrot.lane.b32.xlu0 %v2630, 19
      %v3330 = vpop.permute.xlu0 %3329
      %3331 = vrot.lane.b32.xlu0 %v2631, 19
      %v3332 = vpop.permute.xlu0 %3331
      %3333 = vrot.lane.b32.xlu0 %v2632, 19
      %v3334 = vpop.permute.xlu0 %3333
      %3335 = vrot.lane.b32.xlu0 %v2633, 19
      %v3336 = vpop.permute.xlu0 %3335
      %3337 = vrot.lane.b32.xlu0 %v2634, 19
      %v3338 = vpop.permute.xlu0 %3337
      %3339 = vrot.lane.b32.xlu0 %v2635, 19
      %v3340 = vpop.permute.xlu0 %3339
      %3341 = vrot.lane.b32.xlu0 %v2636, 19
      %v3342 = vpop.permute.xlu0 %3341
      %3343 = vrot.lane.b32.xlu0 %v2637, 19
      %v3344 = vpop.permute.xlu0 %3343
      %v3345 = vsel %vm1024, %v3330, %v3332
      %v3346 = vsel %vm1024, %v3332, %v3334
      %v3347 = vsel %vm1024, %v3334, %v3336
      %v3348 = vsel %vm1024, %v3336, %v3338
      %v3349 = vsel %vm1024, %v3338, %v3340
      %v3350 = vsel %vm1024, %v3340, %v3342
      %v3351 = vsel %vm1024, %v3342, %v3344
      %v3361 = vsel %vm1024, %v3344, %v3330
      %3362 = vrot.lane.b32.xlu0 %v2630, 18
      %v3363 = vpop.permute.xlu0 %3362
      %3364 = vrot.lane.b32.xlu0 %v2631, 18
      %v3365 = vpop.permute.xlu0 %3364
      %3366 = vrot.lane.b32.xlu0 %v2632, 18
      %v3367 = vpop.permute.xlu0 %3366
      %3368 = vrot.lane.b32.xlu0 %v2633, 18
      %v3369 = vpop.permute.xlu0 %3368
      %3370 = vrot.lane.b32.xlu0 %v2634, 18
      %v3371 = vpop.permute.xlu0 %3370
      %3372 = vrot.lane.b32.xlu0 %v2635, 18
      %v3373 = vpop.permute.xlu0 %3372
      %3374 = vrot.lane.b32.xlu0 %v2636, 18
      %v3375 = vpop.permute.xlu0 %3374
      %3376 = vrot.lane.b32.xlu0 %v2637, 18
      %v3377 = vpop.permute.xlu0 %3376
      %v3378 = vsel %vm1058, %v3363, %v3365
      %v3379 = vsel %vm1058, %v3365, %v3367
      %v3380 = vsel %vm1058, %v3367, %v3369
      %v3381 = vsel %vm1058, %v3369, %v3371
      %v3382 = vsel %vm1058, %v3371, %v3373
      %v3383 = vsel %vm1058, %v3373, %v3375
      %v3384 = vsel %vm1058, %v3375, %v3377
      %v3387 = vsel %vm1058, %v3377, %v3363
      %3388 = vrot.lane.b32.xlu0 %v2630, 17
      %v3389 = vpop.permute.xlu0 %3388
      %3390 = vrot.lane.b32.xlu0 %v2631, 17
      %v3391 = vpop.permute.xlu0 %3390
      %3392 = vrot.lane.b32.xlu0 %v2632, 17
      %v3393 = vpop.permute.xlu0 %3392
      %3394 = vrot.lane.b32.xlu0 %v2633, 17
      %v3395 = vpop.permute.xlu0 %3394
      %3396 = vrot.lane.b32.xlu0 %v2634, 17
      %v3397 = vpop.permute.xlu0 %3396
      %3398 = vrot.lane.b32.xlu0 %v2635, 17
      %v3399 = vpop.permute.xlu0 %3398
      %3400 = vrot.lane.b32.xlu0 %v2636, 17
      %v3401 = vpop.permute.xlu0 %3400
      %3402 = vrot.lane.b32.xlu0 %v2637, 17
      %v3403 = vpop.permute.xlu0 %3402
      %v3404 = vsel %vm1085, %v3389, %v3391
      %v3405 = vsel %vm1085, %v3391, %v3393
      %v3406 = vsel %vm1085, %v3393, %v3395
      %v3407 = vsel %vm1085, %v3395, %v3397
      %v3408 = vsel %vm1085, %v3397, %v3399
      %v3409 = vsel %vm1085, %v3399, %v3401
      %v3410 = vsel %vm1085, %v3401, %v3403
      %v3413 = vsel %vm1085, %v3403, %v3389
      %v3415 = vrot.slane %v2705, 4
      %v3416 = vrot.slane %v2697, 4
      %v3417 = vrot.slane %v2698, 4
      %v3418 = vrot.slane %v2699, 4
      %v3419 = vrot.slane %v2700, 4
      %v3420 = vrot.slane %v2701, 4
      %v3421 = vrot.slane %v2702, 4
      %v3422 = vrot.slane %v2703, 4
      %v3432 = vrot.slane %v2764, 4
      %v3433 = vrot.slane %v2756, 4
      %v3434 = vrot.slane %v2757, 4
      %v3435 = vrot.slane %v2758, 4
      %v3436 = vrot.slane %v2759, 4
      %v3437 = vrot.slane %v2760, 4
      %v3438 = vrot.slane %v2761, 4
      %v3439 = vrot.slane %v2762, 4
      %v3449 = vrot.slane %v2823, 4
      %v3450 = vrot.slane %v2815, 4
      %v3451 = vrot.slane %v2816, 4
      %v3452 = vrot.slane %v2817, 4
      %v3453 = vrot.slane %v2818, 4
      %v3454 = vrot.slane %v2819, 4
      %v3455 = vrot.slane %v2820, 4
      %v3456 = vrot.slane %v2821, 4
      %v3466 = vrot.slane %v2882, 4
      %v3467 = vrot.slane %v2874, 4
      %v3468 = vrot.slane %v2875, 4
      %v3469 = vrot.slane %v2876, 4
      %v3470 = vrot.slane %v2877, 4
      %v3471 = vrot.slane %v2878, 4
      %v3472 = vrot.slane %v2879, 4
      %v3473 = vrot.slane %v2880, 4
      %v3483 = vrot.slane %v2941, 4
      %v3484 = vrot.slane %v2933, 4
      %v3485 = vrot.slane %v2934, 4
      %v3486 = vrot.slane %v2935, 4
      %v3487 = vrot.slane %v2936, 4
      %v3488 = vrot.slane %v2937, 4
      %v3489 = vrot.slane %v2938, 4
      %v3490 = vrot.slane %v2939, 4
      %v3500 = vrot.slane %v3000, 4
      %v3501 = vrot.slane %v2992, 4
      %v3502 = vrot.slane %v2993, 4
      %v3503 = vrot.slane %v2994, 4
      %v3504 = vrot.slane %v2995, 4
      %v3505 = vrot.slane %v2996, 4
      %v3506 = vrot.slane %v2997, 4
      %v3507 = vrot.slane %v2998, 4
      %v3516 = vrot.slane %v2630, 4
      %v3517 = vrot.slane %v2631, 4
      %v3518 = vrot.slane %v2632, 4
      %v3519 = vrot.slane %v2633, 4
      %v3520 = vrot.slane %v2634, 4
      %v3521 = vrot.slane %v2635, 4
      %v3522 = vrot.slane %v2636, 4
      %v3523 = vrot.slane %v2637, 4
      %v3533 = vrot.slane %v3083, 4
      %v3534 = vrot.slane %v3084, 4
      %v3535 = vrot.slane %v3085, 4
      %v3536 = vrot.slane %v3086, 4
      %v3537 = vrot.slane %v3087, 4
      %v3538 = vrot.slane %v3088, 4
      %v3539 = vrot.slane %v3089, 4
      %v3540 = vrot.slane %v3092, 4
      %v3549 = vsel %vm1223, %v2679, %v3415
      %v3550 = vsel %vm1223, %v2664, %v3416
      %v3551 = vsel %vm1223, %v2665, %v3417
      %v3552 = vsel %vm1223, %v2666, %v3418
      %v3553 = vsel %vm1223, %v2667, %v3419
      %v3554 = vsel %vm1223, %v2668, %v3420
      %v3555 = vsel %vm1223, %v2669, %v3421
      %v3556 = vsel %vm1223, %v2670, %v3422
      %v3557 = vsel %vm1223, %v2738, %v3432
      %v3558 = vsel %vm1223, %v2723, %v3433
      %v3559 = vsel %vm1223, %v2724, %v3434
      %v3560 = vsel %vm1223, %v2725, %v3435
      %v3561 = vsel %vm1223, %v2726, %v3436
      %v3562 = vsel %vm1223, %v2727, %v3437
      %v3563 = vsel %vm1223, %v2728, %v3438
      %v3564 = vsel %vm1223, %v2729, %v3439
      %v3565 = vsel %vm1223, %v2797, %v3449
      %v3566 = vsel %vm1223, %v2782, %v3450
      %v3567 = vsel %vm1223, %v2783, %v3451
      %v3568 = vsel %vm1223, %v2784, %v3452
      %v3569 = vsel %vm1223, %v2785, %v3453
      %v3570 = vsel %vm1223, %v2786, %v3454
      %v3571 = vsel %vm1223, %v2787, %v3455
      %v3572 = vsel %vm1223, %v2788, %v3456
      %v3573 = vsel %vm1223, %v2856, %v3466
      %v3574 = vsel %vm1223, %v2841, %v3467
      %v3575 = vsel %vm1223, %v2842, %v3468
      %v3576 = vsel %vm1223, %v2843, %v3469
      %v3577 = vsel %vm1223, %v2844, %v3470
      %v3578 = vsel %vm1223, %v2845, %v3471
      %v3579 = vsel %vm1223, %v2846, %v3472
      %v3580 = vsel %vm1223, %v2847, %v3473
      %v3581 = vsel %vm1223, %v2915, %v3483
      %v3582 = vsel %vm1223, %v2900, %v3484
      %v3583 = vsel %vm1223, %v2901, %v3485
      %v3584 = vsel %vm1223, %v2902, %v3486
      %v3585 = vsel %vm1223, %v2903, %v3487
      %v3586 = vsel %vm1223, %v2904, %v3488
      %v3587 = vsel %vm1223, %v2905, %v3489
      %v3588 = vsel %vm1223, %v2906, %v3490
      %v3589 = vsel %vm1223, %v2974, %v3500
      %v3590 = vsel %vm1223, %v2959, %v3501
      %v3591 = vsel %vm1223, %v2960, %v3502
      %v3592 = vsel %vm1223, %v2961, %v3503
      %v3593 = vsel %vm1223, %v2962, %v3504
      %v3594 = vsel %vm1223, %v2963, %v3505
      %v3595 = vsel %vm1223, %v2964, %v3506
      %v3596 = vsel %vm1223, %v2965, %v3507
      %v3597 = vsel %vm1223, %v3033, %v3516
      %v3598 = vsel %vm1223, %v3018, %v3517
      %v3599 = vsel %vm1223, %v3019, %v3518
      %v3600 = vsel %vm1223, %v3020, %v3519
      %v3601 = vsel %vm1223, %v3021, %v3520
      %v3602 = vsel %vm1223, %v3022, %v3521
      %v3603 = vsel %vm1223, %v3023, %v3522
      %v3604 = vsel %vm1223, %v3024, %v3523
      %v3605 = vsel %vm1223, %v3050, %v3533
      %v3606 = vsel %vm1223, %v3051, %v3534
      %v3607 = vsel %vm1223, %v3052, %v3535
      %v3608 = vsel %vm1223, %v3053, %v3536
      %v3609 = vsel %vm1223, %v3054, %v3537
      %v3610 = vsel %vm1223, %v3055, %v3538
      %v3611 = vsel %vm1223, %v3056, %v3539
      %v3612 = vsel %vm1223, %v3066, %v3540
      %v3614 = vrot.slane %v3142, 4
      %v3615 = vrot.slane %v3143, 4
      %v3616 = vrot.slane %v3144, 4
      %v3617 = vrot.slane %v3145, 4
      %v3618 = vrot.slane %v3146, 4
      %v3619 = vrot.slane %v3147, 4
      %v3620 = vrot.slane %v3148, 4
      %v3621 = vrot.slane %v3151, 4
      %v3631 = vrot.slane %v3201, 4
      %v3632 = vrot.slane %v3202, 4
      %v3633 = vrot.slane %v3203, 4
      %v3634 = vrot.slane %v3204, 4
      %v3635 = vrot.slane %v3205, 4
      %v3636 = vrot.slane %v3206, 4
      %v3637 = vrot.slane %v3207, 4
      %v3638 = vrot.slane %v3210, 4
      %v3648 = vrot.slane %v3260, 4
      %v3649 = vrot.slane %v3261, 4
      %v3650 = vrot.slane %v3262, 4
      %v3651 = vrot.slane %v3263, 4
      %v3652 = vrot.slane %v3264, 4
      %v3653 = vrot.slane %v3265, 4
      %v3654 = vrot.slane %v3266, 4
      %v3655 = vrot.slane %v3269, 4
      %v3665 = vrot.slane %v3319, 4
      %v3666 = vrot.slane %v3320, 4
      %v3667 = vrot.slane %v3321, 4
      %v3668 = vrot.slane %v3322, 4
      %v3669 = vrot.slane %v3323, 4
      %v3670 = vrot.slane %v3324, 4
      %v3671 = vrot.slane %v3325, 4
      %v3672 = vrot.slane %v3328, 4
      %v3682 = vrot.slane %v3378, 4
      %v3683 = vrot.slane %v3379, 4
      %v3684 = vrot.slane %v3380, 4
      %v3685 = vrot.slane %v3381, 4
      %v3686 = vrot.slane %v3382, 4
      %v3687 = vrot.slane %v3383, 4
      %v3688 = vrot.slane %v3384, 4
      %v3689 = vrot.slane %v3387, 4
      %v3698 = vsel %vm1223, %v3109, %v3614
      %v3699 = vsel %vm1223, %v3110, %v3615
      %v3700 = vsel %vm1223, %v3111, %v3616
      %v3701 = vsel %vm1223, %v3112, %v3617
      %v3702 = vsel %vm1223, %v3113, %v3618
      %v3703 = vsel %vm1223, %v3114, %v3619
      %v3704 = vsel %vm1223, %v3115, %v3620
      %v3705 = vsel %vm1223, %v3125, %v3621
      %v3706 = vsel %vm1223, %v3168, %v3631
      %v3707 = vsel %vm1223, %v3169, %v3632
      %v3708 = vsel %vm1223, %v3170, %v3633
      %v3709 = vsel %vm1223, %v3171, %v3634
      %v3710 = vsel %vm1223, %v3172, %v3635
      %v3711 = vsel %vm1223, %v3173, %v3636
      %v3712 = vsel %vm1223, %v3174, %v3637
      %v3713 = vsel %vm1223, %v3184, %v3638
      %v3714 = vsel %vm1223, %v3227, %v3648
      %v3715 = vsel %vm1223, %v3228, %v3649
      %v3716 = vsel %vm1223, %v3229, %v3650
      %v3717 = vsel %vm1223, %v3230, %v3651
      %v3718 = vsel %vm1223, %v3231, %v3652
      %v3719 = vsel %vm1223, %v3232, %v3653
      %v3720 = vsel %vm1223, %v3233, %v3654
      %v3721 = vsel %vm1223, %v3243, %v3655
      %v3722 = vsel %vm1223, %v3286, %v3665
      %v3723 = vsel %vm1223, %v3287, %v3666
      %v3724 = vsel %vm1223, %v3288, %v3667
      %v3725 = vsel %vm1223, %v3289, %v3668
      %v3726 = vsel %vm1223, %v3290, %v3669
      %v3727 = vsel %vm1223, %v3291, %v3670
      %v3728 = vsel %vm1223, %v3292, %v3671
      %v3729 = vsel %vm1223, %v3302, %v3672
      %v3730 = vsel %vm1223, %v3345, %v3682
      %v3731 = vsel %vm1223, %v3346, %v3683
      %v3732 = vsel %vm1223, %v3347, %v3684
      %v3733 = vsel %vm1223, %v3348, %v3685
      %v3734 = vsel %vm1223, %v3349, %v3686
      %v3735 = vsel %vm1223, %v3350, %v3687
      %v3736 = vsel %vm1223, %v3351, %v3688
      %v3737 = vsel %vm1223, %v3361, %v3689
      %v3739 = vsel %vm1413, %v2638, 0
      %v3741 = vsel %vm1223, %v3404, 0
      %v3743 = vsel %vm1223, %v3405, 0
      %v3745 = vsel %vm1223, %v3406, 0
      %v3747 = vsel %vm1223, %v3407, 0
      %v3749 = vsel %vm1223, %v3408, 0
      %v3751 = vsel %vm1223, %v3409, 0
      %v3753 = vsel %vm1223, %v3410, 0
      %v3756 = vsel %vm1223, %v3413, 0
      %3758 = vmatprep.subr.mxu0 %v3550
      %3759 = vmatpush1.msra.mxu0 %v3549
      %3760 = vmatprep.subr.mxu0 %v3558
      %3761 = vmatpush1.msra.mxu0 %v3557
      %3762 = vmatprep.subr.mxu0 %v3566
      %3763 = vmatpush1.msra.mxu0 %v3565
      %3764 = vmatprep.subr.mxu0 %v3574
      %3765 = vmatpush1.msra.mxu0 %v3573
      %3766 = vmatprep.subr.mxu0 %v3582
      %3767 = vmatpush1.msra.mxu0 %v3581
      %3768 = vmatprep.subr.mxu0 %v3590
      %3769 = vmatpush1.msra.mxu0 %v3589
      %3770 = vmatprep.subr.mxu0 %v3598
      %3771 = vmatpush1.msra.mxu0 %v3597
      %3772 = vmatprep.subr.mxu0 %v3606
      %3773 = vmatpush1.msra.mxu0 %v3605
      %3774 = vmatprep.subr.mxu0 %v3699
      %3775 = vmatpush1.msra.mxu0 %v3698
      %3776 = vmatprep.subr.mxu0 %v3707
      %3777 = vmatpush1.msra.mxu0 %v3706
      %3778 = vmatprep.subr.mxu0 %v3715
      %3779 = vmatpush1.msra.mxu0 %v3714
      %3780 = vmatprep.subr.mxu0 %v3723
      %3781 = vmatpush1.msra.mxu0 %v3722
      %3782 = vmatprep.subr.mxu0 %v3731
      %3783 = vmatpush1.msra.mxu0 %v3730
      %3784 = vmatprep.subr.mxu0 %v3743
      %3785 = vmatpush1.msra.mxu0 %v3741
      %3786 = vmatprep.subr.mxu0 0.0
      %3787 = vmatpush1.msra.mxu0 0.0
      %3788 = vmatprep.subr.mxu0 0.0
      %3789 = vmatpush1.msra.mxu0 0.0
      %3790 = vmatprep.subr.mxu0 0.0
      %3791 = vmatpush1.msra.mxu0 0.0
      %3792 = vmatprep.subr.mxu0 0.0
      %3793 = vmatpush1.msra.mxu0 0.0
      %3794 = vmatprep.subr.mxu0 0.0
      %3795 = vmatpush1.msra.mxu0 0.0
      %3796 = vmatprep.subr.mxu0 0.0
      %3797 = vmatpush1.msra.mxu0 0.0
      %3798 = vmatprep.subr.mxu0 0.0
      %3799 = vmatpush1.msra.mxu0 0.0
      %3800 = vmatprep.subr.mxu0 0.0
      %3801 = vmatpush1.msra.mxu0 0.0
      %3802 = vmatprep.subr.mxu0 0.0
      %3803 = vmatpush1.msra.mxu0 0.0
      %3804 = vmatprep.subr.mxu0 0.0
      %3805 = vmatpush1.msra.mxu0 0.0
      %3806 = vmatprep.subr.mxu0 0.0
      %3807 = vmatpush1.msra.mxu0 0.0
      %3808 = vmatprep.subr.mxu0 0.0
      %3809 = vmatpush1.msra.mxu0 0.0
      %3810 = vmatprep.subr.mxu0 0.0
      %3811 = vmatpush1.msra.mxu0 0.0
      %3812 = vmatprep.subr.mxu0 0.0
      %3813 = vmatpush1.msra.mxu0 0.0
      %3814 = vmatprep.subr.mxu0 0.0
      %3815 = vmatpush1.msra.mxu0 0.0
      %3816 = vmatprep.subr.mxu0 0.0
      %3817 = vmatpush1.msra.mxu0 0.0
      %3818 = vmatprep.subr.mxu0 0.0
      %3819 = vmatpush1.msra.mxu0 0.0
      %3820 = vmatprep.subr.mxu0 0.0
      %3821 = vmatpush1.msra.mxu0 0.0
      %3822 = vmatprep.mubr.f32.mxu0 0.0
      %3823 = vmatmul.mubr.f32.gmra.mrb[0].mxu0 %v3739
      %v3824 = vpop.f32.mrb[0].mxu0
      %v3825 = vadd.f32 0.0, %v3824
      %v3826 = vpop.f32.mrb[0].mxu0
      %v3827 = vadd.f32 0.0, %v3826
      %3828 = vdwg.mxu0
      %3829 = vmatprep.subr.mxu0 %v3552
      %3830 = vmatpush1.msra.mxu0 %v3551
      %3831 = vmatprep.subr.mxu0 %v3560
      %3832 = vmatpush1.msra.mxu0 %v3559
      %3833 = vmatprep.subr.mxu0 %v3568
      %3834 = vmatpush1.msra.mxu0 %v3567
      %3835 = vmatprep.subr.mxu0 %v3576
      %3836 = vmatpush1.msra.mxu0 %v3575
      %3837 = vmatprep.subr.mxu0 %v3584
      %3838 = vmatpush1.msra.mxu0 %v3583
      %3839 = vmatprep.subr.mxu0 %v3592
      %3840 = vmatpush1.msra.mxu0 %v3591
      %3841 = vmatprep.subr.mxu0 %v3600
      %3842 = vmatpush1.msra.mxu0 %v3599
      %3843 = vmatprep.subr.mxu0 %v3608
      %3844 = vmatpush1.msra.mxu0 %v3607
      %3845 = vmatprep.subr.mxu0 %v3701
      %3846 = vmatpush1.msra.mxu0 %v3700
      %3847 = vmatprep.subr.mxu0 %v3709
      %3848 = vmatpush1.msra.mxu0 %v3708
      %3849 = vmatprep.subr.mxu0 %v3717
      %3850 = vmatpush1.msra.mxu0 %v3716
      %3851 = vmatprep.subr.mxu0 %v3725
      %3852 = vmatpush1.msra.mxu0 %v3724
      %3853 = vmatprep.subr.mxu0 %v3733
      %3854 = vmatpush1.msra.mxu0 %v3732
      %3855 = vmatprep.subr.mxu0 %v3747
      %3856 = vmatpush1.msra.mxu0 %v3745
      %3857 = vmatprep.subr.mxu0 0.0
      %3858 = vmatpush1.msra.mxu0 0.0
      %3859 = vmatprep.subr.mxu0 0.0
      %3860 = vmatpush1.msra.mxu0 0.0
      %3861 = vmatprep.subr.mxu0 0.0
      %3862 = vmatpush1.msra.mxu0 0.0
      %3863 = vmatprep.subr.mxu0 0.0
      %3864 = vmatpush1.msra.mxu0 0.0
      %3865 = vmatprep.subr.mxu0 0.0
      %3866 = vmatpush1.msra.mxu0 0.0
      %3867 = vmatprep.subr.mxu0 0.0
      %3868 = vmatpush1.msra.mxu0 0.0
      %3869 = vmatprep.subr.mxu0 0.0
      %3870 = vmatpush1.msra.mxu0 0.0
      %3871 = vmatprep.subr.mxu0 0.0
      %3872 = vmatpush1.msra.mxu0 0.0
      %3873 = vmatprep.subr.mxu0 0.0
      %3874 = vmatpush1.msra.mxu0 0.0
      %3875 = vmatprep.subr.mxu0 0.0
      %3876 = vmatpush1.msra.mxu0 0.0
      %3877 = vmatprep.subr.mxu0 0.0
      %3878 = vmatpush1.msra.mxu0 0.0
      %3879 = vmatprep.subr.mxu0 0.0
      %3880 = vmatpush1.msra.mxu0 0.0
      %3881 = vmatprep.subr.mxu0 0.0
      %3882 = vmatpush1.msra.mxu0 0.0
      %3883 = vmatprep.subr.mxu0 0.0
      %3884 = vmatpush1.msra.mxu0 0.0
      %3885 = vmatprep.subr.mxu0 0.0
      %3886 = vmatpush1.msra.mxu0 0.0
      %3887 = vmatprep.subr.mxu0 0.0
      %3888 = vmatpush1.msra.mxu0 0.0
      %3889 = vmatprep.subr.mxu0 0.0
      %3890 = vmatpush1.msra.mxu0 0.0
      %3891 = vmatprep.subr.mxu0 0.0
      %3892 = vmatpush1.msra.mxu0 0.0
      %3893 = vmatprep.mubr.f32.mxu0 0.0
      %3894 = vmatmul.mubr.f32.gmra.mrb[0].mxu0 %v3739
      %v3895 = vpop.f32.mrb[0].mxu0
      %v3896 = vadd.f32 0.0, %v3895
      %v3897 = vpop.f32.mrb[0].mxu0
      %v3898 = vadd.f32 0.0, %v3897
      %3899 = vdwg.mxu0
      %3900 = vmatprep.subr.mxu0 %v3554
      %3901 = vmatpush1.msra.mxu0 %v3553
      %3902 = vmatprep.subr.mxu0 %v3562
      %3903 = vmatpush1.msra.mxu0 %v3561
      %3904 = vmatprep.subr.mxu0 %v3570
      %3905 = vmatpush1.msra.mxu0 %v3569
      %3906 = vmatprep.subr.mxu0 %v3578
      %3907 = vmatpush1.msra.mxu0 %v3577
      %3908 = vmatprep.subr.mxu0 %v3586
      %3909 = vmatpush1.msra.mxu0 %v3585
      %3910 = vmatprep.subr.mxu0 %v3594
      %3911 = vmatpush1.msra.mxu0 %v3593
      %3912 = vmatprep.subr.mxu0 %v3602
      %3913 = vmatpush1.msra.mxu0 %v3601
      %3914 = vmatprep.subr.mxu0 %v3610
      %3915 = vmatpush1.msra.mxu0 %v3609
      %3916 = vmatprep.subr.mxu0 %v3703
      %3917 = vmatpush1.msra.mxu0 %v3702
      %3918 = vmatprep.subr.mxu0 %v3711
      %3919 = vmatpush1.msra.mxu0 %v3710
      %3920 = vmatprep.subr.mxu0 %v3719
      %3921 = vmatpush1.msra.mxu0 %v3718
      %3922 = vmatprep.subr.mxu0 %v3727
      %3923 = vmatpush1.msra.mxu0 %v3726
      %3924 = vmatprep.subr.mxu0 %v3735
      %3925 = vmatpush1.msra.mxu0 %v3734
      %3926 = vmatprep.subr.mxu0 %v3751
      %3927 = vmatpush1.msra.mxu0 %v3749
      %3928 = vmatprep.subr.mxu0 0.0
      %3929 = vmatpush1.msra.mxu0 0.0
      %3930 = vmatprep.subr.mxu0 0.0
      %3931 = vmatpush1.msra.mxu0 0.0
      %3932 = vmatprep.subr.mxu0 0.0
      %3933 = vmatpush1.msra.mxu0 0.0
      %3934 = vmatprep.subr.mxu0 0.0
      %3935 = vmatpush1.msra.mxu0 0.0
      %3936 = vmatprep.subr.mxu0 0.0
      %3937 = vmatpush1.msra.mxu0 0.0
      %3938 = vmatprep.subr.mxu0 0.0
      %3939 = vmatpush1.msra.mxu0 0.0
      %3940 = vmatprep.subr.mxu0 0.0
      %3941 = vmatpush1.msra.mxu0 0.0
      %3942 = vmatprep.subr.mxu0 0.0
      %3943 = vmatpush1.msra.mxu0 0.0
      %3944 = vmatprep.subr.mxu0 0.0
      %3945 = vmatpush1.msra.mxu0 0.0
      %3946 = vmatprep.subr.mxu0 0.0
      %3947 = vmatpush1.msra.mxu0 0.0
      %3948 = vmatprep.subr.mxu0 0.0
      %3949 = vmatpush1.msra.mxu0 0.0
      %3950 = vmatprep.subr.mxu0 0.0
      %3951 = vmatpush1.msra.mxu0 0.0
      %3952 = vmatprep.subr.mxu0 0.0
      %3953 = vmatpush1.msra.mxu0 0.0
      %3954 = vmatprep.subr.mxu0 0.0
      %3955 = vmatpush1.msra.mxu0 0.0
      %3956 = vmatprep.subr.mxu0 0.0
      %3957 = vmatpush1.msra.mxu0 0.0
      %3958 = vmatprep.subr.mxu0 0.0
      %3959 = vmatpush1.msra.mxu0 0.0
      %3960 = vmatprep.subr.mxu0 0.0
      %3961 = vmatpush1.msra.mxu0 0.0
      %3962 = vmatprep.subr.mxu0 0.0
      %3963 = vmatpush1.msra.mxu0 0.0
      %3964 = vmatprep.mubr.f32.mxu0 0.0
      %3965 = vmatmul.mubr.f32.gmra.mrb[0].mxu0 %v3739
      %v3966 = vpop.f32.mrb[0].mxu0
      %v3967 = vadd.f32 0.0, %v3966
      %v3968 = vpop.f32.mrb[0].mxu0
      %v3969 = vadd.f32 0.0, %v3968
      %3970 = vdwg.mxu0
      %3971 = vmatprep.subr.mxu0 %v3556
      %3972 = vmatpush1.msra.mxu0 %v3555
      %3973 = vmatprep.subr.mxu0 %v3564
      %3974 = vmatpush1.msra.mxu0 %v3563
      %3975 = vmatprep.subr.mxu0 %v3572
      %3976 = vmatpush1.msra.mxu0 %v3571
      %3977 = vmatprep.subr.mxu0 %v3580
      %3978 = vmatpush1.msra.mxu0 %v3579
      %3979 = vmatprep.subr.mxu0 %v3588
      %3980 = vmatpush1.msra.mxu0 %v3587
      %3981 = vmatprep.subr.mxu0 %v3596
      %3982 = vmatpush1.msra.mxu0 %v3595
      %3983 = vmatprep.subr.mxu0 %v3604
      %3984 = vmatpush1.msra.mxu0 %v3603
      %3985 = vmatprep.subr.mxu0 %v3612
      %3986 = vmatpush1.msra.mxu0 %v3611
      %3987 = vmatprep.subr.mxu0 %v3705
      %3988 = vmatpush1.msra.mxu0 %v3704
      %3989 = vmatprep.subr.mxu0 %v3713
      %3990 = vmatpush1.msra.mxu0 %v3712
      %3991 = vmatprep.subr.mxu0 %v3721
      %3992 = vmatpush1.msra.mxu0 %v3720
      %3993 = vmatprep.subr.mxu0 %v3729
      %3994 = vmatpush1.msra.mxu0 %v3728
      %3995 = vmatprep.subr.mxu0 %v3737
      %3996 = vmatpush1.msra.mxu0 %v3736
      %3997 = vmatprep.subr.mxu0 %v3756
      %3998 = vmatpush1.msra.mxu0 %v3753
      %3999 = vmatprep.subr.mxu0 0.0
      %4000 = vmatpush1.msra.mxu0 0.0
      %4001 = vmatprep.subr.mxu0 0.0
      %4002 = vmatpush1.msra.mxu0 0.0
      %4003 = vmatprep.subr.mxu0 0.0
      %4004 = vmatpush1.msra.mxu0 0.0
      %4005 = vmatprep.subr.mxu0 0.0
      %4006 = vmatpush1.msra.mxu0 0.0
      %4007 = vmatprep.subr.mxu0 0.0
      %4008 = vmatpush1.msra.mxu0 0.0
      %4009 = vmatprep.subr.mxu0 0.0
      %4010 = vmatpush1.msra.mxu0 0.0
      %4011 = vmatprep.subr.mxu0 0.0
      %4012 = vmatpush1.msra.mxu0 0.0
      %4013 = vmatprep.subr.mxu0 0.0
      %4014 = vmatpush1.msra.mxu0 0.0
      %4015 = vmatprep.subr.mxu0 0.0
      %4016 = vmatpush1.msra.mxu0 0.0
      %4017 = vmatprep.subr.mxu0 0.0
      %4018 = vmatpush1.msra.mxu0 0.0
      %4019 = vmatprep.subr.mxu0 0.0
      %4020 = vmatpush1.msra.mxu0 0.0
      %4021 = vmatprep.subr.mxu0 0.0
      %4022 = vmatpush1.msra.mxu0 0.0
      %4023 = vmatprep.subr.mxu0 0.0
      %4024 = vmatpush1.msra.mxu0 0.0
      %4025 = vmatprep.subr.mxu0 0.0
      %4026 = vmatpush1.msra.mxu0 0.0
      %4027 = vmatprep.subr.mxu0 0.0
      %4028 = vmatpush1.msra.mxu0 0.0
      %4029 = vmatprep.subr.mxu0 0.0
      %4030 = vmatpush1.msra.mxu0 0.0
      %4031 = vmatprep.subr.mxu0 0.0
      %4032 = vmatpush1.msra.mxu0 0.0
      %4033 = vmatprep.subr.mxu0 0.0
      %4034 = vmatpush1.msra.mxu0 0.0
      %4035 = vmatprep.mubr.f32.mxu0 0.0
      %4036 = vmatmul.mubr.f32.gmra.mrb[0].mxu0 %v3739
      %v4037 = vpop.f32.mrb[0].mxu0
      %v4038 = vadd.f32 0.0, %v4037
      %v4039 = vpop.f32.mrb[0].mxu0
      %v4040 = vadd.f32 0.0, %v4039
      %4041 = vdwg.mxu0
      %v4042 = vmul.f32 %v3825, %v1765
      %v4043 = vmul.f32 %v3827, %v1769
      %v4044 = vmul.f32 %v3896, %v1773
      %v4045 = vmul.f32 %v3898, %v1777
      %v4046 = vmul.f32 %v3967, %v1781
      %v4047 = vmul.f32 %v3969, %v1785
      %v4048 = vmul.f32 %v4038, %v1789
      %v4049 = vmul.f32 %v4040, %v1793
      %v4050 = vsel %vm1223, %v4042, 0.0
      %v4051 = vsel %vm1223, %v4043, 0.0
      %v4052 = vadd.f32 %v4050, %v4051
      %v4053 = vsel %vm1223, %v4044, 0.0
      %v4054 = vadd.f32 %v4052, %v4053
      %v4055 = vsel %vm1223, %v4045, 0.0
      %v4056 = vadd.f32 %v4054, %v4055
      %v4057 = vsel %vm1223, %v4046, 0.0
      %v4058 = vadd.f32 %v4056, %v4057
      %v4059 = vsel %vm1223, %v4047, 0.0
      %v4060 = vadd.f32 %v4058, %v4059
      %v4061 = vsel %vm1223, %v4048, 0.0
      %v4062 = vadd.f32 %v4060, %v4061
      %v4063 = vsel %vm1223, %v4049, 0.0
      %v4064 = vadd.f32 %v4062, %v4063
      %4065 = vadd.xlane.f32.xlu0 %v4064
      %v4066 = vpop.xlane.xlu0 %4065
      %v4067 = vmul.f32 %v4066, 0.001953125
      %v4068 = vsub.f32 %v3825, %v4067
      %v4069 = vsub.f32 %v3827, %v4067
      %v4070 = vsub.f32 %v3896, %v4067
      %v4071 = vsub.f32 %v3898, %v4067
      %v4072 = vsub.f32 %v3967, %v4067
      %v4073 = vsub.f32 %v3969, %v4067
      %v4074 = vsub.f32 %v4038, %v4067
      %v4075 = vsub.f32 %v4040, %v4067
      %v4076 = vmul.f32 %v4068, %v4068
      %v4077 = vmul.f32 %v4069, %v4069
      %v4078 = vmul.f32 %v4070, %v4070
      %v4079 = vmul.f32 %v4071, %v4071
      %v4080 = vmul.f32 %v4072, %v4072
      %v4081 = vmul.f32 %v4073, %v4073
      %v4082 = vmul.f32 %v4074, %v4074
      %v4083 = vmul.f32 %v4075, %v4075
      %v4084 = vmul.f32 %v4076, %v1765
      %v4085 = vmul.f32 %v4077, %v1769
      %v4086 = vmul.f32 %v4078, %v1773
      %v4087 = vmul.f32 %v4079, %v1777
      %v4088 = vmul.f32 %v4080, %v1781
      %v4089 = vmul.f32 %v4081, %v1785
      %v4090 = vmul.f32 %v4082, %v1789
      %v4091 = vmul.f32 %v4083, %v1793
      %v4092 = vsel %vm1223, %v4084, 0.0
      %v4093 = vsel %vm1223, %v4085, 0.0
      %v4094 = vadd.f32 %v4092, %v4093
      %v4095 = vsel %vm1223, %v4086, 0.0
      %v4096 = vadd.f32 %v4094, %v4095
      %v4097 = vsel %vm1223, %v4087, 0.0
      %v4098 = vadd.f32 %v4096, %v4097
      %v4099 = vsel %vm1223, %v4088, 0.0
      %v4100 = vadd.f32 %v4098, %v4099
      %v4101 = vsel %vm1223, %v4089, 0.0
      %v4102 = vadd.f32 %v4100, %v4101
      %v4103 = vsel %vm1223, %v4090, 0.0
      %v4104 = vadd.f32 %v4102, %v4103
      %v4105 = vsel %vm1223, %v4091, 0.0
      %v4106 = vadd.f32 %v4104, %v4105
      %4107 = vadd.xlane.f32.xlu0 %v4106
      %v4108 = vpop.xlane.xlu0 %4107
      %v4109 = vmul.f32 %v4108, 0.001953125
      %v4110 = vadd.f32 %v4109, 1e-05
      %v4111 = vrsqrt.pop %v4110
      %v4112 = vmul.f32 %v4068, %v4111
      %v4113 = vmul.f32 %v4069, %v4111
      %v4114 = vmul.f32 %v4070, %v4111
      %v4115 = vmul.f32 %v4071, %v4111
      %v4116 = vmul.f32 %v4072, %v4111
      %v4117 = vmul.f32 %v4073, %v4111
      %v4118 = vmul.f32 %v4074, %v4111
      %v4119 = vmul.f32 %v4075, %v4111
      %v4124 = vadd.f32 %v4112, %v198
      %v4125 = vadd.f32 %v4113, %v303
      %v4126 = vadd.f32 %v4114, %v199
      %v4127 = vadd.f32 %v4115, %v304
      %v4128 = vadd.f32 %v4116, %v200
      %v4129 = vadd.f32 %v4117, %v305
      %v4130 = vadd.f32 %v4118, %v201
      %v4131 = vadd.f32 %v4119, %v296
      %v4140 = vcombine.low %v4124, %v4125
      %v4141 = vcombine.low %v4126, %v4127
      %v4142 = vcombine.low %v4128, %v4129
      %v4143 = vcombine.low %v4130, %v4131
      %4148 = vst [vmem:[%s197] sm:$0xff] %v4140
      %4149 = vst [vmem:[%s197 + $0x8] sm:$0xff] %v4141
      %4150 = vst [vmem:[%s197 + $0x10] sm:$0xff] %v4142
      %4151 = vst [vmem:[%s197 + $0x18] sm:$0xff] %v4143
      %p4152 = scmp.lt.s32.totalorder %s15, 1
      %s4153 = scalar_select %p4152, %s15, 1
      %s4154 = smul.addr %s4153, 8
      %s4155 = smul.addr %s4154, 4
      %s4156 = scalar_lea.vmem %s4, %s4155
      // Predicated region
      $region37: #{resnet_block_forward.1} parent=35 // pred_check
        %p4157 = pneg %p122
      $region38: #{resnet_block_forward.1} parent=35 // pred_check_branch
        %4159 = sbr.rel (%p4157) target = $region40
      $region39: #{resnet_block_forward.1} parent=35 // pred_region
        _
      $region40: #{resnet_block_forward.1} parent=35 // pred_fallthru
        _
    $region36: #{resnet_block_forward.1} parent=5 // pred_fallthru
      _
    %p4160 = scmp.le.s32.totalorder 2, %s10
    // Predicated region
    $region41: #{resnet_block_forward.1} parent=5 // pred_check
      %p4161 = pneg %p4160
    $region42: #{resnet_block_forward.1} parent=5 // pred_check_branch
      %4163 = sbr.rel (%p4161) target = $region44
    $region43: #{resnet_block_forward.1} parent=5 // pred_region
      %s4164 = ssub.s32 %s10, 2
      // Predicated region
      $region45: #{resnet_block_forward.1} parent=43 // pred_check
        %p4165 = pneg %p128
      $region46: #{resnet_block_forward.1} parent=43 // pred_check_branch
        %4167 = sbr.rel (%p4165) target = $region48
      $region47: #{resnet_block_forward.1} parent=43 // pred_region
        %p4168 = scmp.lt.s32.totalorder %s16, 1
        %s4169 = scalar_select %p4168, %s16, 1
        %s4170 = smul.addr %s4169, 8
        %s4171 = smul.addr %s4170, 4
        %s4172 = scalar_lea.vmem %s4, %s4171
      $region48: #{resnet_block_forward.1} parent=43 // pred_fallthru
        _
    $region44: #{resnet_block_forward.1} parent=5 // pred_fallthru
      _
  $region6: #{resnet_block_forward.1} parent=0 // loop_footer
    %s14 = sadd.s32 1, %s10
  $region7: #{resnet_block_forward.1} parent=0 // loop_footer_branch
    %9 = sbr.rel target = $region3
  $region8: #{resnet_block_forward.1} parent=0 // loop_exit
    _

</llo_original>
